<compile_context>
chip_gen: v7x
topology: tpu7x:2x2x1
jax: 0.10.0
libtpu: 0.0.40
codegen_flags: <defaults>
</compile_context>

<pallas_src>
import jax
import jax.numpy as jnp
import numpy as np
from jax.experimental import pallas as pl
from jax.experimental.pallas import tpu as pltpu


def _gru_kernel(x_ref,        # (seq*B, D)  bf16 inputs, time-major, batch padded
                wih1_ref,     # (D, 3H)     bf16 layer-1 input weights [r|z|n]
                bgi1_ref,     # (1, 3H)     f32  bih1 with bhh1_{r,z} pre-folded
                whh1_ref,     # (H, 3H)     bf16 layer-1 hidden weights (no bias)
                bhh1n_ref,    # (1, H)      f32  layer-1 hidden n-gate bias
                wih2_ref,     # (H, 3H)     bf16 layer-2 input weights
                bgi2_ref,     # (1, 3H)     f32  bih2 with bhh2_{r,z} pre-folded
                whh2_ref,     # (H, 3H)     bf16 layer-2 hidden weights (no bias)
                bhh2n_ref,    # (1, H)      f32  layer-2 hidden n-gate bias
                out_ref,      # (B, H)      f32  final layer-2 hidden state
                gi1_vmem):    # (seq*B,3H)  f32  scratch: layer-1 input projection
    B, H = out_ref.shape
    seq = x_ref.shape[0] // B
    bf16 = jnp.bfloat16

    # ---- prologue: layer-1 input projection for ALL time steps at once ----
    # bf16 MXU, f32 accumulation; parked in VMEM, not held live in vregs.
    gi1_vmem[...] = (
        jnp.dot(x_ref[...], wih1_ref[...], preferred_element_type=jnp.float32)
        + bgi1_ref[...])

    # Hoist bias broadcasts once (JAX does not CSE broadcast_in_dim).
    bhh1n = jnp.broadcast_to(bhh1n_ref[...], (B, H))
    bgi2 = jnp.broadcast_to(bgi2_ref[...], (B, 3 * H))
    bhh2n = jnp.broadcast_to(bhh2n_ref[...], (B, H))

    h1 = jnp.zeros((B, H), jnp.float32)
    h2 = jnp.zeros((B, H), jnp.float32)

    # Fully unrolled at trace time (seq is static and small); h1/h2 live in
    # vregs.  Weights are read at the dot sites (not hoisted) so their live
    # ranges stay short.
    for t in range(seq):
        # Matmuls depending only on step-(t-1) state are issued first so the
        # MXU can overlap them with the gate (VPU/EUP) chain.
        gh1 = jnp.dot(h1.astype(bf16), whh1_ref[...],
                      preferred_element_type=jnp.float32)          # (B, 3H)
        gh2 = jnp.dot(h2.astype(bf16), whh2_ref[...],
                      preferred_element_type=jnp.float32)          # (B, 3H)

        # ---- layer 1 ----
        gi1 = gi1_vmem[t * B:(t + 1) * B, :]                       # (B, 3H)
        r1 = jax.nn.sigmoid(gi1[:, 0:H] + gh1[:, 0:H])
        z1 = jax.nn.sigmoid(gi1[:, H:2 * H] + gh1[:, H:2 * H])
        n1 = jnp.tanh(gi1[:, 2 * H:] + r1 * (gh1[:, 2 * H:] + bhh1n))
        h1 = (1.0 - z1) * n1 + z1 * h1

        # ---- layer 2: only the h1-dependent matmul is on the serial chain ----
        gi2 = jnp.dot(h1.astype(bf16), wih2_ref[...],
                      preferred_element_type=jnp.float32) + bgi2   # (B, 3H)
        r2 = jax.nn.sigmoid(gi2[:, 0:H] + gh2[:, 0:H])
        z2 = jax.nn.sigmoid(gi2[:, H:2 * H] + gh2[:, H:2 * H])
        n2 = jnp.tanh(gi2[:, 2 * H:] + r2 * (gh2[:, 2 * H:] + bhh2n))
        h2 = (1.0 - z2) * n2 + z2 * h2

    out_ref[...] = h2


def prepare_params(params):
    """One-time (outside the per-call path) bias folding + bf16 weight cast."""
    H = params["whh1"].shape[0]
    bf16 = jnp.bfloat16

    def fold_rz(bi, bh):   # fold r/z biases; keep the ih n-gate bias with gi
        return jnp.concatenate([bi[:, :2 * H] + bh[:, :2 * H], bi[:, 2 * H:]],
                               axis=1)                              # (1, 3H)

    return {
        "wih1": params["wih1"].astype(bf16),
        "whh1": params["whh1"].astype(bf16),
        "wih2": params["wih2"].astype(bf16),
        "whh2": params["whh2"].astype(bf16),
        "b_gi1": fold_rz(params["bih1"], params["bhh1"]),
        "bhh1_n": params["bhh1"][:, 2 * H:],                        # (1, H)
        "b_gi2": fold_rz(params["bih2"], params["bhh2"]),
        "bhh2_n": params["bhh2"][:, 2 * H:],                        # (1, H)
    }


@jax.jit
def gru_forward(x, fused):
    """x: (seq, batch, input_dim) f32. Returns h_n[-1]: (batch, hidden) f32."""
    seq, B, D = x.shape
    H = fused["whh1"].shape[0]

    # bf16 activations pack 2 rows/sublane -> pad batch to the (16, 128) tile.
    B_pad = max(16, ((B + 15) // 16) * 16)
    if B_pad != B:
        x = jnp.pad(x, ((0, 0), (0, B_pad - B), (0, 0)))

    # Present x as one big (seq*B_pad, D) bf16 slab for the prologue matmul.
    x2d = x.astype(jnp.bfloat16).reshape(seq * B_pad, D)

    vmem = pl.BlockSpec(memory_space=pltpu.MemorySpace.VMEM)
    out = pl.pallas_call(
        _gru_kernel,
        out_shape=jax.ShapeDtypeStruct((B_pad, H), jnp.float32),
        in_specs=[vmem] * 9,
        out_specs=vmem,
        scratch_shapes=[pltpu.VMEM((seq * B_pad, 3 * H), jnp.float32)],
    )(x2d, fused["wih1"], fused["b_gi1"], fused["whh1"], fused["bhh1_n"],
      fused["wih2"], fused["b_gi2"], fused["whh2"], fused["bhh2_n"])

    return out[:B]


def gru_reference(x, params):
    """Pure-JAX f32 reference implementing the same PyTorch GRU (eval) semantics."""
    H = params["whh1"].shape[0]

    def cell(x_t, h_prev, wih, whh, bih, bhh):
        gi = x_t @ wih + bih
        gh = h_prev @ whh + bhh
        i_r, i_z, i_n = gi[:, :H], gi[:, H:2 * H], gi[:, 2 * H:]
        h_r, h_z, h_n = gh[:, :H], gh[:, H:2 * H], gh[:, 2 * H:]
        r = jax.nn.sigmoid(i_r + h_r)
        z = jax.nn.sigmoid(i_z + h_z)
        n = jnp.tanh(i_n + r * h_n)
        return (1.0 - z) * n + z * h_prev

    seq, B, _ = x.shape
    h1 = jnp.zeros((B, H), jnp.float32)
    h2 = jnp.zeros((B, H), jnp.float32)
    for t in range(seq):
        h1 = cell(x[t], h1, params["wih1"], params["whh1"],
                  params["bih1"], params["bhh1"])
        h2 = cell(h1, h2, params["wih2"], params["whh2"],
                  params["bih2"], params["bhh2"])
    return h2


def init_params(key, input_dim, hidden_dim):
    """PyTorch GRU parameter shapes (weight_ih_l{k}: (3H,in), weight_hh_l{k}:
    (3H,H), biases (3H,)), stored transposed for row-major matmuls, gate order
    [r, z, n], uniform(-1/sqrt(H), 1/sqrt(H))."""
    H = hidden_dim
    bound = 1.0 / np.sqrt(H)
    ks = jax.random.split(key, 8)
    u = lambda k, shape: jax.random.uniform(
        k, shape, jnp.float32, minval=-bound, maxval=bound)
    return {
        # layer 1
        "wih1": u(ks[0], (input_dim, 3 * H)),
        "whh1": u(ks[1], (H, 3 * H)),
        "bih1": u(ks[2], (1, 3 * H)),
        "bhh1": u(ks[3], (1, 3 * H)),
        # layer 2 (input is layer-1 hidden, size H)
        "wih2": u(ks[4], (H, 3 * H)),
        "whh2": u(ks[5], (H, 3 * H)),
        "bih2": u(ks[6], (1, 3 * H)),
        "bhh2": u(ks[7], (1, 3 * H)),
    }


if __name__ == "__main__":
    SEQ, BATCH, INPUT_DIM, HIDDEN_DIM = 8, 4, 128, 128

    root = jax.random.PRNGKey(0)
    k_x, k_p = jax.random.split(root)
    x = jax.random.normal(k_x, (SEQ, BATCH, INPUT_DIM), jnp.float32)
    params = init_params(k_p, INPUT_DIM, HIDDEN_DIM)

    fused = prepare_params(params)              # one-time param fusion/cast
    fused = jax.block_until_ready(fused)

    out = gru_forward(x, fused)
    out = jax.block_until_ready(out)

    ref = gru_reference(x, params)
    # bf16 matmul operands -> relaxed tolerance vs the f32 reference.
    np.testing.assert_allclose(np.asarray(out), np.asarray(ref),
                               rtol=5e-2, atol=5e-2)

    print("KERNEL_OK")
</pallas_src>

<mosaic_0001>
module attributes {stable_mosaic.version = 11 : i64} {
  func.func @_gru_kernel(%arg0: memref<128x128xbf16, #tpu.memory_space<vmem>>, %arg1: memref<128x384xbf16, #tpu.memory_space<vmem>>, %arg2: memref<1x384xf32, #tpu.memory_space<vmem>>, %arg3: memref<128x384xbf16, #tpu.memory_space<vmem>>, %arg4: memref<1x128xf32, #tpu.memory_space<vmem>>, %arg5: memref<128x384xbf16, #tpu.memory_space<vmem>>, %arg6: memref<1x384xf32, #tpu.memory_space<vmem>>, %arg7: memref<128x384xbf16, #tpu.memory_space<vmem>>, %arg8: memref<1x128xf32, #tpu.memory_space<vmem>>, %arg9: memref<16x128xf32, #tpu.memory_space<vmem>>, %arg10: memref<128x384xf32, #tpu.memory_space<vmem>>) attributes {dimension_semantics = [], scalar_prefetch = 0 : i64, scratch_operands = 1 : i64, tpu.core_type = #tpu.core_type<tc>} {
    %c0 = arith.constant 0 : index
    %c0_0 = arith.constant 0 : index
    %0 = vector.load %arg0[%c0, %c0_0] : memref<128x128xbf16, #tpu.memory_space<vmem>>, vector<128x128xbf16>
    %c0_1 = arith.constant 0 : index
    %c0_2 = arith.constant 0 : index
    %1 = vector.load %arg1[%c0_1, %c0_2] : memref<128x384xbf16, #tpu.memory_space<vmem>>, vector<128x384xbf16>
    %cst = arith.constant dense<0.000000e+00> : vector<128x384xf32>
    %2 = tpu.matmul %0, %1, %cst {dimension_numbers = #tpu.dot_dimension_numbers<[1], [0], [0], [1], [0, 0, 1, 1], [], []>} : vector<128x128xbf16>, vector<128x384xbf16>, vector<128x384xf32> -> vector<128x384xf32>
    %c0_3 = arith.constant 0 : index
    %c0_4 = arith.constant 0 : index
    %3 = vector.load %arg2[%c0_3, %c0_4] : memref<1x384xf32, #tpu.memory_space<vmem>>, vector<1x384xf32>
    %4 = vector.broadcast %3 : vector<1x384xf32> to vector<128x384xf32>
    %5 = arith.addf %2, %4 : vector<128x384xf32>
    %c0_5 = arith.constant 0 : index
    %c0_6 = arith.constant 0 : index
    %6 = vector.load %arg10[%c0_5, %c0_6] : memref<128x384xf32, #tpu.memory_space<vmem>>, vector<128x384xf32>
    tpu.vector_store %arg10[%c0_5, %c0_6], %5 {strides = array<i32>} : memref<128x384xf32, #tpu.memory_space<vmem>>, vector<128x384xf32>,
    %c0_7 = arith.constant 0 : index
    %c0_8 = arith.constant 0 : index
    %7 = vector.load %arg4[%c0_7, %c0_8] : memref<1x128xf32, #tpu.memory_space<vmem>>, vector<1x128xf32>
    %8 = vector.shape_cast %7 : vector<1x128xf32> to vector<1x128xf32>
    %9 = vector.broadcast %8 : vector<1x128xf32> to vector<16x128xf32>
    %c0_9 = arith.constant 0 : index
    %c0_10 = arith.constant 0 : index
    %10 = vector.load %arg6[%c0_9, %c0_10] : memref<1x384xf32, #tpu.memory_space<vmem>>, vector<1x384xf32>
    %11 = vector.shape_cast %10 : vector<1x384xf32> to vector<1x384xf32>
    %12 = vector.broadcast %11 : vector<1x384xf32> to vector<16x384xf32>
    %c0_11 = arith.constant 0 : index
    %c0_12 = arith.constant 0 : index
    %13 = vector.load %arg8[%c0_11, %c0_12] : memref<1x128xf32, #tpu.memory_space<vmem>>, vector<1x128xf32>
    %14 = vector.shape_cast %13 : vector<1x128xf32> to vector<1x128xf32>
    %15 = vector.broadcast %14 : vector<1x128xf32> to vector<16x128xf32>
    %cst_13 = arith.constant 0.000000e+00 : f32
    %16 = vector.broadcast %cst_13 : f32 to vector<16x128xf32>
    %cst_14 = arith.constant 0.000000e+00 : f32
    %17 = vector.broadcast %cst_14 : f32 to vector<16x128xf32>
    %18 = arith.truncf %16 : vector<16x128xf32> to vector<16x128xbf16>
    %c0_15 = arith.constant 0 : index
    %c0_16 = arith.constant 0 : index
    %19 = vector.load %arg3[%c0_15, %c0_16] : memref<128x384xbf16, #tpu.memory_space<vmem>>, vector<128x384xbf16>
    %cst_17 = arith.constant dense<0.000000e+00> : vector<16x384xf32>
    %20 = tpu.matmul %18, %19, %cst_17 {dimension_numbers = #tpu.dot_dimension_numbers<[1], [0], [0], [1], [0, 0, 1, 1], [], []>} : vector<16x128xbf16>, vector<128x384xbf16>, vector<16x384xf32> -> vector<16x384xf32>
    %21 = arith.truncf %17 : vector<16x128xf32> to vector<16x128xbf16>
    %c0_18 = arith.constant 0 : index
    %c0_19 = arith.constant 0 : index
    %22 = vector.load %arg7[%c0_18, %c0_19] : memref<128x384xbf16, #tpu.memory_space<vmem>>, vector<128x384xbf16>
    %cst_20 = arith.constant dense<0.000000e+00> : vector<16x384xf32>
    %23 = tpu.matmul %21, %22, %cst_20 {dimension_numbers = #tpu.dot_dimension_numbers<[1], [0], [0], [1], [0, 0, 1, 1], [], []>} : vector<16x128xbf16>, vector<128x384xbf16>, vector<16x384xf32> -> vector<16x384xf32>
    %c0_21 = arith.constant 0 : index
    %c0_22 = arith.constant 0 : index
    %24 = vector.load %arg10[%c0_21, %c0_22] : memref<128x384xf32, #tpu.memory_space<vmem>>, vector<16x384xf32>
    %25 = vector.extract_strided_slice %24 {offsets = [0, 0], sizes = [16, 128], strides = [1, 1]} : vector<16x384xf32> to vector<16x128xf32>
    %26 = vector.extract_strided_slice %20 {offsets = [0, 0], sizes = [16, 128], strides = [1, 1]} : vector<16x384xf32> to vector<16x128xf32>
    %27 = arith.addf %25, %26 : vector<16x128xf32>
    %28 = arith.negf %27 : vector<16x128xf32>
    %29 = math.exp %28 : vector<16x128xf32>
    %cst_23 = arith.constant 1.000000e+00 : f32
    %30 = vector.broadcast %cst_23 : f32 to vector<16x128xf32>
    %31 = arith.addf %30, %29 : vector<16x128xf32>
    %32 = arith.divf %30, %31 : vector<16x128xf32>
    %33 = vector.extract_strided_slice %24 {offsets = [0, 128], sizes = [16, 128], strides = [1, 1]} : vector<16x384xf32> to vector<16x128xf32>
    %34 = vector.extract_strided_slice %20 {offsets = [0, 128], sizes = [16, 128], strides = [1, 1]} : vector<16x384xf32> to vector<16x128xf32>
    %35 = arith.addf %33, %34 : vector<16x128xf32>
    %36 = arith.negf %35 : vector<16x128xf32>
    %37 = math.exp %36 : vector<16x128xf32>
    %cst_24 = arith.constant 1.000000e+00 : f32
    %38 = vector.broadcast %cst_24 : f32 to vector<16x128xf32>
    %39 = arith.addf %38, %37 : vector<16x128xf32>
    %40 = arith.divf %38, %39 : vector<16x128xf32>
    %41 = vector.extract_strided_slice %24 {offsets = [0, 256], sizes = [16, 128], strides = [1, 1]} : vector<16x384xf32> to vector<16x128xf32>
    %42 = vector.extract_strided_slice %20 {offsets = [0, 256], sizes = [16, 128], strides = [1, 1]} : vector<16x384xf32> to vector<16x128xf32>
    %43 = arith.addf %42, %9 : vector<16x128xf32>
    %44 = arith.mulf %32, %43 : vector<16x128xf32>
    %45 = arith.addf %41, %44 : vector<16x128xf32>
    %46 = math.tanh %45 : vector<16x128xf32>
    %cst_25 = arith.constant 1.000000e+00 : f32
    %47 = vector.broadcast %cst_25 : f32 to vector<16x128xf32>
    %48 = arith.subf %47, %40 : vector<16x128xf32>
    %49 = arith.mulf %48, %46 : vector<16x128xf32>
    %50 = arith.mulf %40, %16 : vector<16x128xf32>
    %51 = arith.addf %49, %50 : vector<16x128xf32>
    %52 = arith.truncf %51 : vector<16x128xf32> to vector<16x128xbf16>
    %c0_26 = arith.constant 0 : index
    %c0_27 = arith.constant 0 : index
    %53 = vector.load %arg5[%c0_26, %c0_27] : memref<128x384xbf16, #tpu.memory_space<vmem>>, vector<128x384xbf16>
    %cst_28 = arith.constant dense<0.000000e+00> : vector<16x384xf32>
    %54 = tpu.matmul %52, %53, %cst_28 {dimension_numbers = #tpu.dot_dimension_numbers<[1], [0], [0], [1], [0, 0, 1, 1], [], []>} : vector<16x128xbf16>, vector<128x384xbf16>, vector<16x384xf32> -> vector<16x384xf32>
    %55 = arith.addf %54, %12 : vector<16x384xf32>
    %56 = vector.extract_strided_slice %55 {offsets = [0, 0], sizes = [16, 128], strides = [1, 1]} : vector<16x384xf32> to vector<16x128xf32>
    %57 = vector.extract_strided_slice %23 {offsets = [0, 0], sizes = [16, 128], strides = [1, 1]} : vector<16x384xf32> to vector<16x128xf32>
    %58 = arith.addf %56, %57 : vector<16x128xf32>
    %59 = arith.negf %58 : vector<16x128xf32>
    %60 = math.exp %59 : vector<16x128xf32>
    %cst_29 = arith.constant 1.000000e+00 : f32
    %61 = vector.broadcast %cst_29 : f32 to vector<16x128xf32>
    %62 = arith.addf %61, %60 : vector<16x128xf32>
    %63 = arith.divf %61, %62 : vector<16x128xf32>
    %64 = vector.extract_strided_slice %55 {offsets = [0, 128], sizes = [16, 128], strides = [1, 1]} : vector<16x384xf32> to vector<16x128xf32>
    %65 = vector.extract_strided_slice %23 {offsets = [0, 128], sizes = [16, 128], strides = [1, 1]} : vector<16x384xf32> to vector<16x128xf32>
    %66 = arith.addf %64, %65 : vector<16x128xf32>
    %67 = arith.negf %66 : vector<16x128xf32>
    %68 = math.exp %67 : vector<16x128xf32>
    %cst_30 = arith.constant 1.000000e+00 : f32
    %69 = vector.broadcast %cst_30 : f32 to vector<16x128xf32>
    %70 = arith.addf %69, %68 : vector<16x128xf32>
    %71 = arith.divf %69, %70 : vector<16x128xf32>
    %72 = vector.extract_strided_slice %55 {offsets = [0, 256], sizes = [16, 128], strides = [1, 1]} : vector<16x384xf32> to vector<16x128xf32>
    %73 = vector.extract_strided_slice %23 {offsets = [0, 256], sizes = [16, 128], strides = [1, 1]} : vector<16x384xf32> to vector<16x128xf32>
    %74 = arith.addf %73, %15 : vector<16x128xf32>
    %75 = arith.mulf %63, %74 : vector<16x128xf32>
    %76 = arith.addf %72, %75 : vector<16x128xf32>
    %77 = math.tanh %76 : vector<16x128xf32>
    %cst_31 = arith.constant 1.000000e+00 : f32
    %78 = vector.broadcast %cst_31 : f32 to vector<16x128xf32>
    %79 = arith.subf %78, %71 : vector<16x128xf32>
    %80 = arith.mulf %79, %77 : vector<16x128xf32>
    %81 = arith.mulf %71, %17 : vector<16x128xf32>
    %82 = arith.addf %80, %81 : vector<16x128xf32>
    %83 = arith.truncf %51 : vector<16x128xf32> to vector<16x128xbf16>
    %c0_32 = arith.constant 0 : index
    %c0_33 = arith.constant 0 : index
    %84 = vector.load %arg3[%c0_32, %c0_33] : memref<128x384xbf16, #tpu.memory_space<vmem>>, vector<128x384xbf16>
    %cst_34 = arith.constant dense<0.000000e+00> : vector<16x384xf32>
    %85 = tpu.matmul %83, %84, %cst_34 {dimension_numbers = #tpu.dot_dimension_numbers<[1], [0], [0], [1], [0, 0, 1, 1], [], []>} : vector<16x128xbf16>, vector<128x384xbf16>, vector<16x384xf32> -> vector<16x384xf32>
    %86 = arith.truncf %82 : vector<16x128xf32> to vector<16x128xbf16>
    %c0_35 = arith.constant 0 : index
    %c0_36 = arith.constant 0 : index
    %87 = vector.load %arg7[%c0_35, %c0_36] : memref<128x384xbf16, #tpu.memory_space<vmem>>, vector<128x384xbf16>
    %cst_37 = arith.constant dense<0.000000e+00> : vector<16x384xf32>
    %88 = tpu.matmul %86, %87, %cst_37 {dimension_numbers = #tpu.dot_dimension_numbers<[1], [0], [0], [1], [0, 0, 1, 1], [], []>} : vector<16x128xbf16>, vector<128x384xbf16>, vector<16x384xf32> -> vector<16x384xf32>
    %c16 = arith.constant 16 : index
    %c0_38 = arith.constant 0 : index
    %89 = vector.load %arg10[%c16, %c0_38] : memref<128x384xf32, #tpu.memory_space<vmem>>, vector<16x384xf32>
    %90 = vector.extract_strided_slice %89 {offsets = [0, 0], sizes = [16, 128], strides = [1, 1]} : vector<16x384xf32> to vector<16x128xf32>
    %91 = vector.extract_strided_slice %85 {offsets = [0, 0], sizes = [16, 128], strides = [1, 1]} : vector<16x384xf32> to vector<16x128xf32>
    %92 = arith.addf %90, %91 : vector<16x128xf32>
    %93 = arith.negf %92 : vector<16x128xf32>
    %94 = math.exp %93 : vector<16x128xf32>
    %cst_39 = arith.constant 1.000000e+00 : f32
    %95 = vector.broadcast %cst_39 : f32 to vector<16x128xf32>
    %96 = arith.addf %95, %94 : vector<16x128xf32>
    %97 = arith.divf %95, %96 : vector<16x128xf32>
    %98 = vector.extract_strided_slice %89 {offsets = [0, 128], sizes = [16, 128], strides = [1, 1]} : vector<16x384xf32> to vector<16x128xf32>
    %99 = vector.extract_strided_slice %85 {offsets = [0, 128], sizes = [16, 128], strides = [1, 1]} : vector<16x384xf32> to vector<16x128xf32>
    %100 = arith.addf %98, %99 : vector<16x128xf32>
    %101 = arith.negf %100 : vector<16x128xf32>
    %102 = math.exp %101 : vector<16x128xf32>
    %cst_40 = arith.constant 1.000000e+00 : f32
    %103 = vector.broadcast %cst_40 : f32 to vector<16x128xf32>
    %104 = arith.addf %103, %102 : vector<16x128xf32>
    %105 = arith.divf %103, %104 : vector<16x128xf32>
    %106 = vector.extract_strided_slice %89 {offsets = [0, 256], sizes = [16, 128], strides = [1, 1]} : vector<16x384xf32> to vector<16x128xf32>
    %107 = vector.extract_strided_slice %85 {offsets = [0, 256], sizes = [16, 128], strides = [1, 1]} : vector<16x384xf32> to vector<16x128xf32>
    %108 = arith.addf %107, %9 : vector<16x128xf32>
    %109 = arith.mulf %97, %108 : vector<16x128xf32>
    %110 = arith.addf %106, %109 : vector<16x128xf32>
    %111 = math.tanh %110 : vector<16x128xf32>
    %cst_41 = arith.constant 1.000000e+00 : f32
    %112 = vector.broadcast %cst_41 : f32 to vector<16x128xf32>
    %113 = arith.subf %112, %105 : vector<16x128xf32>
    %114 = arith.mulf %113, %111 : vector<16x128xf32>
    %115 = arith.mulf %105, %51 : vector<16x128xf32>
    %116 = arith.addf %114, %115 : vector<16x128xf32>
    %117 = arith.truncf %116 : vector<16x128xf32> to vector<16x128xbf16>
    %c0_42 = arith.constant 0 : index
    %c0_43 = arith.constant 0 : index
    %118 = vector.load %arg5[%c0_42, %c0_43] : memref<128x384xbf16, #tpu.memory_space<vmem>>, vector<128x384xbf16>
    %cst_44 = arith.constant dense<0.000000e+00> : vector<16x384xf32>
    %119 = tpu.matmul %117, %118, %cst_44 {dimension_numbers = #tpu.dot_dimension_numbers<[1], [0], [0], [1], [0, 0, 1, 1], [], []>} : vector<16x128xbf16>, vector<128x384xbf16>, vector<16x384xf32> -> vector<16x384xf32>
    %120 = arith.addf %119, %12 : vector<16x384xf32>
    %121 = vector.extract_strided_slice %120 {offsets = [0, 0], sizes = [16, 128], strides = [1, 1]} : vector<16x384xf32> to vector<16x128xf32>
    %122 = vector.extract_strided_slice %88 {offsets = [0, 0], sizes = [16, 128], strides = [1, 1]} : vector<16x384xf32> to vector<16x128xf32>
    %123 = arith.addf %121, %122 : vector<16x128xf32>
    %124 = arith.negf %123 : vector<16x128xf32>
    %125 = math.exp %124 : vector<16x128xf32>
    %cst_45 = arith.constant 1.000000e+00 : f32
    %126 = vector.broadcast %cst_45 : f32 to vector<16x128xf32>
    %127 = arith.addf %126, %125 : vector<16x128xf32>
    %128 = arith.divf %126, %127 : vector<16x128xf32>
    %129 = vector.extract_strided_slice %120 {offsets = [0, 128], sizes = [16, 128], strides = [1, 1]} : vector<16x384xf32> to vector<16x128xf32>
    %130 = vector.extract_strided_slice %88 {offsets = [0, 128], sizes = [16, 128], strides = [1, 1]} : vector<16x384xf32> to vector<16x128xf32>
    %131 = arith.addf %129, %130 : vector<16x128xf32>
    %132 = arith.negf %131 : vector<16x128xf32>
    %133 = math.exp %132 : vector<16x128xf32>
    %cst_46 = arith.constant 1.000000e+00 : f32
    %134 = vector.broadcast %cst_46 : f32 to vector<16x128xf32>
    %135 = arith.addf %134, %133 : vector<16x128xf32>
    %136 = arith.divf %134, %135 : vector<16x128xf32>
    %137 = vector.extract_strided_slice %120 {offsets = [0, 256], sizes = [16, 128], strides = [1, 1]} : vector<16x384xf32> to vector<16x128xf32>
    %138 = vector.extract_strided_slice %88 {offsets = [0, 256], sizes = [16, 128], strides = [1, 1]} : vector<16x384xf32> to vector<16x128xf32>
    %139 = arith.addf %138, %15 : vector<16x128xf32>
    %140 = arith.mulf %128, %139 : vector<16x128xf32>
    %141 = arith.addf %137, %140 : vector<16x128xf32>
    %142 = math.tanh %141 : vector<16x128xf32>
    %cst_47 = arith.constant 1.000000e+00 : f32
    %143 = vector.broadcast %cst_47 : f32 to vector<16x128xf32>
    %144 = arith.subf %143, %136 : vector<16x128xf32>
    %145 = arith.mulf %144, %142 : vector<16x128xf32>
    %146 = arith.mulf %136, %82 : vector<16x128xf32>
    %147 = arith.addf %145, %146 : vector<16x128xf32>
    %148 = arith.truncf %116 : vector<16x128xf32> to vector<16x128xbf16>
    %c0_48 = arith.constant 0 : index
    %c0_49 = arith.constant 0 : index
    %149 = vector.load %arg3[%c0_48, %c0_49] : memref<128x384xbf16, #tpu.memory_space<vmem>>, vector<128x384xbf16>
    %cst_50 = arith.constant dense<0.000000e+00> : vector<16x384xf32>
    %150 = tpu.matmul %148, %149, %cst_50 {dimension_numbers = #tpu.dot_dimension_numbers<[1], [0], [0], [1], [0, 0, 1, 1], [], []>} : vector<16x128xbf16>, vector<128x384xbf16>, vector<16x384xf32> -> vector<16x384xf32>
    %151 = arith.truncf %147 : vector<16x128xf32> to vector<16x128xbf16>
    %c0_51 = arith.constant 0 : index
    %c0_52 = arith.constant 0 : index
    %152 = vector.load %arg7[%c0_51, %c0_52] : memref<128x384xbf16, #tpu.memory_space<vmem>>, vector<128x384xbf16>
    %cst_53 = arith.constant dense<0.000000e+00> : vector<16x384xf32>
    %153 = tpu.matmul %151, %152, %cst_53 {dimension_numbers = #tpu.dot_dimension_numbers<[1], [0], [0], [1], [0, 0, 1, 1], [], []>} : vector<16x128xbf16>, vector<128x384xbf16>, vector<16x384xf32> -> vector<16x384xf32>
    %c32 = arith.constant 32 : index
    %c0_54 = arith.constant 0 : index
    %154 = vector.load %arg10[%c32, %c0_54] : memref<128x384xf32, #tpu.memory_space<vmem>>, vector<16x384xf32>
    %155 = vector.extract_strided_slice %154 {offsets = [0, 0], sizes = [16, 128], strides = [1, 1]} : vector<16x384xf32> to vector<16x128xf32>
    %156 = vector.extract_strided_slice %150 {offsets = [0, 0], sizes = [16, 128], strides = [1, 1]} : vector<16x384xf32> to vector<16x128xf32>
    %157 = arith.addf %155, %156 : vector<16x128xf32>
    %158 = arith.negf %157 : vector<16x128xf32>
    %159 = math.exp %158 : vector<16x128xf32>
    %cst_55 = arith.constant 1.000000e+00 : f32
    %160 = vector.broadcast %cst_55 : f32 to vector<16x128xf32>
    %161 = arith.addf %160, %159 : vector<16x128xf32>
    %162 = arith.divf %160, %161 : vector<16x128xf32>
    %163 = vector.extract_strided_slice %154 {offsets = [0, 128], sizes = [16, 128], strides = [1, 1]} : vector<16x384xf32> to vector<16x128xf32>
    %164 = vector.extract_strided_slice %150 {offsets = [0, 128], sizes = [16, 128], strides = [1, 1]} : vector<16x384xf32> to vector<16x128xf32>
    %165 = arith.addf %163, %164 : vector<16x128xf32>
    %166 = arith.negf %165 : vector<16x128xf32>
    %167 = math.exp %166 : vector<16x128xf32>
    %cst_56 = arith.constant 1.000000e+00 : f32
    %168 = vector.broadcast %cst_56 : f32 to vector<16x128xf32>
    %169 = arith.addf %168, %167 : vector<16x128xf32>
    %170 = arith.divf %168, %169 : vector<16x128xf32>
    %171 = vector.extract_strided_slice %154 {offsets = [0, 256], sizes = [16, 128], strides = [1, 1]} : vector<16x384xf32> to vector<16x128xf32>
    %172 = vector.extract_strided_slice %150 {offsets = [0, 256], sizes = [16, 128], strides = [1, 1]} : vector<16x384xf32> to vector<16x128xf32>
    %173 = arith.addf %172, %9 : vector<16x128xf32>
    %174 = arith.mulf %162, %173 : vector<16x128xf32>
    %175 = arith.addf %171, %174 : vector<16x128xf32>
    %176 = math.tanh %175 : vector<16x128xf32>
    %cst_57 = arith.constant 1.000000e+00 : f32
    %177 = vector.broadcast %cst_57 : f32 to vector<16x128xf32>
    %178 = arith.subf %177, %170 : vector<16x128xf32>
    %179 = arith.mulf %178, %176 : vector<16x128xf32>
    %180 = arith.mulf %170, %116 : vector<16x128xf32>
    %181 = arith.addf %179, %180 : vector<16x128xf32>
    %182 = arith.truncf %181 : vector<16x128xf32> to vector<16x128xbf16>
    %c0_58 = arith.constant 0 : index
    %c0_59 = arith.constant 0 : index
    %183 = vector.load %arg5[%c0_58, %c0_59] : memref<128x384xbf16, #tpu.memory_space<vmem>>, vector<128x384xbf16>
    %cst_60 = arith.constant dense<0.000000e+00> : vector<16x384xf32>
    %184 = tpu.matmul %182, %183, %cst_60 {dimension_numbers = #tpu.dot_dimension_numbers<[1], [0], [0], [1], [0, 0, 1, 1], [], []>} : vector<16x128xbf16>, vector<128x384xbf16>, vector<16x384xf32> -> vector<16x384xf32>
    %185 = arith.addf %184, %12 : vector<16x384xf32>
    %186 = vector.extract_strided_slice %185 {offsets = [0, 0], sizes = [16, 128], strides = [1, 1]} : vector<16x384xf32> to vector<16x128xf32>
    %187 = vector.extract_strided_slice %153 {offsets = [0, 0], sizes = [16, 128], strides = [1, 1]} : vector<16x384xf32> to vector<16x128xf32>
    %188 = arith.addf %186, %187 : vector<16x128xf32>
    %189 = arith.negf %188 : vector<16x128xf32>
    %190 = math.exp %189 : vector<16x128xf32>
    %cst_61 = arith.constant 1.000000e+00 : f32
    %191 = vector.broadcast %cst_61 : f32 to vector<16x128xf32>
    %192 = arith.addf %191, %190 : vector<16x128xf32>
    %193 = arith.divf %191, %192 : vector<16x128xf32>
    %194 = vector.extract_strided_slice %185 {offsets = [0, 128], sizes = [16, 128], strides = [1, 1]} : vector<16x384xf32> to vector<16x128xf32>
    %195 = vector.extract_strided_slice %153 {offsets = [0, 128], sizes = [16, 128], strides = [1, 1]} : vector<16x384xf32> to vector<16x128xf32>
    %196 = arith.addf %194, %195 : vector<16x128xf32>
    %197 = arith.negf %196 : vector<16x128xf32>
    %198 = math.exp %197 : vector<16x128xf32>
    %cst_62 = arith.constant 1.000000e+00 : f32
    %199 = vector.broadcast %cst_62 : f32 to vector<16x128xf32>
    %200 = arith.addf %199, %198 : vector<16x128xf32>
    %201 = arith.divf %199, %200 : vector<16x128xf32>
    %202 = vector.extract_strided_slice %185 {offsets = [0, 256], sizes = [16, 128], strides = [1, 1]} : vector<16x384xf32> to vector<16x128xf32>
    %203 = vector.extract_strided_slice %153 {offsets = [0, 256], sizes = [16, 128], strides = [1, 1]} : vector<16x384xf32> to vector<16x128xf32>
    %204 = arith.addf %203, %15 : vector<16x128xf32>
    %205 = arith.mulf %193, %204 : vector<16x128xf32>
    %206 = arith.addf %202, %205 : vector<16x128xf32>
    %207 = math.tanh %206 : vector<16x128xf32>
    %cst_63 = arith.constant 1.000000e+00 : f32
    %208 = vector.broadcast %cst_63 : f32 to vector<16x128xf32>
    %209 = arith.subf %208, %201 : vector<16x128xf32>
    %210 = arith.mulf %209, %207 : vector<16x128xf32>
    %211 = arith.mulf %201, %147 : vector<16x128xf32>
    %212 = arith.addf %210, %211 : vector<16x128xf32>
    %213 = arith.truncf %181 : vector<16x128xf32> to vector<16x128xbf16>
    %c0_64 = arith.constant 0 : index
    %c0_65 = arith.constant 0 : index
    %214 = vector.load %arg3[%c0_64, %c0_65] : memref<128x384xbf16, #tpu.memory_space<vmem>>, vector<128x384xbf16>
    %cst_66 = arith.constant dense<0.000000e+00> : vector<16x384xf32>
    %215 = tpu.matmul %213, %214, %cst_66 {dimension_numbers = #tpu.dot_dimension_numbers<[1], [0], [0], [1], [0, 0, 1, 1], [], []>} : vector<16x128xbf16>, vector<128x384xbf16>, vector<16x384xf32> -> vector<16x384xf32>
    %216 = arith.truncf %212 : vector<16x128xf32> to vector<16x128xbf16>
    %c0_67 = arith.constant 0 : index
    %c0_68 = arith.constant 0 : index
    %217 = vector.load %arg7[%c0_67, %c0_68] : memref<128x384xbf16, #tpu.memory_space<vmem>>, vector<128x384xbf16>
    %cst_69 = arith.constant dense<0.000000e+00> : vector<16x384xf32>
    %218 = tpu.matmul %216, %217, %cst_69 {dimension_numbers = #tpu.dot_dimension_numbers<[1], [0], [0], [1], [0, 0, 1, 1], [], []>} : vector<16x128xbf16>, vector<128x384xbf16>, vector<16x384xf32> -> vector<16x384xf32>
    %c48 = arith.constant 48 : index
    %c0_70 = arith.constant 0 : index
    %219 = vector.load %arg10[%c48, %c0_70] : memref<128x384xf32, #tpu.memory_space<vmem>>, vector<16x384xf32>
    %220 = vector.extract_strided_slice %219 {offsets = [0, 0], sizes = [16, 128], strides = [1, 1]} : vector<16x384xf32> to vector<16x128xf32>
    %221 = vector.extract_strided_slice %215 {offsets = [0, 0], sizes = [16, 128], strides = [1, 1]} : vector<16x384xf32> to vector<16x128xf32>
    %222 = arith.addf %220, %221 : vector<16x128xf32>
    %223 = arith.negf %222 : vector<16x128xf32>
    %224 = math.exp %223 : vector<16x128xf32>
    %cst_71 = arith.constant 1.000000e+00 : f32
    %225 = vector.broadcast %cst_71 : f32 to vector<16x128xf32>
    %226 = arith.addf %225, %224 : vector<16x128xf32>
    %227 = arith.divf %225, %226 : vector<16x128xf32>
    %228 = vector.extract_strided_slice %219 {offsets = [0, 128], sizes = [16, 128], strides = [1, 1]} : vector<16x384xf32> to vector<16x128xf32>
    %229 = vector.extract_strided_slice %215 {offsets = [0, 128], sizes = [16, 128], strides = [1, 1]} : vector<16x384xf32> to vector<16x128xf32>
    %230 = arith.addf %228, %229 : vector<16x128xf32>
    %231 = arith.negf %230 : vector<16x128xf32>
    %232 = math.exp %231 : vector<16x128xf32>
    %cst_72 = arith.constant 1.000000e+00 : f32
    %233 = vector.broadcast %cst_72 : f32 to vector<16x128xf32>
    %234 = arith.addf %233, %232 : vector<16x128xf32>
    %235 = arith.divf %233, %234 : vector<16x128xf32>
    %236 = vector.extract_strided_slice %219 {offsets = [0, 256], sizes = [16, 128], strides = [1, 1]} : vector<16x384xf32> to vector<16x128xf32>
    %237 = vector.extract_strided_slice %215 {offsets = [0, 256], sizes = [16, 128], strides = [1, 1]} : vector<16x384xf32> to vector<16x128xf32>
    %238 = arith.addf %237, %9 : vector<16x128xf32>
    %239 = arith.mulf %227, %238 : vector<16x128xf32>
    %240 = arith.addf %236, %239 : vector<16x128xf32>
    %241 = math.tanh %240 : vector<16x128xf32>
    %cst_73 = arith.constant 1.000000e+00 : f32
    %242 = vector.broadcast %cst_73 : f32 to vector<16x128xf32>
    %243 = arith.subf %242, %235 : vector<16x128xf32>
    %244 = arith.mulf %243, %241 : vector<16x128xf32>
    %245 = arith.mulf %235, %181 : vector<16x128xf32>
    %246 = arith.addf %244, %245 : vector<16x128xf32>
    %247 = arith.truncf %246 : vector<16x128xf32> to vector<16x128xbf16>
    %c0_74 = arith.constant 0 : index
    %c0_75 = arith.constant 0 : index
    %248 = vector.load %arg5[%c0_74, %c0_75] : memref<128x384xbf16, #tpu.memory_space<vmem>>, vector<128x384xbf16>
    %cst_76 = arith.constant dense<0.000000e+00> : vector<16x384xf32>
    %249 = tpu.matmul %247, %248, %cst_76 {dimension_numbers = #tpu.dot_dimension_numbers<[1], [0], [0], [1], [0, 0, 1, 1], [], []>} : vector<16x128xbf16>, vector<128x384xbf16>, vector<16x384xf32> -> vector<16x384xf32>
    %250 = arith.addf %249, %12 : vector<16x384xf32>
    %251 = vector.extract_strided_slice %250 {offsets = [0, 0], sizes = [16, 128], strides = [1, 1]} : vector<16x384xf32> to vector<16x128xf32>
    %252 = vector.extract_strided_slice %218 {offsets = [0, 0], sizes = [16, 128], strides = [1, 1]} : vector<16x384xf32> to vector<16x128xf32>
    %253 = arith.addf %251, %252 : vector<16x128xf32>
    %254 = arith.negf %253 : vector<16x128xf32>
    %255 = math.exp %254 : vector<16x128xf32>
    %cst_77 = arith.constant 1.000000e+00 : f32
    %256 = vector.broadcast %cst_77 : f32 to vector<16x128xf32>
    %257 = arith.addf %256, %255 : vector<16x128xf32>
    %258 = arith.divf %256, %257 : vector<16x128xf32>
    %259 = vector.extract_strided_slice %250 {offsets = [0, 128], sizes = [16, 128], strides = [1, 1]} : vector<16x384xf32> to vector<16x128xf32>
    %260 = vector.extract_strided_slice %218 {offsets = [0, 128], sizes = [16, 128], strides = [1, 1]} : vector<16x384xf32> to vector<16x128xf32>
    %261 = arith.addf %259, %260 : vector<16x128xf32>
    %262 = arith.negf %261 : vector<16x128xf32>
    %263 = math.exp %262 : vector<16x128xf32>
    %cst_78 = arith.constant 1.000000e+00 : f32
    %264 = vector.broadcast %cst_78 : f32 to vector<16x128xf32>
    %265 = arith.addf %264, %263 : vector<16x128xf32>
    %266 = arith.divf %264, %265 : vector<16x128xf32>
    %267 = vector.extract_strided_slice %250 {offsets = [0, 256], sizes = [16, 128], strides = [1, 1]} : vector<16x384xf32> to vector<16x128xf32>
    %268 = vector.extract_strided_slice %218 {offsets = [0, 256], sizes = [16, 128], strides = [1, 1]} : vector<16x384xf32> to vector<16x128xf32>
    %269 = arith.addf %268, %15 : vector<16x128xf32>
    %270 = arith.mulf %258, %269 : vector<16x128xf32>
    %271 = arith.addf %267, %270 : vector<16x128xf32>
    %272 = math.tanh %271 : vector<16x128xf32>
    %cst_79 = arith.constant 1.000000e+00 : f32
    %273 = vector.broadcast %cst_79 : f32 to vector<16x128xf32>
    %274 = arith.subf %273, %266 : vector<16x128xf32>
    %275 = arith.mulf %274, %272 : vector<16x128xf32>
    %276 = arith.mulf %266, %212 : vector<16x128xf32>
    %277 = arith.addf %275, %276 : vector<16x128xf32>
    %278 = arith.truncf %246 : vector<16x128xf32> to vector<16x128xbf16>
    %c0_80 = arith.constant 0 : index
    %c0_81 = arith.constant 0 : index
    %279 = vector.load %arg3[%c0_80, %c0_81] : memref<128x384xbf16, #tpu.memory_space<vmem>>, vector<128x384xbf16>
    %cst_82 = arith.constant dense<0.000000e+00> : vector<16x384xf32>
    %280 = tpu.matmul %278, %279, %cst_82 {dimension_numbers = #tpu.dot_dimension_numbers<[1], [0], [0], [1], [0, 0, 1, 1], [], []>} : vector<16x128xbf16>, vector<128x384xbf16>, vector<16x384xf32> -> vector<16x384xf32>
    %281 = arith.truncf %277 : vector<16x128xf32> to vector<16x128xbf16>
    %c0_83 = arith.constant 0 : index
    %c0_84 = arith.constant 0 : index
    %282 = vector.load %arg7[%c0_83, %c0_84] : memref<128x384xbf16, #tpu.memory_space<vmem>>, vector<128x384xbf16>
    %cst_85 = arith.constant dense<0.000000e+00> : vector<16x384xf32>
    %283 = tpu.matmul %281, %282, %cst_85 {dimension_numbers = #tpu.dot_dimension_numbers<[1], [0], [0], [1], [0, 0, 1, 1], [], []>} : vector<16x128xbf16>, vector<128x384xbf16>, vector<16x384xf32> -> vector<16x384xf32>
    %c64 = arith.constant 64 : index
    %c0_86 = arith.constant 0 : index
    %284 = vector.load %arg10[%c64, %c0_86] : memref<128x384xf32, #tpu.memory_space<vmem>>, vector<16x384xf32>
    %285 = vector.extract_strided_slice %284 {offsets = [0, 0], sizes = [16, 128], strides = [1, 1]} : vector<16x384xf32> to vector<16x128xf32>
    %286 = vector.extract_strided_slice %280 {offsets = [0, 0], sizes = [16, 128], strides = [1, 1]} : vector<16x384xf32> to vector<16x128xf32>
    %287 = arith.addf %285, %286 : vector<16x128xf32>
    %288 = arith.negf %287 : vector<16x128xf32>
    %289 = math.exp %288 : vector<16x128xf32>
    %cst_87 = arith.constant 1.000000e+00 : f32
    %290 = vector.broadcast %cst_87 : f32 to vector<16x128xf32>
    %291 = arith.addf %290, %289 : vector<16x128xf32>
    %292 = arith.divf %290, %291 : vector<16x128xf32>
    %293 = vector.extract_strided_slice %284 {offsets = [0, 128], sizes = [16, 128], strides = [1, 1]} : vector<16x384xf32> to vector<16x128xf32>
    %294 = vector.extract_strided_slice %280 {offsets = [0, 128], sizes = [16, 128], strides = [1, 1]} : vector<16x384xf32> to vector<16x128xf32>
    %295 = arith.addf %293, %294 : vector<16x128xf32>
    %296 = arith.negf %295 : vector<16x128xf32>
    %297 = math.exp %296 : vector<16x128xf32>
    %cst_88 = arith.constant 1.000000e+00 : f32
    %298 = vector.broadcast %cst_88 : f32 to vector<16x128xf32>
    %299 = arith.addf %298, %297 : vector<16x128xf32>
    %300 = arith.divf %298, %299 : vector<16x128xf32>
    %301 = vector.extract_strided_slice %284 {offsets = [0, 256], sizes = [16, 128], strides = [1, 1]} : vector<16x384xf32> to vector<16x128xf32>
    %302 = vector.extract_strided_slice %280 {offsets = [0, 256], sizes = [16, 128], strides = [1, 1]} : vector<16x384xf32> to vector<16x128xf32>
    %303 = arith.addf %302, %9 : vector<16x128xf32>
    %304 = arith.mulf %292, %303 : vector<16x128xf32>
    %305 = arith.addf %301, %304 : vector<16x128xf32>
    %306 = math.tanh %305 : vector<16x128xf32>
    %cst_89 = arith.constant 1.000000e+00 : f32
    %307 = vector.broadcast %cst_89 : f32 to vector<16x128xf32>
    %308 = arith.subf %307, %300 : vector<16x128xf32>
    %309 = arith.mulf %308, %306 : vector<16x128xf32>
    %310 = arith.mulf %300, %246 : vector<16x128xf32>
    %311 = arith.addf %309, %310 : vector<16x128xf32>
    %312 = arith.truncf %311 : vector<16x128xf32> to vector<16x128xbf16>
    %c0_90 = arith.constant 0 : index
    %c0_91 = arith.constant 0 : index
    %313 = vector.load %arg5[%c0_90, %c0_91] : memref<128x384xbf16, #tpu.memory_space<vmem>>, vector<128x384xbf16>
    %cst_92 = arith.constant dense<0.000000e+00> : vector<16x384xf32>
    %314 = tpu.matmul %312, %313, %cst_92 {dimension_numbers = #tpu.dot_dimension_numbers<[1], [0], [0], [1], [0, 0, 1, 1], [], []>} : vector<16x128xbf16>, vector<128x384xbf16>, vector<16x384xf32> -> vector<16x384xf32>
    %315 = arith.addf %314, %12 : vector<16x384xf32>
    %316 = vector.extract_strided_slice %315 {offsets = [0, 0], sizes = [16, 128], strides = [1, 1]} : vector<16x384xf32> to vector<16x128xf32>
    %317 = vector.extract_strided_slice %283 {offsets = [0, 0], sizes = [16, 128], strides = [1, 1]} : vector<16x384xf32> to vector<16x128xf32>
    %318 = arith.addf %316, %317 : vector<16x128xf32>
    %319 = arith.negf %318 : vector<16x128xf32>
    %320 = math.exp %319 : vector<16x128xf32>
    %cst_93 = arith.constant 1.000000e+00 : f32
    %321 = vector.broadcast %cst_93 : f32 to vector<16x128xf32>
    %322 = arith.addf %321, %320 : vector<16x128xf32>
    %323 = arith.divf %321, %322 : vector<16x128xf32>
    %324 = vector.extract_strided_slice %315 {offsets = [0, 128], sizes = [16, 128], strides = [1, 1]} : vector<16x384xf32> to vector<16x128xf32>
    %325 = vector.extract_strided_slice %283 {offsets = [0, 128], sizes = [16, 128], strides = [1, 1]} : vector<16x384xf32> to vector<16x128xf32>
    %326 = arith.addf %324, %325 : vector<16x128xf32>
    %327 = arith.negf %326 : vector<16x128xf32>
    %328 = math.exp %327 : vector<16x128xf32>
    %cst_94 = arith.constant 1.000000e+00 : f32
    %329 = vector.broadcast %cst_94 : f32 to vector<16x128xf32>
    %330 = arith.addf %329, %328 : vector<16x128xf32>
    %331 = arith.divf %329, %330 : vector<16x128xf32>
    %332 = vector.extract_strided_slice %315 {offsets = [0, 256], sizes = [16, 128], strides = [1, 1]} : vector<16x384xf32> to vector<16x128xf32>
    %333 = vector.extract_strided_slice %283 {offsets = [0, 256], sizes = [16, 128], strides = [1, 1]} : vector<16x384xf32> to vector<16x128xf32>
    %334 = arith.addf %333, %15 : vector<16x128xf32>
    %335 = arith.mulf %323, %334 : vector<16x128xf32>
    %336 = arith.addf %332, %335 : vector<16x128xf32>
    %337 = math.tanh %336 : vector<16x128xf32>
    %cst_95 = arith.constant 1.000000e+00 : f32
    %338 = vector.broadcast %cst_95 : f32 to vector<16x128xf32>
    %339 = arith.subf %338, %331 : vector<16x128xf32>
    %340 = arith.mulf %339, %337 : vector<16x128xf32>
    %341 = arith.mulf %331, %277 : vector<16x128xf32>
    %342 = arith.addf %340, %341 : vector<16x128xf32>
    %343 = arith.truncf %311 : vector<16x128xf32> to vector<16x128xbf16>
    %c0_96 = arith.constant 0 : index
    %c0_97 = arith.constant 0 : index
    %344 = vector.load %arg3[%c0_96, %c0_97] : memref<128x384xbf16, #tpu.memory_space<vmem>>, vector<128x384xbf16>
    %cst_98 = arith.constant dense<0.000000e+00> : vector<16x384xf32>
    %345 = tpu.matmul %343, %344, %cst_98 {dimension_numbers = #tpu.dot_dimension_numbers<[1], [0], [0], [1], [0, 0, 1, 1], [], []>} : vector<16x128xbf16>, vector<128x384xbf16>, vector<16x384xf32> -> vector<16x384xf32>
    %346 = arith.truncf %342 : vector<16x128xf32> to vector<16x128xbf16>
    %c0_99 = arith.constant 0 : index
    %c0_100 = arith.constant 0 : index
    %347 = vector.load %arg7[%c0_99, %c0_100] : memref<128x384xbf16, #tpu.memory_space<vmem>>, vector<128x384xbf16>
    %cst_101 = arith.constant dense<0.000000e+00> : vector<16x384xf32>
    %348 = tpu.matmul %346, %347, %cst_101 {dimension_numbers = #tpu.dot_dimension_numbers<[1], [0], [0], [1], [0, 0, 1, 1], [], []>} : vector<16x128xbf16>, vector<128x384xbf16>, vector<16x384xf32> -> vector<16x384xf32>
    %c80 = arith.constant 80 : index
    %c0_102 = arith.constant 0 : index
    %349 = vector.load %arg10[%c80, %c0_102] : memref<128x384xf32, #tpu.memory_space<vmem>>, vector<16x384xf32>
    %350 = vector.extract_strided_slice %349 {offsets = [0, 0], sizes = [16, 128], strides = [1, 1]} : vector<16x384xf32> to vector<16x128xf32>
    %351 = vector.extract_strided_slice %345 {offsets = [0, 0], sizes = [16, 128], strides = [1, 1]} : vector<16x384xf32> to vector<16x128xf32>
    %352 = arith.addf %350, %351 : vector<16x128xf32>
    %353 = arith.negf %352 : vector<16x128xf32>
    %354 = math.exp %353 : vector<16x128xf32>
    %cst_103 = arith.constant 1.000000e+00 : f32
    %355 = vector.broadcast %cst_103 : f32 to vector<16x128xf32>
    %356 = arith.addf %355, %354 : vector<16x128xf32>
    %357 = arith.divf %355, %356 : vector<16x128xf32>
    %358 = vector.extract_strided_slice %349 {offsets = [0, 128], sizes = [16, 128], strides = [1, 1]} : vector<16x384xf32> to vector<16x128xf32>
    %359 = vector.extract_strided_slice %345 {offsets = [0, 128], sizes = [16, 128], strides = [1, 1]} : vector<16x384xf32> to vector<16x128xf32>
    %360 = arith.addf %358, %359 : vector<16x128xf32>
    %361 = arith.negf %360 : vector<16x128xf32>
    %362 = math.exp %361 : vector<16x128xf32>
    %cst_104 = arith.constant 1.000000e+00 : f32
    %363 = vector.broadcast %cst_104 : f32 to vector<16x128xf32>
    %364 = arith.addf %363, %362 : vector<16x128xf32>
    %365 = arith.divf %363, %364 : vector<16x128xf32>
    %366 = vector.extract_strided_slice %349 {offsets = [0, 256], sizes = [16, 128], strides = [1, 1]} : vector<16x384xf32> to vector<16x128xf32>
    %367 = vector.extract_strided_slice %345 {offsets = [0, 256], sizes = [16, 128], strides = [1, 1]} : vector<16x384xf32> to vector<16x128xf32>
    %368 = arith.addf %367, %9 : vector<16x128xf32>
    %369 = arith.mulf %357, %368 : vector<16x128xf32>
    %370 = arith.addf %366, %369 : vector<16x128xf32>
    %371 = math.tanh %370 : vector<16x128xf32>
    %cst_105 = arith.constant 1.000000e+00 : f32
    %372 = vector.broadcast %cst_105 : f32 to vector<16x128xf32>
    %373 = arith.subf %372, %365 : vector<16x128xf32>
    %374 = arith.mulf %373, %371 : vector<16x128xf32>
    %375 = arith.mulf %365, %311 : vector<16x128xf32>
    %376 = arith.addf %374, %375 : vector<16x128xf32>
    %377 = arith.truncf %376 : vector<16x128xf32> to vector<16x128xbf16>
    %c0_106 = arith.constant 0 : index
    %c0_107 = arith.constant 0 : index
    %378 = vector.load %arg5[%c0_106, %c0_107] : memref<128x384xbf16, #tpu.memory_space<vmem>>, vector<128x384xbf16>
    %cst_108 = arith.constant dense<0.000000e+00> : vector<16x384xf32>
    %379 = tpu.matmul %377, %378, %cst_108 {dimension_numbers = #tpu.dot_dimension_numbers<[1], [0], [0], [1], [0, 0, 1, 1], [], []>} : vector<16x128xbf16>, vector<128x384xbf16>, vector<16x384xf32> -> vector<16x384xf32>
    %380 = arith.addf %379, %12 : vector<16x384xf32>
    %381 = vector.extract_strided_slice %380 {offsets = [0, 0], sizes = [16, 128], strides = [1, 1]} : vector<16x384xf32> to vector<16x128xf32>
    %382 = vector.extract_strided_slice %348 {offsets = [0, 0], sizes = [16, 128], strides = [1, 1]} : vector<16x384xf32> to vector<16x128xf32>
    %383 = arith.addf %381, %382 : vector<16x128xf32>
    %384 = arith.negf %383 : vector<16x128xf32>
    %385 = math.exp %384 : vector<16x128xf32>
    %cst_109 = arith.constant 1.000000e+00 : f32
    %386 = vector.broadcast %cst_109 : f32 to vector<16x128xf32>
    %387 = arith.addf %386, %385 : vector<16x128xf32>
    %388 = arith.divf %386, %387 : vector<16x128xf32>
    %389 = vector.extract_strided_slice %380 {offsets = [0, 128], sizes = [16, 128], strides = [1, 1]} : vector<16x384xf32> to vector<16x128xf32>
    %390 = vector.extract_strided_slice %348 {offsets = [0, 128], sizes = [16, 128], strides = [1, 1]} : vector<16x384xf32> to vector<16x128xf32>
    %391 = arith.addf %389, %390 : vector<16x128xf32>
    %392 = arith.negf %391 : vector<16x128xf32>
    %393 = math.exp %392 : vector<16x128xf32>
    %cst_110 = arith.constant 1.000000e+00 : f32
    %394 = vector.broadcast %cst_110 : f32 to vector<16x128xf32>
    %395 = arith.addf %394, %393 : vector<16x128xf32>
    %396 = arith.divf %394, %395 : vector<16x128xf32>
    %397 = vector.extract_strided_slice %380 {offsets = [0, 256], sizes = [16, 128], strides = [1, 1]} : vector<16x384xf32> to vector<16x128xf32>
    %398 = vector.extract_strided_slice %348 {offsets = [0, 256], sizes = [16, 128], strides = [1, 1]} : vector<16x384xf32> to vector<16x128xf32>
    %399 = arith.addf %398, %15 : vector<16x128xf32>
    %400 = arith.mulf %388, %399 : vector<16x128xf32>
    %401 = arith.addf %397, %400 : vector<16x128xf32>
    %402 = math.tanh %401 : vector<16x128xf32>
    %cst_111 = arith.constant 1.000000e+00 : f32
    %403 = vector.broadcast %cst_111 : f32 to vector<16x128xf32>
    %404 = arith.subf %403, %396 : vector<16x128xf32>
    %405 = arith.mulf %404, %402 : vector<16x128xf32>
    %406 = arith.mulf %396, %342 : vector<16x128xf32>
    %407 = arith.addf %405, %406 : vector<16x128xf32>
    %408 = arith.truncf %376 : vector<16x128xf32> to vector<16x128xbf16>
    %c0_112 = arith.constant 0 : index
    %c0_113 = arith.constant 0 : index
    %409 = vector.load %arg3[%c0_112, %c0_113] : memref<128x384xbf16, #tpu.memory_space<vmem>>, vector<128x384xbf16>
    %cst_114 = arith.constant dense<0.000000e+00> : vector<16x384xf32>
    %410 = tpu.matmul %408, %409, %cst_114 {dimension_numbers = #tpu.dot_dimension_numbers<[1], [0], [0], [1], [0, 0, 1, 1], [], []>} : vector<16x128xbf16>, vector<128x384xbf16>, vector<16x384xf32> -> vector<16x384xf32>
    %411 = arith.truncf %407 : vector<16x128xf32> to vector<16x128xbf16>
    %c0_115 = arith.constant 0 : index
    %c0_116 = arith.constant 0 : index
    %412 = vector.load %arg7[%c0_115, %c0_116] : memref<128x384xbf16, #tpu.memory_space<vmem>>, vector<128x384xbf16>
    %cst_117 = arith.constant dense<0.000000e+00> : vector<16x384xf32>
    %413 = tpu.matmul %411, %412, %cst_117 {dimension_numbers = #tpu.dot_dimension_numbers<[1], [0], [0], [1], [0, 0, 1, 1], [], []>} : vector<16x128xbf16>, vector<128x384xbf16>, vector<16x384xf32> -> vector<16x384xf32>
    %c96 = arith.constant 96 : index
    %c0_118 = arith.constant 0 : index
    %414 = vector.load %arg10[%c96, %c0_118] : memref<128x384xf32, #tpu.memory_space<vmem>>, vector<16x384xf32>
    %415 = vector.extract_strided_slice %414 {offsets = [0, 0], sizes = [16, 128], strides = [1, 1]} : vector<16x384xf32> to vector<16x128xf32>
    %416 = vector.extract_strided_slice %410 {offsets = [0, 0], sizes = [16, 128], strides = [1, 1]} : vector<16x384xf32> to vector<16x128xf32>
    %417 = arith.addf %415, %416 : vector<16x128xf32>
    %418 = arith.negf %417 : vector<16x128xf32>
    %419 = math.exp %418 : vector<16x128xf32>
    %cst_119 = arith.constant 1.000000e+00 : f32
    %420 = vector.broadcast %cst_119 : f32 to vector<16x128xf32>
    %421 = arith.addf %420, %419 : vector<16x128xf32>
    %422 = arith.divf %420, %421 : vector<16x128xf32>
    %423 = vector.extract_strided_slice %414 {offsets = [0, 128], sizes = [16, 128], strides = [1, 1]} : vector<16x384xf32> to vector<16x128xf32>
    %424 = vector.extract_strided_slice %410 {offsets = [0, 128], sizes = [16, 128], strides = [1, 1]} : vector<16x384xf32> to vector<16x128xf32>
    %425 = arith.addf %423, %424 : vector<16x128xf32>
    %426 = arith.negf %425 : vector<16x128xf32>
    %427 = math.exp %426 : vector<16x128xf32>
    %cst_120 = arith.constant 1.000000e+00 : f32
    %428 = vector.broadcast %cst_120 : f32 to vector<16x128xf32>
    %429 = arith.addf %428, %427 : vector<16x128xf32>
    %430 = arith.divf %428, %429 : vector<16x128xf32>
    %431 = vector.extract_strided_slice %414 {offsets = [0, 256], sizes = [16, 128], strides = [1, 1]} : vector<16x384xf32> to vector<16x128xf32>
    %432 = vector.extract_strided_slice %410 {offsets = [0, 256], sizes = [16, 128], strides = [1, 1]} : vector<16x384xf32> to vector<16x128xf32>
    %433 = arith.addf %432, %9 : vector<16x128xf32>
    %434 = arith.mulf %422, %433 : vector<16x128xf32>
    %435 = arith.addf %431, %434 : vector<16x128xf32>
    %436 = math.tanh %435 : vector<16x128xf32>
    %cst_121 = arith.constant 1.000000e+00 : f32
    %437 = vector.broadcast %cst_121 : f32 to vector<16x128xf32>
    %438 = arith.subf %437, %430 : vector<16x128xf32>
    %439 = arith.mulf %438, %436 : vector<16x128xf32>
    %440 = arith.mulf %430, %376 : vector<16x128xf32>
    %441 = arith.addf %439, %440 : vector<16x128xf32>
    %442 = arith.truncf %441 : vector<16x128xf32> to vector<16x128xbf16>
    %c0_122 = arith.constant 0 : index
    %c0_123 = arith.constant 0 : index
    %443 = vector.load %arg5[%c0_122, %c0_123] : memref<128x384xbf16, #tpu.memory_space<vmem>>, vector<128x384xbf16>
    %cst_124 = arith.constant dense<0.000000e+00> : vector<16x384xf32>
    %444 = tpu.matmul %442, %443, %cst_124 {dimension_numbers = #tpu.dot_dimension_numbers<[1], [0], [0], [1], [0, 0, 1, 1], [], []>} : vector<16x128xbf16>, vector<128x384xbf16>, vector<16x384xf32> -> vector<16x384xf32>
    %445 = arith.addf %444, %12 : vector<16x384xf32>
    %446 = vector.extract_strided_slice %445 {offsets = [0, 0], sizes = [16, 128], strides = [1, 1]} : vector<16x384xf32> to vector<16x128xf32>
    %447 = vector.extract_strided_slice %413 {offsets = [0, 0], sizes = [16, 128], strides = [1, 1]} : vector<16x384xf32> to vector<16x128xf32>
    %448 = arith.addf %446, %447 : vector<16x128xf32>
    %449 = arith.negf %448 : vector<16x128xf32>
    %450 = math.exp %449 : vector<16x128xf32>
    %cst_125 = arith.constant 1.000000e+00 : f32
    %451 = vector.broadcast %cst_125 : f32 to vector<16x128xf32>
    %452 = arith.addf %451, %450 : vector<16x128xf32>
    %453 = arith.divf %451, %452 : vector<16x128xf32>
    %454 = vector.extract_strided_slice %445 {offsets = [0, 128], sizes = [16, 128], strides = [1, 1]} : vector<16x384xf32> to vector<16x128xf32>
    %455 = vector.extract_strided_slice %413 {offsets = [0, 128], sizes = [16, 128], strides = [1, 1]} : vector<16x384xf32> to vector<16x128xf32>
    %456 = arith.addf %454, %455 : vector<16x128xf32>
    %457 = arith.negf %456 : vector<16x128xf32>
    %458 = math.exp %457 : vector<16x128xf32>
    %cst_126 = arith.constant 1.000000e+00 : f32
    %459 = vector.broadcast %cst_126 : f32 to vector<16x128xf32>
    %460 = arith.addf %459, %458 : vector<16x128xf32>
    %461 = arith.divf %459, %460 : vector<16x128xf32>
    %462 = vector.extract_strided_slice %445 {offsets = [0, 256], sizes = [16, 128], strides = [1, 1]} : vector<16x384xf32> to vector<16x128xf32>
    %463 = vector.extract_strided_slice %413 {offsets = [0, 256], sizes = [16, 128], strides = [1, 1]} : vector<16x384xf32> to vector<16x128xf32>
    %464 = arith.addf %463, %15 : vector<16x128xf32>
    %465 = arith.mulf %453, %464 : vector<16x128xf32>
    %466 = arith.addf %462, %465 : vector<16x128xf32>
    %467 = math.tanh %466 : vector<16x128xf32>
    %cst_127 = arith.constant 1.000000e+00 : f32
    %468 = vector.broadcast %cst_127 : f32 to vector<16x128xf32>
    %469 = arith.subf %468, %461 : vector<16x128xf32>
    %470 = arith.mulf %469, %467 : vector<16x128xf32>
    %471 = arith.mulf %461, %407 : vector<16x128xf32>
    %472 = arith.addf %470, %471 : vector<16x128xf32>
    %473 = arith.truncf %441 : vector<16x128xf32> to vector<16x128xbf16>
    %c0_128 = arith.constant 0 : index
    %c0_129 = arith.constant 0 : index
    %474 = vector.load %arg3[%c0_128, %c0_129] : memref<128x384xbf16, #tpu.memory_space<vmem>>, vector<128x384xbf16>
    %cst_130 = arith.constant dense<0.000000e+00> : vector<16x384xf32>
    %475 = tpu.matmul %473, %474, %cst_130 {dimension_numbers = #tpu.dot_dimension_numbers<[1], [0], [0], [1], [0, 0, 1, 1], [], []>} : vector<16x128xbf16>, vector<128x384xbf16>, vector<16x384xf32> -> vector<16x384xf32>
    %476 = arith.truncf %472 : vector<16x128xf32> to vector<16x128xbf16>
    %c0_131 = arith.constant 0 : index
    %c0_132 = arith.constant 0 : index
    %477 = vector.load %arg7[%c0_131, %c0_132] : memref<128x384xbf16, #tpu.memory_space<vmem>>, vector<128x384xbf16>
    %cst_133 = arith.constant dense<0.000000e+00> : vector<16x384xf32>
    %478 = tpu.matmul %476, %477, %cst_133 {dimension_numbers = #tpu.dot_dimension_numbers<[1], [0], [0], [1], [0, 0, 1, 1], [], []>} : vector<16x128xbf16>, vector<128x384xbf16>, vector<16x384xf32> -> vector<16x384xf32>
    %c112 = arith.constant 112 : index
    %c0_134 = arith.constant 0 : index
    %479 = vector.load %arg10[%c112, %c0_134] : memref<128x384xf32, #tpu.memory_space<vmem>>, vector<16x384xf32>
    %480 = vector.extract_strided_slice %479 {offsets = [0, 0], sizes = [16, 128], strides = [1, 1]} : vector<16x384xf32> to vector<16x128xf32>
    %481 = vector.extract_strided_slice %475 {offsets = [0, 0], sizes = [16, 128], strides = [1, 1]} : vector<16x384xf32> to vector<16x128xf32>
    %482 = arith.addf %480, %481 : vector<16x128xf32>
    %483 = arith.negf %482 : vector<16x128xf32>
    %484 = math.exp %483 : vector<16x128xf32>
    %cst_135 = arith.constant 1.000000e+00 : f32
    %485 = vector.broadcast %cst_135 : f32 to vector<16x128xf32>
    %486 = arith.addf %485, %484 : vector<16x128xf32>
    %487 = arith.divf %485, %486 : vector<16x128xf32>
    %488 = vector.extract_strided_slice %479 {offsets = [0, 128], sizes = [16, 128], strides = [1, 1]} : vector<16x384xf32> to vector<16x128xf32>
    %489 = vector.extract_strided_slice %475 {offsets = [0, 128], sizes = [16, 128], strides = [1, 1]} : vector<16x384xf32> to vector<16x128xf32>
    %490 = arith.addf %488, %489 : vector<16x128xf32>
    %491 = arith.negf %490 : vector<16x128xf32>
    %492 = math.exp %491 : vector<16x128xf32>
    %cst_136 = arith.constant 1.000000e+00 : f32
    %493 = vector.broadcast %cst_136 : f32 to vector<16x128xf32>
    %494 = arith.addf %493, %492 : vector<16x128xf32>
    %495 = arith.divf %493, %494 : vector<16x128xf32>
    %496 = vector.extract_strided_slice %479 {offsets = [0, 256], sizes = [16, 128], strides = [1, 1]} : vector<16x384xf32> to vector<16x128xf32>
    %497 = vector.extract_strided_slice %475 {offsets = [0, 256], sizes = [16, 128], strides = [1, 1]} : vector<16x384xf32> to vector<16x128xf32>
    %498 = arith.addf %497, %9 : vector<16x128xf32>
    %499 = arith.mulf %487, %498 : vector<16x128xf32>
    %500 = arith.addf %496, %499 : vector<16x128xf32>
    %501 = math.tanh %500 : vector<16x128xf32>
    %cst_137 = arith.constant 1.000000e+00 : f32
    %502 = vector.broadcast %cst_137 : f32 to vector<16x128xf32>
    %503 = arith.subf %502, %495 : vector<16x128xf32>
    %504 = arith.mulf %503, %501 : vector<16x128xf32>
    %505 = arith.mulf %495, %441 : vector<16x128xf32>
    %506 = arith.addf %504, %505 : vector<16x128xf32>
    %507 = arith.truncf %506 : vector<16x128xf32> to vector<16x128xbf16>
    %c0_138 = arith.constant 0 : index
    %c0_139 = arith.constant 0 : index
    %508 = vector.load %arg5[%c0_138, %c0_139] : memref<128x384xbf16, #tpu.memory_space<vmem>>, vector<128x384xbf16>
    %cst_140 = arith.constant dense<0.000000e+00> : vector<16x384xf32>
    %509 = tpu.matmul %507, %508, %cst_140 {dimension_numbers = #tpu.dot_dimension_numbers<[1], [0], [0], [1], [0, 0, 1, 1], [], []>} : vector<16x128xbf16>, vector<128x384xbf16>, vector<16x384xf32> -> vector<16x384xf32>
    %510 = arith.addf %509, %12 : vector<16x384xf32>
    %511 = vector.extract_strided_slice %510 {offsets = [0, 0], sizes = [16, 128], strides = [1, 1]} : vector<16x384xf32> to vector<16x128xf32>
    %512 = vector.extract_strided_slice %478 {offsets = [0, 0], sizes = [16, 128], strides = [1, 1]} : vector<16x384xf32> to vector<16x128xf32>
    %513 = arith.addf %511, %512 : vector<16x128xf32>
    %514 = arith.negf %513 : vector<16x128xf32>
    %515 = math.exp %514 : vector<16x128xf32>
    %cst_141 = arith.constant 1.000000e+00 : f32
    %516 = vector.broadcast %cst_141 : f32 to vector<16x128xf32>
    %517 = arith.addf %516, %515 : vector<16x128xf32>
    %518 = arith.divf %516, %517 : vector<16x128xf32>
    %519 = vector.extract_strided_slice %510 {offsets = [0, 128], sizes = [16, 128], strides = [1, 1]} : vector<16x384xf32> to vector<16x128xf32>
    %520 = vector.extract_strided_slice %478 {offsets = [0, 128], sizes = [16, 128], strides = [1, 1]} : vector<16x384xf32> to vector<16x128xf32>
    %521 = arith.addf %519, %520 : vector<16x128xf32>
    %522 = arith.negf %521 : vector<16x128xf32>
    %523 = math.exp %522 : vector<16x128xf32>
    %cst_142 = arith.constant 1.000000e+00 : f32
    %524 = vector.broadcast %cst_142 : f32 to vector<16x128xf32>
    %525 = arith.addf %524, %523 : vector<16x128xf32>
    %526 = arith.divf %524, %525 : vector<16x128xf32>
    %527 = vector.extract_strided_slice %510 {offsets = [0, 256], sizes = [16, 128], strides = [1, 1]} : vector<16x384xf32> to vector<16x128xf32>
    %528 = vector.extract_strided_slice %478 {offsets = [0, 256], sizes = [16, 128], strides = [1, 1]} : vector<16x384xf32> to vector<16x128xf32>
    %529 = arith.addf %528, %15 : vector<16x128xf32>
    %530 = arith.mulf %518, %529 : vector<16x128xf32>
    %531 = arith.addf %527, %530 : vector<16x128xf32>
    %532 = math.tanh %531 : vector<16x128xf32>
    %cst_143 = arith.constant 1.000000e+00 : f32
    %533 = vector.broadcast %cst_143 : f32 to vector<16x128xf32>
    %534 = arith.subf %533, %526 : vector<16x128xf32>
    %535 = arith.mulf %534, %532 : vector<16x128xf32>
    %536 = arith.mulf %526, %472 : vector<16x128xf32>
    %537 = arith.addf %535, %536 : vector<16x128xf32>
    %c0_144 = arith.constant 0 : index
    %c0_145 = arith.constant 0 : index
    %538 = vector.load %arg9[%c0_144, %c0_145] : memref<16x128xf32, #tpu.memory_space<vmem>>, vector<16x128xf32>
    tpu.vector_store %arg9[%c0_144, %c0_145], %537 {strides = array<i32>} : memref<16x128xf32, #tpu.memory_space<vmem>>, vector<16x128xf32>,
    return
  }
}

</mosaic_0001>

<llo_original>
// kernel: gru_forward.1
$region0: #{gru_forward.1}
  #allocation0 [shape = 'u32[]', space=smem, size = 0x4, offset = 0x4, fixed_abs, tag = 'smem constant byte address 0x4 - core index']
  #allocation1 [shape = 'u32[144,128]{1,0:T(1,128)}', space=vmem, size = 0x12000, scoped, tag = 'internal scratch']
  #allocation2 [shape = 'f32[128,384]{1,0:T(8,128)}', space=vmem, size = 0x30000, scoped, tag = 'scratch operand']
  %s0 = inlined_call_operand.vmem [shape: bf16[128,128], index: 0, kind: input, shape index: {}]
  %s1 = inlined_call_operand.hbm [shape: bf16[128,384], index: 1, kind: input, shape index: {}]
  %s2 = inlined_call_operand.vmem [shape: f32[1,384], index: 2, kind: input, shape index: {}]
  %s3 = inlined_call_operand.hbm [shape: bf16[128,384], index: 3, kind: input, shape index: {}]
  %s4 = inlined_call_operand.vmem [shape: f32[1,128], index: 4, kind: input, shape index: {}]
  %s5 = inlined_call_operand.hbm [shape: bf16[128,384], index: 5, kind: input, shape index: {}]
  %s6 = inlined_call_operand.vmem [shape: f32[1,384], index: 6, kind: input, shape index: {}]
  %s7 = inlined_call_operand.hbm [shape: bf16[128,384], index: 7, kind: input, shape index: {}]
  %s8 = inlined_call_operand.vmem [shape: f32[1,128], index: 8, kind: input, shape index: {}]
  %s9 = inlined_call_operand.vmem [shape: f32[16,128], index: 9, kind: output, shape index: {}]
  %s10 = sld [smem:[#allocation0]]
  $region62: #{gru_forward.1} parent=0
    _
  %s12 = ssub.s32 1, %s10
  %s13 = scalar_select 0, %s12, %s10
  $region1: #{gru_forward.1} parent=0
    #allocation3 [shape = 'u8[98304]{0}', space=vmem, size = 0x18000, scoped, tag = 'input window, operand 1, single buffered']
    #allocation4 [shape = 's32[1]{0}', space=sflag, size = 0x4, scoped, tag = 'scoped memory for gru_forward.1']
    #allocation5 [shape = 'u8[98304]{0}', space=vmem, size = 0x18000, scoped, tag = 'input window, operand 3, single buffered']
    #allocation6 [shape = 's32[1]{0}', space=sflag, size = 0x4, scoped, tag = 'scoped memory for gru_forward.1']
    #allocation7 [shape = 'u8[98304]{0}', space=vmem, size = 0x18000, scoped, tag = 'input window, operand 5, single buffered']
    #allocation8 [shape = 'u8[98304]{0}', space=vmem, size = 0x18000, scoped, tag = 'input window, operand 7, single buffered']
    #allocation9 [shape = 's32[1]{0}', space=sflag, size = 0x4, scoped, tag = 'scoped memory for gru_forward.1']
    %14 = vsyncpa [#allocation4], 0
    %15 = vsyncpa [#allocation6], 0
    %16 = vsyncpa [#allocation9], 0
    // Predicated region
    $region2: #{gru_forward.1} parent=1 // pred_check
      _
    $region3: #{gru_forward.1} parent=1 // pred_check_branch
      %18 = sbr.rel (0) target = $region5
    $region4: #{gru_forward.1} parent=1 // pred_region
      _
    $region5: #{gru_forward.1} parent=1 // pred_fallthru
      _
    // Predicated region
    $region6: #{gru_forward.1} parent=1 // pred_check
      _
    $region7: #{gru_forward.1} parent=1 // pred_check_branch
      %20 = sbr.rel (0) target = $region9
    $region8: #{gru_forward.1} parent=1 // pred_region
      %s22 = ssub.s32 3072, 3072
      %23 = vsyncadd [#allocation4], %s22
      %s24 = sshll.u32 [#allocation3], 4
      %s25 = int_to_ptr.vmem [resolvable:$true] %s24
      %30 = dma.hbm_to_vmem [thread:$0]  %s1, 3072, %s25, [#allocation4], 192, 192, 12
    $region9: #{gru_forward.1} parent=1 // pred_fallthru
      _
    // Predicated region
    $region10: #{gru_forward.1} parent=1 // pred_check
      _
    $region11: #{gru_forward.1} parent=1 // pred_check_branch
      %32 = sbr.rel (0) target = $region13
    $region12: #{gru_forward.1} parent=1 // pred_region
      _
    $region13: #{gru_forward.1} parent=1 // pred_fallthru
      _
    // Predicated region
    $region14: #{gru_forward.1} parent=1 // pred_check
      _
    $region15: #{gru_forward.1} parent=1 // pred_check_branch
      %34 = sbr.rel (0) target = $region17
    $region16: #{gru_forward.1} parent=1 // pred_region
      %s36 = ssub.s32 3072, 3072
      %37 = vsyncadd [#allocation6], %s36
      %s38 = sshll.u32 [#allocation5], 4
      %s39 = int_to_ptr.vmem [resolvable:$true] %s38
      %44 = dma.hbm_to_vmem [thread:$0]  %s3, 3072, %s39, [#allocation6], 192, 192, 12
    $region17: #{gru_forward.1} parent=1 // pred_fallthru
      _
    // Predicated region
    $region18: #{gru_forward.1} parent=1 // pred_check
      _
    $region19: #{gru_forward.1} parent=1 // pred_check_branch
      %46 = sbr.rel (0) target = $region21
    $region20: #{gru_forward.1} parent=1 // pred_region
      _
    $region21: #{gru_forward.1} parent=1 // pred_fallthru
      _
    // Predicated region
    $region22: #{gru_forward.1} parent=1 // pred_check
      _
    $region23: #{gru_forward.1} parent=1 // pred_check_branch
      %48 = sbr.rel (0) target = $region25
    $region24: #{gru_forward.1} parent=1 // pred_region
      %s50 = ssub.s32 3072, 3072
      %51 = vsyncadd [#allocation6], %s50
      %s52 = sshll.u32 [#allocation7], 4
      %s53 = int_to_ptr.vmem [resolvable:$true] %s52
      %58 = dma.hbm_to_vmem [thread:$0]  %s5, 3072, %s53, [#allocation6], 192, 192, 12
    $region25: #{gru_forward.1} parent=1 // pred_fallthru
      _
    // Predicated region
    $region26: #{gru_forward.1} parent=1 // pred_check
      _
    $region27: #{gru_forward.1} parent=1 // pred_check_branch
      %60 = sbr.rel (0) target = $region29
    $region28: #{gru_forward.1} parent=1 // pred_region
      _
    $region29: #{gru_forward.1} parent=1 // pred_fallthru
      _
    // Predicated region
    $region30: #{gru_forward.1} parent=1 // pred_check
      _
    $region31: #{gru_forward.1} parent=1 // pred_check_branch
      %62 = sbr.rel (0) target = $region33
    $region32: #{gru_forward.1} parent=1 // pred_region
      %s64 = ssub.s32 3072, 3072
      %65 = vsyncadd [#allocation9], %s64
      %s66 = sshll.u32 [#allocation8], 4
      %s67 = int_to_ptr.vmem [resolvable:$true] %s66
      %72 = dma.hbm_to_vmem [thread:$0]  %s7, 3072, %s67, [#allocation9], 192, 192, 12
    $region33: #{gru_forward.1} parent=1 // pred_fallthru
      _
    // Predicated region
    $region34: #{gru_forward.1} parent=1 // pred_check
      _
    $region35: #{gru_forward.1} parent=1 // pred_check_branch
      %74 = sbr.rel (0) target = $region37
    $region36: #{gru_forward.1} parent=1 // pred_region
      _
    $region37: #{gru_forward.1} parent=1 // pred_fallthru
      _
    // Predicated region
    $region38: #{gru_forward.1} parent=1 // pred_check
      _
    $region39: #{gru_forward.1} parent=1 // pred_check_branch
      %76 = sbr.rel (0) target = $region41
    $region40: #{gru_forward.1} parent=1 // pred_region
      %77 = dma.done [#allocation4], 3072
    $region41: #{gru_forward.1} parent=1 // pred_fallthru
      _
    // Predicated region
    $region42: #{gru_forward.1} parent=1 // pred_check
      _
    $region43: #{gru_forward.1} parent=1 // pred_check_branch
      %79 = sbr.rel (0) target = $region45
    $region44: #{gru_forward.1} parent=1 // pred_region
      %80 = dma.done [#allocation6], 3072
    $region45: #{gru_forward.1} parent=1 // pred_fallthru
      _
    // Predicated region
    $region46: #{gru_forward.1} parent=1 // pred_check
      _
    $region47: #{gru_forward.1} parent=1 // pred_check_branch
      %82 = sbr.rel (0) target = $region49
    $region48: #{gru_forward.1} parent=1 // pred_region
      %83 = dma.done [#allocation6], 3072
    $region49: #{gru_forward.1} parent=1 // pred_fallthru
      _
    // Predicated region
    $region50: #{gru_forward.1} parent=1 // pred_check
      _
    $region51: #{gru_forward.1} parent=1 // pred_check_branch
      %85 = sbr.rel (0) target = $region53
    $region52: #{gru_forward.1} parent=1 // pred_region
      %86 = dma.done [#allocation9], 3072
    $region53: #{gru_forward.1} parent=1 // pred_fallthru
      _
    %v88 = vld [vmem:[%s0] sm:$0xf]
    %v89 = vld [vmem:[%s0 + $0x4] sm:$0xf]
    %v90 = vld [vmem:[%s0 + $0x8] sm:$0xf]
    %v91 = vld [vmem:[%s0 + $0xc] sm:$0xf]
    %v92 = vld [vmem:[%s0 + $0x10] sm:$0xf]
    %v93 = vld [vmem:[%s0 + $0x14] sm:$0xf]
    %v94 = vld [vmem:[%s0 + $0x18] sm:$0xf]
    %v95 = vld [vmem:[%s0 + $0x1c] sm:$0xf]
    %v96 = vld [vmem:[%s0 + $0x20] sm:$0xf]
    %v97 = vld [vmem:[%s0 + $0x24] sm:$0xf]
    %v98 = vld [vmem:[%s0 + $0x28] sm:$0xf]
    %v99 = vld [vmem:[%s0 + $0x2c] sm:$0xf]
    %v100 = vld [vmem:[%s0 + $0x30] sm:$0xf]
    %v101 = vld [vmem:[%s0 + $0x34] sm:$0xf]
    %v102 = vld [vmem:[%s0 + $0x38] sm:$0xf]
    %v103 = vld [vmem:[%s0 + $0x3c] sm:$0xf]
    %v104 = vld [vmem:[#allocation3] sm:$0xff]
    %v105 = vld [vmem:[#allocation3 + $0x8] sm:$0xf]
    %v106 = vld [vmem:[#allocation3 + $0xc] sm:$0xff]
    %v107 = vld [vmem:[#allocation3 + $0x14] sm:$0xf]
    %v108 = vld [vmem:[#allocation3 + $0x18] sm:$0xff]
    %v109 = vld [vmem:[#allocation3 + $0x20] sm:$0xf]
    %v110 = vld [vmem:[#allocation3 + $0x24] sm:$0xff]
    %v111 = vld [vmem:[#allocation3 + $0x2c] sm:$0xf]
    %v112 = vld [vmem:[#allocation3 + $0x30] sm:$0xff]
    %v113 = vld [vmem:[#allocation3 + $0x38] sm:$0xf]
    %v114 = vld [vmem:[#allocation3 + $0x3c] sm:$0xff]
    %v115 = vld [vmem:[#allocation3 + $0x44] sm:$0xf]
    %v116 = vld [vmem:[#allocation3 + $0x48] sm:$0xff]
    %v117 = vld [vmem:[#allocation3 + $0x50] sm:$0xf]
    %v118 = vld [vmem:[#allocation3 + $0x54] sm:$0xff]
    %v119 = vld [vmem:[#allocation3 + $0x5c] sm:$0xf]
    %v120 = vld [vmem:[#allocation3 + $0x60] sm:$0xff]
    %v121 = vld [vmem:[#allocation3 + $0x68] sm:$0xf]
    %v122 = vld [vmem:[#allocation3 + $0x6c] sm:$0xff]
    %v123 = vld [vmem:[#allocation3 + $0x74] sm:$0xf]
    %v124 = vld [vmem:[#allocation3 + $0x78] sm:$0xff]
    %v125 = vld [vmem:[#allocation3 + $0x80] sm:$0xf]
    %v126 = vld [vmem:[#allocation3 + $0x84] sm:$0xff]
    %v127 = vld [vmem:[#allocation3 + $0x8c] sm:$0xf]
    %v128 = vld [vmem:[#allocation3 + $0x90] sm:$0xff]
    %v129 = vld [vmem:[#allocation3 + $0x98] sm:$0xf]
    %v130 = vld [vmem:[#allocation3 + $0x9c] sm:$0xff]
    %v131 = vld [vmem:[#allocation3 + $0xa4] sm:$0xf]
    %v132 = vld [vmem:[#allocation3 + $0xa8] sm:$0xff]
    %v133 = vld [vmem:[#allocation3 + $0xb0] sm:$0xf]
    %v134 = vld [vmem:[#allocation3 + $0xb4] sm:$0xff]
    %v135 = vld [vmem:[#allocation3 + $0xbc] sm:$0xf]
    %v136 = vld [vmem:[%s2] sm:$0x7]
    %v138 = vlaneseq
    %v139 = vshrl.u32 %v138, 7
    %v140 = vsub.s32 0, %v139
    %v141 = vrot.slane %v136, %v140
    %v142 = vlaneseq
    %v143 = vshrl.u32 %v142, 7
    %v144 = vsub.s32 1, %v143
    %v145 = vrot.slane %v136, %v144
    %v146 = vlaneseq
    %v147 = vshrl.u32 %v146, 7
    %v148 = vsub.s32 2, %v147
    %v149 = vrot.slane %v136, %v148
    %v169 = vunpack.c.l.b16 %v88
    %v170 = vunpack.c.l.b16 %v89
    %v171 = vunpack.c.l.b16 %v90
    %v172 = vunpack.c.l.b16 %v91
    %v173 = vunpack.c.l.b16 %v92
    %v174 = vunpack.c.l.b16 %v93
    %v175 = vunpack.c.l.b16 %v94
    %v176 = vunpack.c.l.b16 %v95
    %v177 = vunpack.c.l.b16 %v96
    %v178 = vunpack.c.l.b16 %v97
    %v179 = vunpack.c.l.b16 %v98
    %v180 = vunpack.c.l.b16 %v99
    %v181 = vunpack.c.l.b16 %v100
    %v182 = vunpack.c.l.b16 %v101
    %v183 = vunpack.c.l.b16 %v102
    %v184 = vunpack.c.l.b16 %v103
    %v185 = vpack.c.b16 %v170, %v169
    %v186 = vpack.c.b16 %v172, %v171
    %v187 = vpack.c.b16 %v174, %v173
    %v188 = vpack.c.b16 %v176, %v175
    %v189 = vpack.c.b16 %v178, %v177
    %v190 = vpack.c.b16 %v180, %v179
    %v191 = vpack.c.b16 %v182, %v181
    %v192 = vpack.c.b16 %v184, %v183
    %v233 = vunpack.c.l.b16 %v104
    %v234 = vunpack.c.h.b16 %v104
    %v235 = vunpack.c.l.b16 %v105
    %v236 = vunpack.c.l.b16 %v106
    %v237 = vunpack.c.h.b16 %v106
    %v238 = vunpack.c.l.b16 %v107
    %v239 = vunpack.c.l.b16 %v108
    %v240 = vunpack.c.h.b16 %v108
    %v241 = vunpack.c.l.b16 %v109
    %v242 = vunpack.c.l.b16 %v110
    %v243 = vunpack.c.h.b16 %v110
    %v244 = vunpack.c.l.b16 %v111
    %v245 = vunpack.c.l.b16 %v112
    %v246 = vunpack.c.h.b16 %v112
    %v247 = vunpack.c.l.b16 %v113
    %v248 = vunpack.c.l.b16 %v114
    %v249 = vunpack.c.h.b16 %v114
    %v250 = vunpack.c.l.b16 %v115
    %v251 = vunpack.c.l.b16 %v116
    %v252 = vunpack.c.h.b16 %v116
    %v253 = vunpack.c.l.b16 %v117
    %v254 = vunpack.c.l.b16 %v118
    %v255 = vunpack.c.h.b16 %v118
    %v256 = vunpack.c.l.b16 %v119
    %v257 = vunpack.c.l.b16 %v120
    %v258 = vunpack.c.h.b16 %v120
    %v259 = vunpack.c.l.b16 %v121
    %v260 = vunpack.c.l.b16 %v122
    %v261 = vunpack.c.h.b16 %v122
    %v262 = vunpack.c.l.b16 %v123
    %v263 = vunpack.c.l.b16 %v124
    %v264 = vunpack.c.h.b16 %v124
    %v265 = vunpack.c.l.b16 %v125
    %v266 = vunpack.c.l.b16 %v126
    %v267 = vunpack.c.h.b16 %v126
    %v268 = vunpack.c.l.b16 %v127
    %v269 = vunpack.c.l.b16 %v128
    %v270 = vunpack.c.h.b16 %v128
    %v271 = vunpack.c.l.b16 %v129
    %v272 = vunpack.c.l.b16 %v130
    %v273 = vunpack.c.h.b16 %v130
    %v274 = vunpack.c.l.b16 %v131
    %v275 = vunpack.c.l.b16 %v132
    %v276 = vunpack.c.h.b16 %v132
    %v277 = vunpack.c.l.b16 %v133
    %v278 = vunpack.c.l.b16 %v134
    %v279 = vunpack.c.h.b16 %v134
    %v280 = vunpack.c.l.b16 %v135
    %v281 = vpack.c.b16 %v236, %v233
    %v282 = vpack.c.b16 %v237, %v234
    %v283 = vpack.c.b16 %v238, %v235
    %v284 = vpack.c.b16 %v242, %v239
    %v285 = vpack.c.b16 %v243, %v240
    %v286 = vpack.c.b16 %v244, %v241
    %v287 = vpack.c.b16 %v248, %v245
    %v288 = vpack.c.b16 %v249, %v246
    %v289 = vpack.c.b16 %v250, %v247
    %v290 = vpack.c.b16 %v254, %v251
    %v291 = vpack.c.b16 %v255, %v252
    %v292 = vpack.c.b16 %v256, %v253
    %v293 = vpack.c.b16 %v260, %v257
    %v294 = vpack.c.b16 %v261, %v258
    %v295 = vpack.c.b16 %v262, %v259
    %v296 = vpack.c.b16 %v266, %v263
    %v297 = vpack.c.b16 %v267, %v264
    %v298 = vpack.c.b16 %v268, %v265
    %v299 = vpack.c.b16 %v272, %v269
    %v300 = vpack.c.b16 %v273, %v270
    %v301 = vpack.c.b16 %v274, %v271
    %v302 = vpack.c.b16 %v278, %v275
    %v303 = vpack.c.b16 %v279, %v276
    %v304 = vpack.c.b16 %v280, %v277
    %329 = vmatprep.subr.bf16.mxu0 %v282
    %330 = vmatpush1.bf16.msra.mxu0 %v281
    %331 = vmatprep.subr.bf16.mxu0 %v285
    %332 = vmatpush1.bf16.msra.mxu0 %v284
    %333 = vmatprep.subr.bf16.mxu0 %v288
    %334 = vmatpush1.bf16.msra.mxu0 %v287
    %335 = vmatprep.subr.bf16.mxu0 %v291
    %336 = vmatpush1.bf16.msra.mxu0 %v290
    %337 = vmatprep.subr.bf16.mxu0 %v294
    %338 = vmatpush1.bf16.msra.mxu0 %v293
    %339 = vmatprep.subr.bf16.mxu0 %v297
    %340 = vmatpush1.bf16.msra.mxu0 %v296
    %341 = vmatprep.subr.bf16.mxu0 %v300
    %342 = vmatpush1.bf16.msra.mxu0 %v299
    %343 = vmatprep.subr.bf16.mxu0 %v303
    %344 = vmatpush1.bf16.msra.mxu0 %v302
    %345 = vmatprep.subr.bf16.mxu0 0
    %346 = vmatpush1.bf16.msra.mxu0 0
    %347 = vmatprep.subr.bf16.mxu0 0
    %348 = vmatpush1.bf16.msra.mxu0 0
    %349 = vmatprep.subr.bf16.mxu0 0
    %350 = vmatpush1.bf16.msra.mxu0 0
    %351 = vmatprep.subr.bf16.mxu0 0
    %352 = vmatpush1.bf16.msra.mxu0 0
    %353 = vmatprep.subr.bf16.mxu0 0
    %354 = vmatpush1.bf16.msra.mxu0 0
    %355 = vmatprep.subr.bf16.mxu0 0
    %356 = vmatpush1.bf16.msra.mxu0 0
    %357 = vmatprep.subr.bf16.mxu0 0
    %358 = vmatpush1.bf16.msra.mxu0 0
    %359 = vmatprep.subr.bf16.mxu0 0
    %360 = vmatpush1.bf16.msra.mxu0 0
    %361 = vmatprep.mubr.bf16.mxu0 0
    %362 = vmatmul.mubr.bf16.gmra.mrb[0].mxu0 %v185
    %v363 = vpop.f32.mrb[0].mxu0
    %v364 = vadd.f32 %v141, %v363
    %v365 = vpop.f32.mrb[0].mxu0
    %v366 = vadd.f32 %v145, %v365
    %v367 = vpop.f32.mrb[0].mxu0
    %v368 = vadd.f32 %v141, %v367
    %v369 = vpop.f32.mrb[0].mxu0
    %v370 = vadd.f32 %v145, %v369
    %371 = vmatprep.mubr.bf16.mxu0 0
    %372 = vmatmul.mubr.bf16.gmra.mrb[0].mxu0 %v186
    %v373 = vpop.f32.mrb[0].mxu0
    %v374 = vadd.f32 %v141, %v373
    %v375 = vpop.f32.mrb[0].mxu0
    %v376 = vadd.f32 %v145, %v375
    %v377 = vpop.f32.mrb[0].mxu0
    %v378 = vadd.f32 %v141, %v377
    %v379 = vpop.f32.mrb[0].mxu0
    %v380 = vadd.f32 %v145, %v379
    %381 = vmatprep.mubr.bf16.mxu0 0
    %382 = vmatmul.mubr.bf16.gmra.mrb[0].mxu0 %v187
    %v383 = vpop.f32.mrb[0].mxu0
    %v384 = vadd.f32 %v141, %v383
    %v385 = vpop.f32.mrb[0].mxu0
    %v386 = vadd.f32 %v145, %v385
    %v387 = vpop.f32.mrb[0].mxu0
    %v388 = vadd.f32 %v141, %v387
    %v389 = vpop.f32.mrb[0].mxu0
    %v390 = vadd.f32 %v145, %v389
    %391 = vmatprep.mubr.bf16.mxu0 0
    %392 = vmatmul.mubr.bf16.gmra.mrb[0].mxu0 %v188
    %v393 = vpop.f32.mrb[0].mxu0
    %v394 = vadd.f32 %v141, %v393
    %v395 = vpop.f32.mrb[0].mxu0
    %v396 = vadd.f32 %v145, %v395
    %v397 = vpop.f32.mrb[0].mxu0
    %v398 = vadd.f32 %v141, %v397
    %v399 = vpop.f32.mrb[0].mxu0
    %v400 = vadd.f32 %v145, %v399
    %401 = vmatprep.mubr.bf16.mxu0 0
    %402 = vmatmul.mubr.bf16.gmra.mrb[0].mxu0 %v189
    %v403 = vpop.f32.mrb[0].mxu0
    %v404 = vadd.f32 %v141, %v403
    %v405 = vpop.f32.mrb[0].mxu0
    %v406 = vadd.f32 %v145, %v405
    %v407 = vpop.f32.mrb[0].mxu0
    %v408 = vadd.f32 %v141, %v407
    %v409 = vpop.f32.mrb[0].mxu0
    %v410 = vadd.f32 %v145, %v409
    %411 = vmatprep.mubr.bf16.mxu0 0
    %412 = vmatmul.mubr.bf16.gmra.mrb[0].mxu0 %v190
    %v413 = vpop.f32.mrb[0].mxu0
    %v414 = vadd.f32 %v141, %v413
    %v415 = vpop.f32.mrb[0].mxu0
    %v416 = vadd.f32 %v145, %v415
    %v417 = vpop.f32.mrb[0].mxu0
    %v418 = vadd.f32 %v141, %v417
    %v419 = vpop.f32.mrb[0].mxu0
    %v420 = vadd.f32 %v145, %v419
    %421 = vmatprep.mubr.bf16.mxu0 0
    %422 = vmatmul.mubr.bf16.gmra.mrb[0].mxu0 %v191
    %v423 = vpop.f32.mrb[0].mxu0
    %v424 = vadd.f32 %v141, %v423
    %v425 = vpop.f32.mrb[0].mxu0
    %v426 = vadd.f32 %v145, %v425
    %v427 = vpop.f32.mrb[0].mxu0
    %v428 = vadd.f32 %v141, %v427
    %v429 = vpop.f32.mrb[0].mxu0
    %v430 = vadd.f32 %v145, %v429
    %431 = vmatprep.mubr.bf16.mxu0 0
    %432 = vmatmul.mubr.bf16.gmra.mrb[0].mxu0 %v192
    %v433 = vpop.f32.mrb[0].mxu0
    %v434 = vadd.f32 %v141, %v433
    %v435 = vpop.f32.mrb[0].mxu0
    %v436 = vadd.f32 %v145, %v435
    %v437 = vpop.f32.mrb[0].mxu0
    %v438 = vadd.f32 %v141, %v437
    %v439 = vpop.f32.mrb[0].mxu0
    %v440 = vadd.f32 %v145, %v439
    %441 = vdwg.mxu0
    %442 = vmatprep.subr.bf16.mxu0 0
    %443 = vmatpush1.bf16.msra.mxu0 %v283
    %444 = vmatprep.subr.bf16.mxu0 0
    %445 = vmatpush1.bf16.msra.mxu0 %v286
    %446 = vmatprep.subr.bf16.mxu0 0
    %447 = vmatpush1.bf16.msra.mxu0 %v289
    %448 = vmatprep.subr.bf16.mxu0 0
    %449 = vmatpush1.bf16.msra.mxu0 %v292
    %450 = vmatprep.subr.bf16.mxu0 0
    %451 = vmatpush1.bf16.msra.mxu0 %v295
    %452 = vmatprep.subr.bf16.mxu0 0
    %453 = vmatpush1.bf16.msra.mxu0 %v298
    %454 = vmatprep.subr.bf16.mxu0 0
    %455 = vmatpush1.bf16.msra.mxu0 %v301
    %456 = vmatprep.subr.bf16.mxu0 0
    %457 = vmatpush1.bf16.msra.mxu0 %v304
    %458 = vmatprep.subr.bf16.mxu0 0
    %459 = vmatpush1.bf16.msra.mxu0 0
    %460 = vmatprep.subr.bf16.mxu0 0
    %461 = vmatpush1.bf16.msra.mxu0 0
    %462 = vmatprep.subr.bf16.mxu0 0
    %463 = vmatpush1.bf16.msra.mxu0 0
    %464 = vmatprep.subr.bf16.mxu0 0
    %465 = vmatpush1.bf16.msra.mxu0 0
    %466 = vmatprep.subr.bf16.mxu0 0
    %467 = vmatpush1.bf16.msra.mxu0 0
    %468 = vmatprep.subr.bf16.mxu0 0
    %469 = vmatpush1.bf16.msra.mxu0 0
    %470 = vmatprep.subr.bf16.mxu0 0
    %471 = vmatpush1.bf16.msra.mxu0 0
    %472 = vmatprep.subr.bf16.mxu0 0
    %473 = vmatpush1.bf16.msra.mxu0 0
    %474 = vmatprep.mubr.bf16.mxu0 0
    %475 = vmatmul.mubr.bf16.gmra.mrb[0].mxu0 %v185
    %v476 = vpop.f32.mrb[0].mxu0
    %v477 = vadd.f32 %v149, %v476
    %v478 = vpop.f32.mrb[0].mxu0
    %v479 = vpop.f32.mrb[0].mxu0
    %v480 = vadd.f32 %v149, %v479
    %v481 = vpop.f32.mrb[0].mxu0
    %482 = vmatprep.mubr.bf16.mxu0 0
    %483 = vmatmul.mubr.bf16.gmra.mrb[0].mxu0 %v186
    %v484 = vpop.f32.mrb[0].mxu0
    %v485 = vadd.f32 %v149, %v484
    %v486 = vpop.f32.mrb[0].mxu0
    %v487 = vpop.f32.mrb[0].mxu0
    %v488 = vadd.f32 %v149, %v487
    %v489 = vpop.f32.mrb[0].mxu0
    %490 = vmatprep.mubr.bf16.mxu0 0
    %491 = vmatmul.mubr.bf16.gmra.mrb[0].mxu0 %v187
    %v492 = vpop.f32.mrb[0].mxu0
    %v493 = vadd.f32 %v149, %v492
    %v494 = vpop.f32.mrb[0].mxu0
    %v495 = vpop.f32.mrb[0].mxu0
    %v496 = vadd.f32 %v149, %v495
    %v497 = vpop.f32.mrb[0].mxu0
    %498 = vmatprep.mubr.bf16.mxu0 0
    %499 = vmatmul.mubr.bf16.gmra.mrb[0].mxu0 %v188
    %v500 = vpop.f32.mrb[0].mxu0
    %v501 = vadd.f32 %v149, %v500
    %v502 = vpop.f32.mrb[0].mxu0
    %v503 = vpop.f32.mrb[0].mxu0
    %v504 = vadd.f32 %v149, %v503
    %v505 = vpop.f32.mrb[0].mxu0
    %506 = vmatprep.mubr.bf16.mxu0 0
    %507 = vmatmul.mubr.bf16.gmra.mrb[0].mxu0 %v189
    %v508 = vpop.f32.mrb[0].mxu0
    %v509 = vadd.f32 %v149, %v508
    %v510 = vpop.f32.mrb[0].mxu0
    %v511 = vpop.f32.mrb[0].mxu0
    %v512 = vadd.f32 %v149, %v511
    %v513 = vpop.f32.mrb[0].mxu0
    %514 = vmatprep.mubr.bf16.mxu0 0
    %515 = vmatmul.mubr.bf16.gmra.mrb[0].mxu0 %v190
    %v516 = vpop.f32.mrb[0].mxu0
    %v517 = vadd.f32 %v149, %v516
    %v518 = vpop.f32.mrb[0].mxu0
    %v519 = vpop.f32.mrb[0].mxu0
    %v520 = vadd.f32 %v149, %v519
    %v521 = vpop.f32.mrb[0].mxu0
    %522 = vmatprep.mubr.bf16.mxu0 0
    %523 = vmatmul.mubr.bf16.gmra.mrb[0].mxu0 %v191
    %v524 = vpop.f32.mrb[0].mxu0
    %v525 = vadd.f32 %v149, %v524
    %v526 = vpop.f32.mrb[0].mxu0
    %v527 = vpop.f32.mrb[0].mxu0
    %v528 = vadd.f32 %v149, %v527
    %v529 = vpop.f32.mrb[0].mxu0
    %530 = vmatprep.mubr.bf16.mxu0 0
    %531 = vmatmul.mubr.bf16.gmra.mrb[0].mxu0 %v192
    %v532 = vpop.f32.mrb[0].mxu0
    %v533 = vadd.f32 %v149, %v532
    %v534 = vpop.f32.mrb[0].mxu0
    %v535 = vpop.f32.mrb[0].mxu0
    %v536 = vadd.f32 %v149, %v535
    %v537 = vpop.f32.mrb[0].mxu0
    %538 = vdwg.mxu0
    %539 = vst [vmem:[#allocation2] sm:$0xff] %v364
    %540 = vst [vmem:[#allocation2 + $0x8] sm:$0xff] %v366
    %541 = vst [vmem:[#allocation2 + $0x10] sm:$0xff] %v477
    %542 = vst [vmem:[#allocation2 + $0x18] sm:$0xff] %v368
    %543 = vst [vmem:[#allocation2 + $0x20] sm:$0xff] %v370
    %544 = vst [vmem:[#allocation2 + $0x28] sm:$0xff] %v480
    %545 = vst [vmem:[#allocation2 + $0x30] sm:$0xff] %v374
    %546 = vst [vmem:[#allocation2 + $0x38] sm:$0xff] %v376
    %547 = vst [vmem:[#allocation2 + $0x40] sm:$0xff] %v485
    %548 = vst [vmem:[#allocation2 + $0x48] sm:$0xff] %v378
    %549 = vst [vmem:[#allocation2 + $0x50] sm:$0xff] %v380
    %550 = vst [vmem:[#allocation2 + $0x58] sm:$0xff] %v488
    %551 = vst [vmem:[#allocation2 + $0x60] sm:$0xff] %v384
    %552 = vst [vmem:[#allocation2 + $0x68] sm:$0xff] %v386
    %553 = vst [vmem:[#allocation2 + $0x70] sm:$0xff] %v493
    %554 = vst [vmem:[#allocation2 + $0x78] sm:$0xff] %v388
    %555 = vst [vmem:[#allocation2 + $0x80] sm:$0xff] %v390
    %556 = vst [vmem:[#allocation2 + $0x88] sm:$0xff] %v496
    %557 = vst [vmem:[#allocation2 + $0x90] sm:$0xff] %v394
    %558 = vst [vmem:[#allocation2 + $0x98] sm:$0xff] %v396
    %559 = vst [vmem:[#allocation2 + $0xa0] sm:$0xff] %v501
    %560 = vst [vmem:[#allocation2 + $0xa8] sm:$0xff] %v398
    %561 = vst [vmem:[#allocation2 + $0xb0] sm:$0xff] %v400
    %562 = vst [vmem:[#allocation2 + $0xb8] sm:$0xff] %v504
    %563 = vst [vmem:[#allocation2 + $0xc0] sm:$0xff] %v404
    %564 = vst [vmem:[#allocation2 + $0xc8] sm:$0xff] %v406
    %565 = vst [vmem:[#allocation2 + $0xd0] sm:$0xff] %v509
    %566 = vst [vmem:[#allocation2 + $0xd8] sm:$0xff] %v408
    %567 = vst [vmem:[#allocation2 + $0xe0] sm:$0xff] %v410
    %568 = vst [vmem:[#allocation2 + $0xe8] sm:$0xff] %v512
    %569 = vst [vmem:[#allocation2 + $0xf0] sm:$0xff] %v414
    %570 = vst [vmem:[#allocation2 + $0xf8] sm:$0xff] %v416
    %571 = vst [vmem:[#allocation2 + $0x100] sm:$0xff] %v517
    %572 = vst [vmem:[#allocation2 + $0x108] sm:$0xff] %v418
    %573 = vst [vmem:[#allocation2 + $0x110] sm:$0xff] %v420
    %574 = vst [vmem:[#allocation2 + $0x118] sm:$0xff] %v520
    %575 = vst [vmem:[#allocation2 + $0x120] sm:$0xff] %v424
    %576 = vst [vmem:[#allocation2 + $0x128] sm:$0xff] %v426
    %577 = vst [vmem:[#allocation2 + $0x130] sm:$0xff] %v525
    %578 = vst [vmem:[#allocation2 + $0x138] sm:$0xff] %v428
    %579 = vst [vmem:[#allocation2 + $0x140] sm:$0xff] %v430
    %580 = vst [vmem:[#allocation2 + $0x148] sm:$0xff] %v528
    %581 = vst [vmem:[#allocation2 + $0x150] sm:$0xff] %v434
    %582 = vst [vmem:[#allocation2 + $0x158] sm:$0xff] %v436
    %583 = vst [vmem:[#allocation2 + $0x160] sm:$0xff] %v533
    %584 = vst [vmem:[#allocation2 + $0x168] sm:$0xff] %v438
    %585 = vst [vmem:[#allocation2 + $0x170] sm:$0xff] %v440
    %586 = vst [vmem:[#allocation2 + $0x178] sm:$0xff] %v536
    %v587 = vld [vmem:[%s4] sm:$0x1]
    %v589 = vlaneseq
    %v590 = vshrl.u32 %v589, 7
    %v591 = vsub.s32 0, %v590
    %v592 = vrot.slane %v587, %v591
    %v594 = vld [vmem:[%s6] sm:$0x7]
    %v596 = vlaneseq
    %v597 = vshrl.u32 %v596, 7
    %v598 = vsub.s32 0, %v597
    %v599 = vrot.slane %v594, %v598
    %v600 = vlaneseq
    %v601 = vshrl.u32 %v600, 7
    %v602 = vsub.s32 1, %v601
    %v603 = vrot.slane %v594, %v602
    %v604 = vlaneseq
    %v605 = vshrl.u32 %v604, 7
    %v606 = vsub.s32 2, %v605
    %v607 = vrot.slane %v594, %v606
    %v611 = vld [vmem:[%s8] sm:$0x1]
    %v613 = vlaneseq
    %v614 = vshrl.u32 %v613, 7
    %v615 = vsub.s32 0, %v614
    %v616 = vrot.slane %v611, %v615
    %v618 = vld [vmem:[#allocation5] sm:$0xff]
    %v619 = vld [vmem:[#allocation5 + $0x8] sm:$0xf]
    %v620 = vld [vmem:[#allocation5 + $0xc] sm:$0xff]
    %v621 = vld [vmem:[#allocation5 + $0x14] sm:$0xf]
    %v622 = vld [vmem:[#allocation5 + $0x18] sm:$0xff]
    %v623 = vld [vmem:[#allocation5 + $0x20] sm:$0xf]
    %v624 = vld [vmem:[#allocation5 + $0x24] sm:$0xff]
    %v625 = vld [vmem:[#allocation5 + $0x2c] sm:$0xf]
    %v626 = vld [vmem:[#allocation5 + $0x30] sm:$0xff]
    %v627 = vld [vmem:[#allocation5 + $0x38] sm:$0xf]
    %v628 = vld [vmem:[#allocation5 + $0x3c] sm:$0xff]
    %v629 = vld [vmem:[#allocation5 + $0x44] sm:$0xf]
    %v630 = vld [vmem:[#allocation5 + $0x48] sm:$0xff]
    %v631 = vld [vmem:[#allocation5 + $0x50] sm:$0xf]
    %v632 = vld [vmem:[#allocation5 + $0x54] sm:$0xff]
    %v633 = vld [vmem:[#allocation5 + $0x5c] sm:$0xf]
    %v634 = vld [vmem:[#allocation5 + $0x60] sm:$0xff]
    %v635 = vld [vmem:[#allocation5 + $0x68] sm:$0xf]
    %v636 = vld [vmem:[#allocation5 + $0x6c] sm:$0xff]
    %v637 = vld [vmem:[#allocation5 + $0x74] sm:$0xf]
    %v638 = vld [vmem:[#allocation5 + $0x78] sm:$0xff]
    %v639 = vld [vmem:[#allocation5 + $0x80] sm:$0xf]
    %v640 = vld [vmem:[#allocation5 + $0x84] sm:$0xff]
    %v641 = vld [vmem:[#allocation5 + $0x8c] sm:$0xf]
    %v642 = vld [vmem:[#allocation5 + $0x90] sm:$0xff]
    %v643 = vld [vmem:[#allocation5 + $0x98] sm:$0xf]
    %v644 = vld [vmem:[#allocation5 + $0x9c] sm:$0xff]
    %v645 = vld [vmem:[#allocation5 + $0xa4] sm:$0xf]
    %v646 = vld [vmem:[#allocation5 + $0xa8] sm:$0xff]
    %v647 = vld [vmem:[#allocation5 + $0xb0] sm:$0xf]
    %v648 = vld [vmem:[#allocation5 + $0xb4] sm:$0xff]
    %v649 = vld [vmem:[#allocation5 + $0xbc] sm:$0xf]
    %v682 = vunpack.c.l.b16 %v618
    %v683 = vunpack.c.h.b16 %v618
    %v684 = vunpack.c.l.b16 %v619
    %v685 = vunpack.c.l.b16 %v620
    %v686 = vunpack.c.h.b16 %v620
    %v687 = vunpack.c.l.b16 %v621
    %v688 = vunpack.c.l.b16 %v622
    %v689 = vunpack.c.h.b16 %v622
    %v690 = vunpack.c.l.b16 %v623
    %v691 = vunpack.c.l.b16 %v624
    %v692 = vunpack.c.h.b16 %v624
    %v693 = vunpack.c.l.b16 %v625
    %v694 = vunpack.c.l.b16 %v626
    %v695 = vunpack.c.h.b16 %v626
    %v696 = vunpack.c.l.b16 %v627
    %v697 = vunpack.c.l.b16 %v628
    %v698 = vunpack.c.h.b16 %v628
    %v699 = vunpack.c.l.b16 %v629
    %v700 = vunpack.c.l.b16 %v630
    %v701 = vunpack.c.h.b16 %v630
    %v702 = vunpack.c.l.b16 %v631
    %v703 = vunpack.c.l.b16 %v632
    %v704 = vunpack.c.h.b16 %v632
    %v705 = vunpack.c.l.b16 %v633
    %v706 = vunpack.c.l.b16 %v634
    %v707 = vunpack.c.h.b16 %v634
    %v708 = vunpack.c.l.b16 %v635
    %v709 = vunpack.c.l.b16 %v636
    %v710 = vunpack.c.h.b16 %v636
    %v711 = vunpack.c.l.b16 %v637
    %v712 = vunpack.c.l.b16 %v638
    %v713 = vunpack.c.h.b16 %v638
    %v714 = vunpack.c.l.b16 %v639
    %v715 = vunpack.c.l.b16 %v640
    %v716 = vunpack.c.h.b16 %v640
    %v717 = vunpack.c.l.b16 %v641
    %v718 = vunpack.c.l.b16 %v642
    %v719 = vunpack.c.h.b16 %v642
    %v720 = vunpack.c.l.b16 %v643
    %v721 = vunpack.c.l.b16 %v644
    %v722 = vunpack.c.h.b16 %v644
    %v723 = vunpack.c.l.b16 %v645
    %v724 = vunpack.c.l.b16 %v646
    %v725 = vunpack.c.h.b16 %v646
    %v726 = vunpack.c.l.b16 %v647
    %v727 = vunpack.c.l.b16 %v648
    %v728 = vunpack.c.h.b16 %v648
    %v729 = vunpack.c.l.b16 %v649
    %v730 = vpack.c.b16 %v685, %v682
    %v731 = vpack.c.b16 %v686, %v683
    %v732 = vpack.c.b16 %v687, %v684
    %v733 = vpack.c.b16 %v691, %v688
    %v734 = vpack.c.b16 %v692, %v689
    %v735 = vpack.c.b16 %v693, %v690
    %v736 = vpack.c.b16 %v697, %v694
    %v737 = vpack.c.b16 %v698, %v695
    %v738 = vpack.c.b16 %v699, %v696
    %v739 = vpack.c.b16 %v703, %v700
    %v740 = vpack.c.b16 %v704, %v701
    %v741 = vpack.c.b16 %v705, %v702
    %v742 = vpack.c.b16 %v709, %v706
    %v743 = vpack.c.b16 %v710, %v707
    %v744 = vpack.c.b16 %v711, %v708
    %v745 = vpack.c.b16 %v715, %v712
    %v746 = vpack.c.b16 %v716, %v713
    %v747 = vpack.c.b16 %v717, %v714
    %v748 = vpack.c.b16 %v721, %v718
    %v749 = vpack.c.b16 %v722, %v719
    %v750 = vpack.c.b16 %v723, %v720
    %v751 = vpack.c.b16 %v727, %v724
    %v752 = vpack.c.b16 %v728, %v725
    %v753 = vpack.c.b16 %v729, %v726
    %778 = vmatprep.subr.bf16.mxu0 %v731
    %779 = vmatpush1.bf16.msra.mxu0 %v730
    %780 = vmatprep.subr.bf16.mxu0 %v734
    %781 = vmatpush1.bf16.msra.mxu0 %v733
    %782 = vmatprep.subr.bf16.mxu0 %v737
    %783 = vmatpush1.bf16.msra.mxu0 %v736
    %784 = vmatprep.subr.bf16.mxu0 %v740
    %785 = vmatpush1.bf16.msra.mxu0 %v739
    %786 = vmatprep.subr.bf16.mxu0 %v743
    %787 = vmatpush1.bf16.msra.mxu0 %v742
    %788 = vmatprep.subr.bf16.mxu0 %v746
    %789 = vmatpush1.bf16.msra.mxu0 %v745
    %790 = vmatprep.subr.bf16.mxu0 %v749
    %791 = vmatpush1.bf16.msra.mxu0 %v748
    %792 = vmatprep.subr.bf16.mxu0 %v752
    %793 = vmatpush1.bf16.msra.mxu0 %v751
    %794 = vmatprep.subr.bf16.mxu0 0
    %795 = vmatpush1.bf16.msra.mxu0 0
    %796 = vmatprep.subr.bf16.mxu0 0
    %797 = vmatpush1.bf16.msra.mxu0 0
    %798 = vmatprep.subr.bf16.mxu0 0
    %799 = vmatpush1.bf16.msra.mxu0 0
    %800 = vmatprep.subr.bf16.mxu0 0
    %801 = vmatpush1.bf16.msra.mxu0 0
    %802 = vmatprep.subr.bf16.mxu0 0
    %803 = vmatpush1.bf16.msra.mxu0 0
    %804 = vmatprep.subr.bf16.mxu0 0
    %805 = vmatpush1.bf16.msra.mxu0 0
    %806 = vmatprep.subr.bf16.mxu0 0
    %807 = vmatpush1.bf16.msra.mxu0 0
    %808 = vmatprep.subr.bf16.mxu0 0
    %809 = vmatpush1.bf16.msra.mxu0 0
    %810 = vmatprep.mubr.bf16.mxu0 0
    %811 = vmatmul.mubr.bf16.gmra.mrb[0].mxu0 0
    %v812 = vpop.f32.mrb[0].mxu0
    %v813 = vadd.f32 0.0, %v812
    %v814 = vpop.f32.mrb[0].mxu0
    %v815 = vadd.f32 0.0, %v814
    %v816 = vpop.f32.mrb[0].mxu0
    %v817 = vadd.f32 0.0, %v816
    %v818 = vpop.f32.mrb[0].mxu0
    %v819 = vadd.f32 0.0, %v818
    %820 = vdwg.mxu0
    %821 = vmatprep.subr.bf16.mxu0 0
    %822 = vmatpush1.bf16.msra.mxu0 %v732
    %823 = vmatprep.subr.bf16.mxu0 0
    %824 = vmatpush1.bf16.msra.mxu0 %v735
    %825 = vmatprep.subr.bf16.mxu0 0
    %826 = vmatpush1.bf16.msra.mxu0 %v738
    %827 = vmatprep.subr.bf16.mxu0 0
    %828 = vmatpush1.bf16.msra.mxu0 %v741
    %829 = vmatprep.subr.bf16.mxu0 0
    %830 = vmatpush1.bf16.msra.mxu0 %v744
    %831 = vmatprep.subr.bf16.mxu0 0
    %832 = vmatpush1.bf16.msra.mxu0 %v747
    %833 = vmatprep.subr.bf16.mxu0 0
    %834 = vmatpush1.bf16.msra.mxu0 %v750
    %835 = vmatprep.subr.bf16.mxu0 0
    %836 = vmatpush1.bf16.msra.mxu0 %v753
    %837 = vmatprep.subr.bf16.mxu0 0
    %838 = vmatpush1.bf16.msra.mxu0 0
    %839 = vmatprep.subr.bf16.mxu0 0
    %840 = vmatpush1.bf16.msra.mxu0 0
    %841 = vmatprep.subr.bf16.mxu0 0
    %842 = vmatpush1.bf16.msra.mxu0 0
    %843 = vmatprep.subr.bf16.mxu0 0
    %844 = vmatpush1.bf16.msra.mxu0 0
    %845 = vmatprep.subr.bf16.mxu0 0
    %846 = vmatpush1.bf16.msra.mxu0 0
    %847 = vmatprep.subr.bf16.mxu0 0
    %848 = vmatpush1.bf16.msra.mxu0 0
    %849 = vmatprep.subr.bf16.mxu0 0
    %850 = vmatpush1.bf16.msra.mxu0 0
    %851 = vmatprep.subr.bf16.mxu0 0
    %852 = vmatpush1.bf16.msra.mxu0 0
    %853 = vmatprep.mubr.bf16.mxu0 0
    %854 = vmatmul.mubr.bf16.gmra.mrb[0].mxu0 0
    %v855 = vpop.f32.mrb[0].mxu0
    %v856 = vadd.f32 0.0, %v855
    %v857 = vpop.f32.mrb[0].mxu0
    %v858 = vpop.f32.mrb[0].mxu0
    %v859 = vadd.f32 0.0, %v858
    %v860 = vpop.f32.mrb[0].mxu0
    %861 = vdwg.mxu0
    %v862 = vld [vmem:[#allocation8] sm:$0xff]
    %v863 = vld [vmem:[#allocation8 + $0x8] sm:$0xf]
    %v864 = vld [vmem:[#allocation8 + $0xc] sm:$0xff]
    %v865 = vld [vmem:[#allocation8 + $0x14] sm:$0xf]
    %v866 = vld [vmem:[#allocation8 + $0x18] sm:$0xff]
    %v867 = vld [vmem:[#allocation8 + $0x20] sm:$0xf]
    %v868 = vld [vmem:[#allocation8 + $0x24] sm:$0xff]
    %v869 = vld [vmem:[#allocation8 + $0x2c] sm:$0xf]
    %v870 = vld [vmem:[#allocation8 + $0x30] sm:$0xff]
    %v871 = vld [vmem:[#allocation8 + $0x38] sm:$0xf]
    %v872 = vld [vmem:[#allocation8 + $0x3c] sm:$0xff]
    %v873 = vld [vmem:[#allocation8 + $0x44] sm:$0xf]
    %v874 = vld [vmem:[#allocation8 + $0x48] sm:$0xff]
    %v875 = vld [vmem:[#allocation8 + $0x50] sm:$0xf]
    %v876 = vld [vmem:[#allocation8 + $0x54] sm:$0xff]
    %v877 = vld [vmem:[#allocation8 + $0x5c] sm:$0xf]
    %v878 = vld [vmem:[#allocation8 + $0x60] sm:$0xff]
    %v879 = vld [vmem:[#allocation8 + $0x68] sm:$0xf]
    %v880 = vld [vmem:[#allocation8 + $0x6c] sm:$0xff]
    %v881 = vld [vmem:[#allocation8 + $0x74] sm:$0xf]
    %v882 = vld [vmem:[#allocation8 + $0x78] sm:$0xff]
    %v883 = vld [vmem:[#allocation8 + $0x80] sm:$0xf]
    %v884 = vld [vmem:[#allocation8 + $0x84] sm:$0xff]
    %v885 = vld [vmem:[#allocation8 + $0x8c] sm:$0xf]
    %v886 = vld [vmem:[#allocation8 + $0x90] sm:$0xff]
    %v887 = vld [vmem:[#allocation8 + $0x98] sm:$0xf]
    %v888 = vld [vmem:[#allocation8 + $0x9c] sm:$0xff]
    %v889 = vld [vmem:[#allocation8 + $0xa4] sm:$0xf]
    %v890 = vld [vmem:[#allocation8 + $0xa8] sm:$0xff]
    %v891 = vld [vmem:[#allocation8 + $0xb0] sm:$0xf]
    %v892 = vld [vmem:[#allocation8 + $0xb4] sm:$0xff]
    %v893 = vld [vmem:[#allocation8 + $0xbc] sm:$0xf]
    %v926 = vunpack.c.l.b16 %v862
    %v927 = vunpack.c.h.b16 %v862
    %v928 = vunpack.c.l.b16 %v863
    %v929 = vunpack.c.l.b16 %v864
    %v930 = vunpack.c.h.b16 %v864
    %v931 = vunpack.c.l.b16 %v865
    %v932 = vunpack.c.l.b16 %v866
    %v933 = vunpack.c.h.b16 %v866
    %v934 = vunpack.c.l.b16 %v867
    %v935 = vunpack.c.l.b16 %v868
    %v936 = vunpack.c.h.b16 %v868
    %v937 = vunpack.c.l.b16 %v869
    %v938 = vunpack.c.l.b16 %v870
    %v939 = vunpack.c.h.b16 %v870
    %v940 = vunpack.c.l.b16 %v871
    %v941 = vunpack.c.l.b16 %v872
    %v942 = vunpack.c.h.b16 %v872
    %v943 = vunpack.c.l.b16 %v873
    %v944 = vunpack.c.l.b16 %v874
    %v945 = vunpack.c.h.b16 %v874
    %v946 = vunpack.c.l.b16 %v875
    %v947 = vunpack.c.l.b16 %v876
    %v948 = vunpack.c.h.b16 %v876
    %v949 = vunpack.c.l.b16 %v877
    %v950 = vunpack.c.l.b16 %v878
    %v951 = vunpack.c.h.b16 %v878
    %v952 = vunpack.c.l.b16 %v879
    %v953 = vunpack.c.l.b16 %v880
    %v954 = vunpack.c.h.b16 %v880
    %v955 = vunpack.c.l.b16 %v881
    %v956 = vunpack.c.l.b16 %v882
    %v957 = vunpack.c.h.b16 %v882
    %v958 = vunpack.c.l.b16 %v883
    %v959 = vunpack.c.l.b16 %v884
    %v960 = vunpack.c.h.b16 %v884
    %v961 = vunpack.c.l.b16 %v885
    %v962 = vunpack.c.l.b16 %v886
    %v963 = vunpack.c.h.b16 %v886
    %v964 = vunpack.c.l.b16 %v887
    %v965 = vunpack.c.l.b16 %v888
    %v966 = vunpack.c.h.b16 %v888
    %v967 = vunpack.c.l.b16 %v889
    %v968 = vunpack.c.l.b16 %v890
    %v969 = vunpack.c.h.b16 %v890
    %v970 = vunpack.c.l.b16 %v891
    %v971 = vunpack.c.l.b16 %v892
    %v972 = vunpack.c.h.b16 %v892
    %v973 = vunpack.c.l.b16 %v893
    %v974 = vpack.c.b16 %v929, %v926
    %v975 = vpack.c.b16 %v930, %v927
    %v976 = vpack.c.b16 %v931, %v928
    %v977 = vpack.c.b16 %v935, %v932
    %v978 = vpack.c.b16 %v936, %v933
    %v979 = vpack.c.b16 %v937, %v934
    %v980 = vpack.c.b16 %v941, %v938
    %v981 = vpack.c.b16 %v942, %v939
    %v982 = vpack.c.b16 %v943, %v940
    %v983 = vpack.c.b16 %v947, %v944
    %v984 = vpack.c.b16 %v948, %v945
    %v985 = vpack.c.b16 %v949, %v946
    %v986 = vpack.c.b16 %v953, %v950
    %v987 = vpack.c.b16 %v954, %v951
    %v988 = vpack.c.b16 %v955, %v952
    %v989 = vpack.c.b16 %v959, %v956
    %v990 = vpack.c.b16 %v960, %v957
    %v991 = vpack.c.b16 %v961, %v958
    %v992 = vpack.c.b16 %v965, %v962
    %v993 = vpack.c.b16 %v966, %v963
    %v994 = vpack.c.b16 %v967, %v964
    %v995 = vpack.c.b16 %v971, %v968
    %v996 = vpack.c.b16 %v972, %v969
    %v997 = vpack.c.b16 %v973, %v970
    %1022 = vmatprep.subr.bf16.mxu0 %v975
    %1023 = vmatpush1.bf16.msra.mxu0 %v974
    %1024 = vmatprep.subr.bf16.mxu0 %v978
    %1025 = vmatpush1.bf16.msra.mxu0 %v977
    %1026 = vmatprep.subr.bf16.mxu0 %v981
    %1027 = vmatpush1.bf16.msra.mxu0 %v980
    %1028 = vmatprep.subr.bf16.mxu0 %v984
    %1029 = vmatpush1.bf16.msra.mxu0 %v983
    %1030 = vmatprep.subr.bf16.mxu0 %v987
    %1031 = vmatpush1.bf16.msra.mxu0 %v986
    %1032 = vmatprep.subr.bf16.mxu0 %v990
    %1033 = vmatpush1.bf16.msra.mxu0 %v989
    %1034 = vmatprep.subr.bf16.mxu0 %v993
    %1035 = vmatpush1.bf16.msra.mxu0 %v992
    %1036 = vmatprep.subr.bf16.mxu0 %v996
    %1037 = vmatpush1.bf16.msra.mxu0 %v995
    %1038 = vmatprep.subr.bf16.mxu0 0
    %1039 = vmatpush1.bf16.msra.mxu0 0
    %1040 = vmatprep.subr.bf16.mxu0 0
    %1041 = vmatpush1.bf16.msra.mxu0 0
    %1042 = vmatprep.subr.bf16.mxu0 0
    %1043 = vmatpush1.bf16.msra.mxu0 0
    %1044 = vmatprep.subr.bf16.mxu0 0
    %1045 = vmatpush1.bf16.msra.mxu0 0
    %1046 = vmatprep.subr.bf16.mxu0 0
    %1047 = vmatpush1.bf16.msra.mxu0 0
    %1048 = vmatprep.subr.bf16.mxu0 0
    %1049 = vmatpush1.bf16.msra.mxu0 0
    %1050 = vmatprep.subr.bf16.mxu0 0
    %1051 = vmatpush1.bf16.msra.mxu0 0
    %1052 = vmatprep.subr.bf16.mxu0 0
    %1053 = vmatpush1.bf16.msra.mxu0 0
    %1054 = vmatprep.mubr.bf16.mxu0 0
    %1055 = vmatmul.mubr.bf16.gmra.mrb[0].mxu0 0
    %v1056 = vpop.f32.mrb[0].mxu0
    %v1057 = vadd.f32 0.0, %v1056
    %v1058 = vpop.f32.mrb[0].mxu0
    %v1059 = vadd.f32 0.0, %v1058
    %v1060 = vpop.f32.mrb[0].mxu0
    %v1061 = vadd.f32 0.0, %v1060
    %v1062 = vpop.f32.mrb[0].mxu0
    %v1063 = vadd.f32 0.0, %v1062
    %1064 = vdwg.mxu0
    %1065 = vmatprep.subr.bf16.mxu0 0
    %1066 = vmatpush1.bf16.msra.mxu0 %v976
    %1067 = vmatprep.subr.bf16.mxu0 0
    %1068 = vmatpush1.bf16.msra.mxu0 %v979
    %1069 = vmatprep.subr.bf16.mxu0 0
    %1070 = vmatpush1.bf16.msra.mxu0 %v982
    %1071 = vmatprep.subr.bf16.mxu0 0
    %1072 = vmatpush1.bf16.msra.mxu0 %v985
    %1073 = vmatprep.subr.bf16.mxu0 0
    %1074 = vmatpush1.bf16.msra.mxu0 %v988
    %1075 = vmatprep.subr.bf16.mxu0 0
    %1076 = vmatpush1.bf16.msra.mxu0 %v991
    %1077 = vmatprep.subr.bf16.mxu0 0
    %1078 = vmatpush1.bf16.msra.mxu0 %v994
    %1079 = vmatprep.subr.bf16.mxu0 0
    %1080 = vmatpush1.bf16.msra.mxu0 %v997
    %1081 = vmatprep.subr.bf16.mxu0 0
    %1082 = vmatpush1.bf16.msra.mxu0 0
    %1083 = vmatprep.subr.bf16.mxu0 0
    %1084 = vmatpush1.bf16.msra.mxu0 0
    %1085 = vmatprep.subr.bf16.mxu0 0
    %1086 = vmatpush1.bf16.msra.mxu0 0
    %1087 = vmatprep.subr.bf16.mxu0 0
    %1088 = vmatpush1.bf16.msra.mxu0 0
    %1089 = vmatprep.subr.bf16.mxu0 0
    %1090 = vmatpush1.bf16.msra.mxu0 0
    %1091 = vmatprep.subr.bf16.mxu0 0
    %1092 = vmatpush1.bf16.msra.mxu0 0
    %1093 = vmatprep.subr.bf16.mxu0 0
    %1094 = vmatpush1.bf16.msra.mxu0 0
    %1095 = vmatprep.subr.bf16.mxu0 0
    %1096 = vmatpush1.bf16.msra.mxu0 0
    %1097 = vmatprep.mubr.bf16.mxu0 0
    %1098 = vmatmul.mubr.bf16.gmra.mrb[0].mxu0 0
    %v1099 = vpop.f32.mrb[0].mxu0
    %v1100 = vadd.f32 0.0, %v1099
    %v1101 = vpop.f32.mrb[0].mxu0
    %v1102 = vpop.f32.mrb[0].mxu0
    %v1103 = vadd.f32 0.0, %v1102
    %v1104 = vpop.f32.mrb[0].mxu0
    %1105 = vdwg.mxu0
    %v1106 = vld [vmem:[#allocation2] sm:$0xff]
    %v1107 = vld [vmem:[#allocation2 + $0x8] sm:$0xff]
    %v1108 = vld [vmem:[#allocation2 + $0x10] sm:$0xff]
    %v1109 = vld [vmem:[#allocation2 + $0x18] sm:$0xff]
    %v1110 = vld [vmem:[#allocation2 + $0x20] sm:$0xff]
    %v1111 = vld [vmem:[#allocation2 + $0x28] sm:$0xff]
    %v1112 = vadd.f32 %v1106, %v813
    %v1113 = vadd.f32 %v1109, %v817
    %v1114 = vxor.u32 %v1112, 2147483648
    %v1115 = vxor.u32 %v1113, 2147483648
    %v1116 = vmul.f32 %v1114, 1.442695
    %v1117 = vpow.pop %v1116
    %v1118 = vmul.f32 %v1115, 1.442695
    %v1119 = vpow.pop %v1118
    %v1120 = vadd.f32 %v1117, 1.0
    %v1121 = vadd.f32 %v1119, 1.0
    %v1122 = vrcp.pop %v1120
    %v1123 = vmul.f32 1.0, %v1122
    %v1124 = vrcp.pop %v1121
    %v1125 = vmul.f32 1.0, %v1124
    %v1126 = vadd.f32 %v1107, %v815
    %v1127 = vadd.f32 %v1110, %v819
    %v1128 = vxor.u32 %v1126, 2147483648
    %v1129 = vxor.u32 %v1127, 2147483648
    %v1130 = vmul.f32 %v1128, 1.442695
    %v1131 = vpow.pop %v1130
    %v1132 = vmul.f32 %v1129, 1.442695
    %v1133 = vpow.pop %v1132
    %v1134 = vadd.f32 %v1131, 1.0
    %v1135 = vadd.f32 %v1133, 1.0
    %v1136 = vrcp.pop %v1134
    %v1137 = vmul.f32 1.0, %v1136
    %v1138 = vrcp.pop %v1135
    %v1139 = vmul.f32 1.0, %v1138
    %v1140 = vadd.f32 %v856, %v592
    %v1141 = vadd.f32 %v859, %v592
    %v1142 = vmul.f32 %v1123, %v1140
    %v1143 = vmul.f32 %v1125, %v1141
    %v1144 = vadd.f32 %v1108, %v1142
    %v1145 = vadd.f32 %v1111, %v1143
    %v1146 = vtanh.pop %v1144
    %v1147 = vtanh.pop %v1145
    %v1148 = vsub.f32 1.0, %v1137
    %v1149 = vsub.f32 1.0, %v1139
    %v1150 = vmul.f32 %v1148, %v1146
    %v1151 = vmul.f32 %v1149, %v1147
    %v1152 = vmul.f32 %v1137, 0.0
    %v1153 = vmul.f32 %v1139, 0.0
    %v1154 = vadd.f32 %v1150, %v1152
    %v1155 = vadd.f32 %v1151, %v1153
    %v1156 = vpack.c.bf16 %v1155, %v1154
    %v1157 = vld [vmem:[#allocation7] sm:$0xff]
    %v1158 = vld [vmem:[#allocation7 + $0x8] sm:$0xf]
    %v1159 = vld [vmem:[#allocation7 + $0xc] sm:$0xff]
    %v1160 = vld [vmem:[#allocation7 + $0x14] sm:$0xf]
    %v1161 = vld [vmem:[#allocation7 + $0x18] sm:$0xff]
    %v1162 = vld [vmem:[#allocation7 + $0x20] sm:$0xf]
    %v1163 = vld [vmem:[#allocation7 + $0x24] sm:$0xff]
    %v1164 = vld [vmem:[#allocation7 + $0x2c] sm:$0xf]
    %v1165 = vld [vmem:[#allocation7 + $0x30] sm:$0xff]
    %v1166 = vld [vmem:[#allocation7 + $0x38] sm:$0xf]
    %v1167 = vld [vmem:[#allocation7 + $0x3c] sm:$0xff]
    %v1168 = vld [vmem:[#allocation7 + $0x44] sm:$0xf]
    %v1169 = vld [vmem:[#allocation7 + $0x48] sm:$0xff]
    %v1170 = vld [vmem:[#allocation7 + $0x50] sm:$0xf]
    %v1171 = vld [vmem:[#allocation7 + $0x54] sm:$0xff]
    %v1172 = vld [vmem:[#allocation7 + $0x5c] sm:$0xf]
    %v1173 = vld [vmem:[#allocation7 + $0x60] sm:$0xff]
    %v1174 = vld [vmem:[#allocation7 + $0x68] sm:$0xf]
    %v1175 = vld [vmem:[#allocation7 + $0x6c] sm:$0xff]
    %v1176 = vld [vmem:[#allocation7 + $0x74] sm:$0xf]
    %v1177 = vld [vmem:[#allocation7 + $0x78] sm:$0xff]
    %v1178 = vld [vmem:[#allocation7 + $0x80] sm:$0xf]
    %v1179 = vld [vmem:[#allocation7 + $0x84] sm:$0xff]
    %v1180 = vld [vmem:[#allocation7 + $0x8c] sm:$0xf]
    %v1181 = vld [vmem:[#allocation7 + $0x90] sm:$0xff]
    %v1182 = vld [vmem:[#allocation7 + $0x98] sm:$0xf]
    %v1183 = vld [vmem:[#allocation7 + $0x9c] sm:$0xff]
    %v1184 = vld [vmem:[#allocation7 + $0xa4] sm:$0xf]
    %v1185 = vld [vmem:[#allocation7 + $0xa8] sm:$0xff]
    %v1186 = vld [vmem:[#allocation7 + $0xb0] sm:$0xf]
    %v1187 = vld [vmem:[#allocation7 + $0xb4] sm:$0xff]
    %v1188 = vld [vmem:[#allocation7 + $0xbc] sm:$0xf]
    %v1221 = vunpack.c.l.b16 %v1157
    %v1222 = vunpack.c.h.b16 %v1157
    %v1223 = vunpack.c.l.b16 %v1158
    %v1224 = vunpack.c.l.b16 %v1159
    %v1225 = vunpack.c.h.b16 %v1159
    %v1226 = vunpack.c.l.b16 %v1160
    %v1227 = vunpack.c.l.b16 %v1161
    %v1228 = vunpack.c.h.b16 %v1161
    %v1229 = vunpack.c.l.b16 %v1162
    %v1230 = vunpack.c.l.b16 %v1163
    %v1231 = vunpack.c.h.b16 %v1163
    %v1232 = vunpack.c.l.b16 %v1164
    %v1233 = vunpack.c.l.b16 %v1165
    %v1234 = vunpack.c.h.b16 %v1165
    %v1235 = vunpack.c.l.b16 %v1166
    %v1236 = vunpack.c.l.b16 %v1167
    %v1237 = vunpack.c.h.b16 %v1167
    %v1238 = vunpack.c.l.b16 %v1168
    %v1239 = vunpack.c.l.b16 %v1169
    %v1240 = vunpack.c.h.b16 %v1169
    %v1241 = vunpack.c.l.b16 %v1170
    %v1242 = vunpack.c.l.b16 %v1171
    %v1243 = vunpack.c.h.b16 %v1171
    %v1244 = vunpack.c.l.b16 %v1172
    %v1245 = vunpack.c.l.b16 %v1173
    %v1246 = vunpack.c.h.b16 %v1173
    %v1247 = vunpack.c.l.b16 %v1174
    %v1248 = vunpack.c.l.b16 %v1175
    %v1249 = vunpack.c.h.b16 %v1175
    %v1250 = vunpack.c.l.b16 %v1176
    %v1251 = vunpack.c.l.b16 %v1177
    %v1252 = vunpack.c.h.b16 %v1177
    %v1253 = vunpack.c.l.b16 %v1178
    %v1254 = vunpack.c.l.b16 %v1179
    %v1255 = vunpack.c.h.b16 %v1179
    %v1256 = vunpack.c.l.b16 %v1180
    %v1257 = vunpack.c.l.b16 %v1181
    %v1258 = vunpack.c.h.b16 %v1181
    %v1259 = vunpack.c.l.b16 %v1182
    %v1260 = vunpack.c.l.b16 %v1183
    %v1261 = vunpack.c.h.b16 %v1183
    %v1262 = vunpack.c.l.b16 %v1184
    %v1263 = vunpack.c.l.b16 %v1185
    %v1264 = vunpack.c.h.b16 %v1185
    %v1265 = vunpack.c.l.b16 %v1186
    %v1266 = vunpack.c.l.b16 %v1187
    %v1267 = vunpack.c.h.b16 %v1187
    %v1268 = vunpack.c.l.b16 %v1188
    %v1269 = vpack.c.b16 %v1224, %v1221
    %v1270 = vpack.c.b16 %v1225, %v1222
    %v1271 = vpack.c.b16 %v1226, %v1223
    %v1272 = vpack.c.b16 %v1230, %v1227
    %v1273 = vpack.c.b16 %v1231, %v1228
    %v1274 = vpack.c.b16 %v1232, %v1229
    %v1275 = vpack.c.b16 %v1236, %v1233
    %v1276 = vpack.c.b16 %v1237, %v1234
    %v1277 = vpack.c.b16 %v1238, %v1235
    %v1278 = vpack.c.b16 %v1242, %v1239
    %v1279 = vpack.c.b16 %v1243, %v1240
    %v1280 = vpack.c.b16 %v1244, %v1241
    %v1281 = vpack.c.b16 %v1248, %v1245
    %v1282 = vpack.c.b16 %v1249, %v1246
    %v1283 = vpack.c.b16 %v1250, %v1247
    %v1284 = vpack.c.b16 %v1254, %v1251
    %v1285 = vpack.c.b16 %v1255, %v1252
    %v1286 = vpack.c.b16 %v1256, %v1253
    %v1287 = vpack.c.b16 %v1260, %v1257
    %v1288 = vpack.c.b16 %v1261, %v1258
    %v1289 = vpack.c.b16 %v1262, %v1259
    %v1290 = vpack.c.b16 %v1266, %v1263
    %v1291 = vpack.c.b16 %v1267, %v1264
    %v1292 = vpack.c.b16 %v1268, %v1265
    %1317 = vmatprep.subr.bf16.mxu0 %v1270
    %1318 = vmatpush1.bf16.msra.mxu0 %v1269
    %1319 = vmatprep.subr.bf16.mxu0 %v1273
    %1320 = vmatpush1.bf16.msra.mxu0 %v1272
    %1321 = vmatprep.subr.bf16.mxu0 %v1276
    %1322 = vmatpush1.bf16.msra.mxu0 %v1275
    %1323 = vmatprep.subr.bf16.mxu0 %v1279
    %1324 = vmatpush1.bf16.msra.mxu0 %v1278
    %1325 = vmatprep.subr.bf16.mxu0 %v1282
    %1326 = vmatpush1.bf16.msra.mxu0 %v1281
    %1327 = vmatprep.subr.bf16.mxu0 %v1285
    %1328 = vmatpush1.bf16.msra.mxu0 %v1284
    %1329 = vmatprep.subr.bf16.mxu0 %v1288
    %1330 = vmatpush1.bf16.msra.mxu0 %v1287
    %1331 = vmatprep.subr.bf16.mxu0 %v1291
    %1332 = vmatpush1.bf16.msra.mxu0 %v1290
    %1333 = vmatprep.subr.bf16.mxu0 0
    %1334 = vmatpush1.bf16.msra.mxu0 0
    %1335 = vmatprep.subr.bf16.mxu0 0
    %1336 = vmatpush1.bf16.msra.mxu0 0
    %1337 = vmatprep.subr.bf16.mxu0 0
    %1338 = vmatpush1.bf16.msra.mxu0 0
    %1339 = vmatprep.subr.bf16.mxu0 0
    %1340 = vmatpush1.bf16.msra.mxu0 0
    %1341 = vmatprep.subr.bf16.mxu0 0
    %1342 = vmatpush1.bf16.msra.mxu0 0
    %1343 = vmatprep.subr.bf16.mxu0 0
    %1344 = vmatpush1.bf16.msra.mxu0 0
    %1345 = vmatprep.subr.bf16.mxu0 0
    %1346 = vmatpush1.bf16.msra.mxu0 0
    %1347 = vmatprep.subr.bf16.mxu0 0
    %1348 = vmatpush1.bf16.msra.mxu0 0
    %1349 = vmatprep.mubr.bf16.mxu0 0
    %1350 = vmatmul.mubr.bf16.gmra.mrb[0].mxu0 %v1156
    %v1351 = vpop.f32.mrb[0].mxu0
    %v1352 = vadd.f32 %v599, %v1351
    %v1353 = vpop.f32.mrb[0].mxu0
    %v1354 = vadd.f32 %v603, %v1353
    %v1355 = vpop.f32.mrb[0].mxu0
    %v1356 = vadd.f32 %v599, %v1355
    %v1357 = vpop.f32.mrb[0].mxu0
    %v1358 = vadd.f32 %v603, %v1357
    %1359 = vdwg.mxu0
    %1360 = vmatprep.subr.bf16.mxu0 0
    %1361 = vmatpush1.bf16.msra.mxu0 %v1271
    %1362 = vmatprep.subr.bf16.mxu0 0
    %1363 = vmatpush1.bf16.msra.mxu0 %v1274
    %1364 = vmatprep.subr.bf16.mxu0 0
    %1365 = vmatpush1.bf16.msra.mxu0 %v1277
    %1366 = vmatprep.subr.bf16.mxu0 0
    %1367 = vmatpush1.bf16.msra.mxu0 %v1280
    %1368 = vmatprep.subr.bf16.mxu0 0
    %1369 = vmatpush1.bf16.msra.mxu0 %v1283
    %1370 = vmatprep.subr.bf16.mxu0 0
    %1371 = vmatpush1.bf16.msra.mxu0 %v1286
    %1372 = vmatprep.subr.bf16.mxu0 0
    %1373 = vmatpush1.bf16.msra.mxu0 %v1289
    %1374 = vmatprep.subr.bf16.mxu0 0
    %1375 = vmatpush1.bf16.msra.mxu0 %v1292
    %1376 = vmatprep.subr.bf16.mxu0 0
    %1377 = vmatpush1.bf16.msra.mxu0 0
    %1378 = vmatprep.subr.bf16.mxu0 0
    %1379 = vmatpush1.bf16.msra.mxu0 0
    %1380 = vmatprep.subr.bf16.mxu0 0
    %1381 = vmatpush1.bf16.msra.mxu0 0
    %1382 = vmatprep.subr.bf16.mxu0 0
    %1383 = vmatpush1.bf16.msra.mxu0 0
    %1384 = vmatprep.subr.bf16.mxu0 0
    %1385 = vmatpush1.bf16.msra.mxu0 0
    %1386 = vmatprep.subr.bf16.mxu0 0
    %1387 = vmatpush1.bf16.msra.mxu0 0
    %1388 = vmatprep.subr.bf16.mxu0 0
    %1389 = vmatpush1.bf16.msra.mxu0 0
    %1390 = vmatprep.subr.bf16.mxu0 0
    %1391 = vmatpush1.bf16.msra.mxu0 0
    %1392 = vmatprep.mubr.bf16.mxu0 0
    %1393 = vmatmul.mubr.bf16.gmra.mrb[0].mxu0 %v1156
    %v1394 = vpop.f32.mrb[0].mxu0
    %v1395 = vadd.f32 %v607, %v1394
    %v1396 = vpop.f32.mrb[0].mxu0
    %v1397 = vpop.f32.mrb[0].mxu0
    %v1398 = vadd.f32 %v607, %v1397
    %v1399 = vpop.f32.mrb[0].mxu0
    %1400 = vdwg.mxu0
    %v1401 = vadd.f32 %v1352, %v1057
    %v1402 = vadd.f32 %v1356, %v1061
    %v1403 = vxor.u32 %v1401, 2147483648
    %v1404 = vxor.u32 %v1402, 2147483648
    %v1405 = vmul.f32 %v1403, 1.442695
    %v1406 = vpow.pop %v1405
    %v1407 = vmul.f32 %v1404, 1.442695
    %v1408 = vpow.pop %v1407
    %v1409 = vadd.f32 %v1406, 1.0
    %v1410 = vadd.f32 %v1408, 1.0
    %v1411 = vrcp.pop %v1409
    %v1412 = vmul.f32 1.0, %v1411
    %v1413 = vrcp.pop %v1410
    %v1414 = vmul.f32 1.0, %v1413
    %v1415 = vadd.f32 %v1354, %v1059
    %v1416 = vadd.f32 %v1358, %v1063
    %v1417 = vxor.u32 %v1415, 2147483648
    %v1418 = vxor.u32 %v1416, 2147483648
    %v1419 = vmul.f32 %v1417, 1.442695
    %v1420 = vpow.pop %v1419
    %v1421 = vmul.f32 %v1418, 1.442695
    %v1422 = vpow.pop %v1421
    %v1423 = vadd.f32 %v1420, 1.0
    %v1424 = vadd.f32 %v1422, 1.0
    %v1425 = vrcp.pop %v1423
    %v1426 = vmul.f32 1.0, %v1425
    %v1427 = vrcp.pop %v1424
    %v1428 = vmul.f32 1.0, %v1427
    %v1429 = vadd.f32 %v1100, %v616
    %v1430 = vadd.f32 %v1103, %v616
    %v1431 = vmul.f32 %v1412, %v1429
    %v1432 = vmul.f32 %v1414, %v1430
    %v1433 = vadd.f32 %v1395, %v1431
    %v1434 = vadd.f32 %v1398, %v1432
    %v1435 = vtanh.pop %v1433
    %v1436 = vtanh.pop %v1434
    %v1437 = vsub.f32 1.0, %v1426
    %v1438 = vsub.f32 1.0, %v1428
    %v1439 = vmul.f32 %v1437, %v1435
    %v1440 = vmul.f32 %v1438, %v1436
    %v1441 = vmul.f32 %v1426, 0.0
    %v1442 = vmul.f32 %v1428, 0.0
    %v1443 = vadd.f32 %v1439, %v1441
    %v1444 = vadd.f32 %v1440, %v1442
    %1445 = vmatprep.subr.bf16.mxu0 %v731
    %1446 = vmatpush1.bf16.msra.mxu0 %v730
    %1447 = vmatprep.subr.bf16.mxu0 %v734
    %1448 = vmatpush1.bf16.msra.mxu0 %v733
    %1449 = vmatprep.subr.bf16.mxu0 %v737
    %1450 = vmatpush1.bf16.msra.mxu0 %v736
    %1451 = vmatprep.subr.bf16.mxu0 %v740
    %1452 = vmatpush1.bf16.msra.mxu0 %v739
    %1453 = vmatprep.subr.bf16.mxu0 %v743
    %1454 = vmatpush1.bf16.msra.mxu0 %v742
    %1455 = vmatprep.subr.bf16.mxu0 %v746
    %1456 = vmatpush1.bf16.msra.mxu0 %v745
    %1457 = vmatprep.subr.bf16.mxu0 %v749
    %1458 = vmatpush1.bf16.msra.mxu0 %v748
    %1459 = vmatprep.subr.bf16.mxu0 %v752
    %1460 = vmatpush1.bf16.msra.mxu0 %v751
    %1461 = vmatprep.subr.bf16.mxu0 0
    %1462 = vmatpush1.bf16.msra.mxu0 0
    %1463 = vmatprep.subr.bf16.mxu0 0
    %1464 = vmatpush1.bf16.msra.mxu0 0
    %1465 = vmatprep.subr.bf16.mxu0 0
    %1466 = vmatpush1.bf16.msra.mxu0 0
    %1467 = vmatprep.subr.bf16.mxu0 0
    %1468 = vmatpush1.bf16.msra.mxu0 0
    %1469 = vmatprep.subr.bf16.mxu0 0
    %1470 = vmatpush1.bf16.msra.mxu0 0
    %1471 = vmatprep.subr.bf16.mxu0 0
    %1472 = vmatpush1.bf16.msra.mxu0 0
    %1473 = vmatprep.subr.bf16.mxu0 0
    %1474 = vmatpush1.bf16.msra.mxu0 0
    %1475 = vmatprep.subr.bf16.mxu0 0
    %1476 = vmatpush1.bf16.msra.mxu0 0
    %1477 = vmatprep.mubr.bf16.mxu0 0
    %1478 = vmatmul.mubr.bf16.gmra.mrb[0].mxu0 %v1156
    %v1479 = vpop.f32.mrb[0].mxu0
    %v1480 = vadd.f32 0.0, %v1479
    %v1481 = vpop.f32.mrb[0].mxu0
    %v1482 = vadd.f32 0.0, %v1481
    %v1483 = vpop.f32.mrb[0].mxu0
    %v1484 = vadd.f32 0.0, %v1483
    %v1485 = vpop.f32.mrb[0].mxu0
    %v1486 = vadd.f32 0.0, %v1485
    %1487 = vdwg.mxu0
    %1488 = vmatprep.subr.bf16.mxu0 0
    %1489 = vmatpush1.bf16.msra.mxu0 %v732
    %1490 = vmatprep.subr.bf16.mxu0 0
    %1491 = vmatpush1.bf16.msra.mxu0 %v735
    %1492 = vmatprep.subr.bf16.mxu0 0
    %1493 = vmatpush1.bf16.msra.mxu0 %v738
    %1494 = vmatprep.subr.bf16.mxu0 0
    %1495 = vmatpush1.bf16.msra.mxu0 %v741
    %1496 = vmatprep.subr.bf16.mxu0 0
    %1497 = vmatpush1.bf16.msra.mxu0 %v744
    %1498 = vmatprep.subr.bf16.mxu0 0
    %1499 = vmatpush1.bf16.msra.mxu0 %v747
    %1500 = vmatprep.subr.bf16.mxu0 0
    %1501 = vmatpush1.bf16.msra.mxu0 %v750
    %1502 = vmatprep.subr.bf16.mxu0 0
    %1503 = vmatpush1.bf16.msra.mxu0 %v753
    %1504 = vmatprep.subr.bf16.mxu0 0
    %1505 = vmatpush1.bf16.msra.mxu0 0
    %1506 = vmatprep.subr.bf16.mxu0 0
    %1507 = vmatpush1.bf16.msra.mxu0 0
    %1508 = vmatprep.subr.bf16.mxu0 0
    %1509 = vmatpush1.bf16.msra.mxu0 0
    %1510 = vmatprep.subr.bf16.mxu0 0
    %1511 = vmatpush1.bf16.msra.mxu0 0
    %1512 = vmatprep.subr.bf16.mxu0 0
    %1513 = vmatpush1.bf16.msra.mxu0 0
    %1514 = vmatprep.subr.bf16.mxu0 0
    %1515 = vmatpush1.bf16.msra.mxu0 0
    %1516 = vmatprep.subr.bf16.mxu0 0
    %1517 = vmatpush1.bf16.msra.mxu0 0
    %1518 = vmatprep.subr.bf16.mxu0 0
    %1519 = vmatpush1.bf16.msra.mxu0 0
    %1520 = vmatprep.mubr.bf16.mxu0 0
    %1521 = vmatmul.mubr.bf16.gmra.mrb[0].mxu0 %v1156
    %v1522 = vpop.f32.mrb[0].mxu0
    %v1523 = vadd.f32 0.0, %v1522
    %v1524 = vpop.f32.mrb[0].mxu0
    %v1525 = vpop.f32.mrb[0].mxu0
    %v1526 = vadd.f32 0.0, %v1525
    %v1527 = vpop.f32.mrb[0].mxu0
    %1528 = vdwg.mxu0
    %v1529 = vpack.c.bf16 %v1444, %v1443
    %1530 = vmatprep.subr.bf16.mxu0 %v975
    %1531 = vmatpush1.bf16.msra.mxu0 %v974
    %1532 = vmatprep.subr.bf16.mxu0 %v978
    %1533 = vmatpush1.bf16.msra.mxu0 %v977
    %1534 = vmatprep.subr.bf16.mxu0 %v981
    %1535 = vmatpush1.bf16.msra.mxu0 %v980
    %1536 = vmatprep.subr.bf16.mxu0 %v984
    %1537 = vmatpush1.bf16.msra.mxu0 %v983
    %1538 = vmatprep.subr.bf16.mxu0 %v987
    %1539 = vmatpush1.bf16.msra.mxu0 %v986
    %1540 = vmatprep.subr.bf16.mxu0 %v990
    %1541 = vmatpush1.bf16.msra.mxu0 %v989
    %1542 = vmatprep.subr.bf16.mxu0 %v993
    %1543 = vmatpush1.bf16.msra.mxu0 %v992
    %1544 = vmatprep.subr.bf16.mxu0 %v996
    %1545 = vmatpush1.bf16.msra.mxu0 %v995
    %1546 = vmatprep.subr.bf16.mxu0 0
    %1547 = vmatpush1.bf16.msra.mxu0 0
    %1548 = vmatprep.subr.bf16.mxu0 0
    %1549 = vmatpush1.bf16.msra.mxu0 0
    %1550 = vmatprep.subr.bf16.mxu0 0
    %1551 = vmatpush1.bf16.msra.mxu0 0
    %1552 = vmatprep.subr.bf16.mxu0 0
    %1553 = vmatpush1.bf16.msra.mxu0 0
    %1554 = vmatprep.subr.bf16.mxu0 0
    %1555 = vmatpush1.bf16.msra.mxu0 0
    %1556 = vmatprep.subr.bf16.mxu0 0
    %1557 = vmatpush1.bf16.msra.mxu0 0
    %1558 = vmatprep.subr.bf16.mxu0 0
    %1559 = vmatpush1.bf16.msra.mxu0 0
    %1560 = vmatprep.subr.bf16.mxu0 0
    %1561 = vmatpush1.bf16.msra.mxu0 0
    %1562 = vmatprep.mubr.bf16.mxu0 0
    %1563 = vmatmul.mubr.bf16.gmra.mrb[0].mxu0 %v1529
    %v1564 = vpop.f32.mrb[0].mxu0
    %v1565 = vadd.f32 0.0, %v1564
    %v1566 = vpop.f32.mrb[0].mxu0
    %v1567 = vadd.f32 0.0, %v1566
    %v1568 = vpop.f32.mrb[0].mxu0
    %v1569 = vadd.f32 0.0, %v1568
    %v1570 = vpop.f32.mrb[0].mxu0
    %v1571 = vadd.f32 0.0, %v1570
    %1572 = vdwg.mxu0
    %1573 = vmatprep.subr.bf16.mxu0 0
    %1574 = vmatpush1.bf16.msra.mxu0 %v976
    %1575 = vmatprep.subr.bf16.mxu0 0
    %1576 = vmatpush1.bf16.msra.mxu0 %v979
    %1577 = vmatprep.subr.bf16.mxu0 0
    %1578 = vmatpush1.bf16.msra.mxu0 %v982
    %1579 = vmatprep.subr.bf16.mxu0 0
    %1580 = vmatpush1.bf16.msra.mxu0 %v985
    %1581 = vmatprep.subr.bf16.mxu0 0
    %1582 = vmatpush1.bf16.msra.mxu0 %v988
    %1583 = vmatprep.subr.bf16.mxu0 0
    %1584 = vmatpush1.bf16.msra.mxu0 %v991
    %1585 = vmatprep.subr.bf16.mxu0 0
    %1586 = vmatpush1.bf16.msra.mxu0 %v994
    %1587 = vmatprep.subr.bf16.mxu0 0
    %1588 = vmatpush1.bf16.msra.mxu0 %v997
    %1589 = vmatprep.subr.bf16.mxu0 0
    %1590 = vmatpush1.bf16.msra.mxu0 0
    %1591 = vmatprep.subr.bf16.mxu0 0
    %1592 = vmatpush1.bf16.msra.mxu0 0
    %1593 = vmatprep.subr.bf16.mxu0 0
    %1594 = vmatpush1.bf16.msra.mxu0 0
    %1595 = vmatprep.subr.bf16.mxu0 0
    %1596 = vmatpush1.bf16.msra.mxu0 0
    %1597 = vmatprep.subr.bf16.mxu0 0
    %1598 = vmatpush1.bf16.msra.mxu0 0
    %1599 = vmatprep.subr.bf16.mxu0 0
    %1600 = vmatpush1.bf16.msra.mxu0 0
    %1601 = vmatprep.subr.bf16.mxu0 0
    %1602 = vmatpush1.bf16.msra.mxu0 0
    %1603 = vmatprep.subr.bf16.mxu0 0
    %1604 = vmatpush1.bf16.msra.mxu0 0
    %1605 = vmatprep.mubr.bf16.mxu0 0
    %1606 = vmatmul.mubr.bf16.gmra.mrb[0].mxu0 %v1529
    %v1607 = vpop.f32.mrb[0].mxu0
    %v1608 = vadd.f32 0.0, %v1607
    %v1609 = vpop.f32.mrb[0].mxu0
    %v1610 = vpop.f32.mrb[0].mxu0
    %v1611 = vadd.f32 0.0, %v1610
    %v1612 = vpop.f32.mrb[0].mxu0
    %1613 = vdwg.mxu0
    %v1614 = vld [vmem:[#allocation2 + $0x30] sm:$0xff]
    %v1615 = vld [vmem:[#allocation2 + $0x38] sm:$0xff]
    %v1616 = vld [vmem:[#allocation2 + $0x40] sm:$0xff]
    %v1617 = vld [vmem:[#allocation2 + $0x48] sm:$0xff]
    %v1618 = vld [vmem:[#allocation2 + $0x50] sm:$0xff]
    %v1619 = vld [vmem:[#allocation2 + $0x58] sm:$0xff]
    %v1620 = vadd.f32 %v1614, %v1480
    %v1621 = vadd.f32 %v1617, %v1484
    %v1622 = vxor.u32 %v1620, 2147483648
    %v1623 = vxor.u32 %v1621, 2147483648
    %v1624 = vmul.f32 %v1622, 1.442695
    %v1625 = vpow.pop %v1624
    %v1626 = vmul.f32 %v1623, 1.442695
    %v1627 = vpow.pop %v1626
    %v1628 = vadd.f32 %v1625, 1.0
    %v1629 = vadd.f32 %v1627, 1.0
    %v1630 = vrcp.pop %v1628
    %v1631 = vmul.f32 1.0, %v1630
    %v1632 = vrcp.pop %v1629
    %v1633 = vmul.f32 1.0, %v1632
    %v1634 = vadd.f32 %v1615, %v1482
    %v1635 = vadd.f32 %v1618, %v1486
    %v1636 = vxor.u32 %v1634, 2147483648
    %v1637 = vxor.u32 %v1635, 2147483648
    %v1638 = vmul.f32 %v1636, 1.442695
    %v1639 = vpow.pop %v1638
    %v1640 = vmul.f32 %v1637, 1.442695
    %v1641 = vpow.pop %v1640
    %v1642 = vadd.f32 %v1639, 1.0
    %v1643 = vadd.f32 %v1641, 1.0
    %v1644 = vrcp.pop %v1642
    %v1645 = vmul.f32 1.0, %v1644
    %v1646 = vrcp.pop %v1643
    %v1647 = vmul.f32 1.0, %v1646
    %v1648 = vadd.f32 %v1523, %v592
    %v1649 = vadd.f32 %v1526, %v592
    %v1650 = vmul.f32 %v1631, %v1648
    %v1651 = vmul.f32 %v1633, %v1649
    %v1652 = vadd.f32 %v1616, %v1650
    %v1653 = vadd.f32 %v1619, %v1651
    %v1654 = vtanh.pop %v1652
    %v1655 = vtanh.pop %v1653
    %v1656 = vsub.f32 1.0, %v1645
    %v1657 = vsub.f32 1.0, %v1647
    %v1658 = vmul.f32 %v1656, %v1654
    %v1659 = vmul.f32 %v1657, %v1655
    %v1660 = vmul.f32 %v1645, %v1154
    %v1661 = vmul.f32 %v1647, %v1155
    %v1662 = vadd.f32 %v1658, %v1660
    %v1663 = vadd.f32 %v1659, %v1661
    %v1664 = vpack.c.bf16 %v1663, %v1662
    %1665 = vmatprep.subr.bf16.mxu0 %v1270
    %1666 = vmatpush1.bf16.msra.mxu0 %v1269
    %1667 = vmatprep.subr.bf16.mxu0 %v1273
    %1668 = vmatpush1.bf16.msra.mxu0 %v1272
    %1669 = vmatprep.subr.bf16.mxu0 %v1276
    %1670 = vmatpush1.bf16.msra.mxu0 %v1275
    %1671 = vmatprep.subr.bf16.mxu0 %v1279
    %1672 = vmatpush1.bf16.msra.mxu0 %v1278
    %1673 = vmatprep.subr.bf16.mxu0 %v1282
    %1674 = vmatpush1.bf16.msra.mxu0 %v1281
    %1675 = vmatprep.subr.bf16.mxu0 %v1285
    %1676 = vmatpush1.bf16.msra.mxu0 %v1284
    %1677 = vmatprep.subr.bf16.mxu0 %v1288
    %1678 = vmatpush1.bf16.msra.mxu0 %v1287
    %1679 = vmatprep.subr.bf16.mxu0 %v1291
    %1680 = vmatpush1.bf16.msra.mxu0 %v1290
    %1681 = vmatprep.subr.bf16.mxu0 0
    %1682 = vmatpush1.bf16.msra.mxu0 0
    %1683 = vmatprep.subr.bf16.mxu0 0
    %1684 = vmatpush1.bf16.msra.mxu0 0
    %1685 = vmatprep.subr.bf16.mxu0 0
    %1686 = vmatpush1.bf16.msra.mxu0 0
    %1687 = vmatprep.subr.bf16.mxu0 0
    %1688 = vmatpush1.bf16.msra.mxu0 0
    %1689 = vmatprep.subr.bf16.mxu0 0
    %1690 = vmatpush1.bf16.msra.mxu0 0
    %1691 = vmatprep.subr.bf16.mxu0 0
    %1692 = vmatpush1.bf16.msra.mxu0 0
    %1693 = vmatprep.subr.bf16.mxu0 0
    %1694 = vmatpush1.bf16.msra.mxu0 0
    %1695 = vmatprep.subr.bf16.mxu0 0
    %1696 = vmatpush1.bf16.msra.mxu0 0
    %1697 = vmatprep.mubr.bf16.mxu0 0
    %1698 = vmatmul.mubr.bf16.gmra.mrb[0].mxu0 %v1664
    %v1699 = vpop.f32.mrb[0].mxu0
    %v1700 = vadd.f32 %v599, %v1699
    %v1701 = vpop.f32.mrb[0].mxu0
    %v1702 = vadd.f32 %v603, %v1701
    %v1703 = vpop.f32.mrb[0].mxu0
    %v1704 = vadd.f32 %v599, %v1703
    %v1705 = vpop.f32.mrb[0].mxu0
    %v1706 = vadd.f32 %v603, %v1705
    %1707 = vdwg.mxu0
    %1708 = vmatprep.subr.bf16.mxu0 0
    %1709 = vmatpush1.bf16.msra.mxu0 %v1271
    %1710 = vmatprep.subr.bf16.mxu0 0
    %1711 = vmatpush1.bf16.msra.mxu0 %v1274
    %1712 = vmatprep.subr.bf16.mxu0 0
    %1713 = vmatpush1.bf16.msra.mxu0 %v1277
    %1714 = vmatprep.subr.bf16.mxu0 0
    %1715 = vmatpush1.bf16.msra.mxu0 %v1280
    %1716 = vmatprep.subr.bf16.mxu0 0
    %1717 = vmatpush1.bf16.msra.mxu0 %v1283
    %1718 = vmatprep.subr.bf16.mxu0 0
    %1719 = vmatpush1.bf16.msra.mxu0 %v1286
    %1720 = vmatprep.subr.bf16.mxu0 0
    %1721 = vmatpush1.bf16.msra.mxu0 %v1289
    %1722 = vmatprep.subr.bf16.mxu0 0
    %1723 = vmatpush1.bf16.msra.mxu0 %v1292
    %1724 = vmatprep.subr.bf16.mxu0 0
    %1725 = vmatpush1.bf16.msra.mxu0 0
    %1726 = vmatprep.subr.bf16.mxu0 0
    %1727 = vmatpush1.bf16.msra.mxu0 0
    %1728 = vmatprep.subr.bf16.mxu0 0
    %1729 = vmatpush1.bf16.msra.mxu0 0
    %1730 = vmatprep.subr.bf16.mxu0 0
    %1731 = vmatpush1.bf16.msra.mxu0 0
    %1732 = vmatprep.subr.bf16.mxu0 0
    %1733 = vmatpush1.bf16.msra.mxu0 0
    %1734 = vmatprep.subr.bf16.mxu0 0
    %1735 = vmatpush1.bf16.msra.mxu0 0
    %1736 = vmatprep.subr.bf16.mxu0 0
    %1737 = vmatpush1.bf16.msra.mxu0 0
    %1738 = vmatprep.subr.bf16.mxu0 0
    %1739 = vmatpush1.bf16.msra.mxu0 0
    %1740 = vmatprep.mubr.bf16.mxu0 0
    %1741 = vmatmul.mubr.bf16.gmra.mrb[0].mxu0 %v1664
    %v1742 = vpop.f32.mrb[0].mxu0
    %v1743 = vadd.f32 %v607, %v1742
    %v1744 = vpop.f32.mrb[0].mxu0
    %v1745 = vpop.f32.mrb[0].mxu0
    %v1746 = vadd.f32 %v607, %v1745
    %v1747 = vpop.f32.mrb[0].mxu0
    %1748 = vdwg.mxu0
    %v1749 = vadd.f32 %v1700, %v1565
    %v1750 = vadd.f32 %v1704, %v1569
    %v1751 = vxor.u32 %v1749, 2147483648
    %v1752 = vxor.u32 %v1750, 2147483648
    %v1753 = vmul.f32 %v1751, 1.442695
    %v1754 = vpow.pop %v1753
    %v1755 = vmul.f32 %v1752, 1.442695
    %v1756 = vpow.pop %v1755
    %v1757 = vadd.f32 %v1754, 1.0
    %v1758 = vadd.f32 %v1756, 1.0
    %v1759 = vrcp.pop %v1757
    %v1760 = vmul.f32 1.0, %v1759
    %v1761 = vrcp.pop %v1758
    %v1762 = vmul.f32 1.0, %v1761
    %v1763 = vadd.f32 %v1702, %v1567
    %v1764 = vadd.f32 %v1706, %v1571
    %v1765 = vxor.u32 %v1763, 2147483648
    %v1766 = vxor.u32 %v1764, 2147483648
    %v1767 = vmul.f32 %v1765, 1.442695
    %v1768 = vpow.pop %v1767
    %v1769 = vmul.f32 %v1766, 1.442695
    %v1770 = vpow.pop %v1769
    %v1771 = vadd.f32 %v1768, 1.0
    %v1772 = vadd.f32 %v1770, 1.0
    %v1773 = vrcp.pop %v1771
    %v1774 = vmul.f32 1.0, %v1773
    %v1775 = vrcp.pop %v1772
    %v1776 = vmul.f32 1.0, %v1775
    %v1777 = vadd.f32 %v1608, %v616
    %v1778 = vadd.f32 %v1611, %v616
    %v1779 = vmul.f32 %v1760, %v1777
    %v1780 = vmul.f32 %v1762, %v1778
    %v1781 = vadd.f32 %v1743, %v1779
    %v1782 = vadd.f32 %v1746, %v1780
    %v1783 = vtanh.pop %v1781
    %v1784 = vtanh.pop %v1782
    %v1785 = vsub.f32 1.0, %v1774
    %v1786 = vsub.f32 1.0, %v1776
    %v1787 = vmul.f32 %v1785, %v1783
    %v1788 = vmul.f32 %v1786, %v1784
    %v1789 = vmul.f32 %v1774, %v1443
    %v1790 = vmul.f32 %v1776, %v1444
    %v1791 = vadd.f32 %v1787, %v1789
    %v1792 = vadd.f32 %v1788, %v1790
    %1793 = vmatprep.subr.bf16.mxu0 %v731
    %1794 = vmatpush1.bf16.msra.mxu0 %v730
    %1795 = vmatprep.subr.bf16.mxu0 %v734
    %1796 = vmatpush1.bf16.msra.mxu0 %v733
    %1797 = vmatprep.subr.bf16.mxu0 %v737
    %1798 = vmatpush1.bf16.msra.mxu0 %v736
    %1799 = vmatprep.subr.bf16.mxu0 %v740
    %1800 = vmatpush1.bf16.msra.mxu0 %v739
    %1801 = vmatprep.subr.bf16.mxu0 %v743
    %1802 = vmatpush1.bf16.msra.mxu0 %v742
    %1803 = vmatprep.subr.bf16.mxu0 %v746
    %1804 = vmatpush1.bf16.msra.mxu0 %v745
    %1805 = vmatprep.subr.bf16.mxu0 %v749
    %1806 = vmatpush1.bf16.msra.mxu0 %v748
    %1807 = vmatprep.subr.bf16.mxu0 %v752
    %1808 = vmatpush1.bf16.msra.mxu0 %v751
    %1809 = vmatprep.subr.bf16.mxu0 0
    %1810 = vmatpush1.bf16.msra.mxu0 0
    %1811 = vmatprep.subr.bf16.mxu0 0
    %1812 = vmatpush1.bf16.msra.mxu0 0
    %1813 = vmatprep.subr.bf16.mxu0 0
    %1814 = vmatpush1.bf16.msra.mxu0 0
    %1815 = vmatprep.subr.bf16.mxu0 0
    %1816 = vmatpush1.bf16.msra.mxu0 0
    %1817 = vmatprep.subr.bf16.mxu0 0
    %1818 = vmatpush1.bf16.msra.mxu0 0
    %1819 = vmatprep.subr.bf16.mxu0 0
    %1820 = vmatpush1.bf16.msra.mxu0 0
    %1821 = vmatprep.subr.bf16.mxu0 0
    %1822 = vmatpush1.bf16.msra.mxu0 0
    %1823 = vmatprep.subr.bf16.mxu0 0
    %1824 = vmatpush1.bf16.msra.mxu0 0
    %1825 = vmatprep.mubr.bf16.mxu0 0
    %1826 = vmatmul.mubr.bf16.gmra.mrb[0].mxu0 %v1664
    %v1827 = vpop.f32.mrb[0].mxu0
    %v1828 = vadd.f32 0.0, %v1827
    %v1829 = vpop.f32.mrb[0].mxu0
    %v1830 = vadd.f32 0.0, %v1829
    %v1831 = vpop.f32.mrb[0].mxu0
    %v1832 = vadd.f32 0.0, %v1831
    %v1833 = vpop.f32.mrb[0].mxu0
    %v1834 = vadd.f32 0.0, %v1833
    %1835 = vdwg.mxu0
    %1836 = vmatprep.subr.bf16.mxu0 0
    %1837 = vmatpush1.bf16.msra.mxu0 %v732
    %1838 = vmatprep.subr.bf16.mxu0 0
    %1839 = vmatpush1.bf16.msra.mxu0 %v735
    %1840 = vmatprep.subr.bf16.mxu0 0
    %1841 = vmatpush1.bf16.msra.mxu0 %v738
    %1842 = vmatprep.subr.bf16.mxu0 0
    %1843 = vmatpush1.bf16.msra.mxu0 %v741
    %1844 = vmatprep.subr.bf16.mxu0 0
    %1845 = vmatpush1.bf16.msra.mxu0 %v744
    %1846 = vmatprep.subr.bf16.mxu0 0
    %1847 = vmatpush1.bf16.msra.mxu0 %v747
    %1848 = vmatprep.subr.bf16.mxu0 0
    %1849 = vmatpush1.bf16.msra.mxu0 %v750
    %1850 = vmatprep.subr.bf16.mxu0 0
    %1851 = vmatpush1.bf16.msra.mxu0 %v753
    %1852 = vmatprep.subr.bf16.mxu0 0
    %1853 = vmatpush1.bf16.msra.mxu0 0
    %1854 = vmatprep.subr.bf16.mxu0 0
    %1855 = vmatpush1.bf16.msra.mxu0 0
    %1856 = vmatprep.subr.bf16.mxu0 0
    %1857 = vmatpush1.bf16.msra.mxu0 0
    %1858 = vmatprep.subr.bf16.mxu0 0
    %1859 = vmatpush1.bf16.msra.mxu0 0
    %1860 = vmatprep.subr.bf16.mxu0 0
    %1861 = vmatpush1.bf16.msra.mxu0 0
    %1862 = vmatprep.subr.bf16.mxu0 0
    %1863 = vmatpush1.bf16.msra.mxu0 0
    %1864 = vmatprep.subr.bf16.mxu0 0
    %1865 = vmatpush1.bf16.msra.mxu0 0
    %1866 = vmatprep.subr.bf16.mxu0 0
    %1867 = vmatpush1.bf16.msra.mxu0 0
    %1868 = vmatprep.mubr.bf16.mxu0 0
    %1869 = vmatmul.mubr.bf16.gmra.mrb[0].mxu0 %v1664
    %v1870 = vpop.f32.mrb[0].mxu0
    %v1871 = vadd.f32 0.0, %v1870
    %v1872 = vpop.f32.mrb[0].mxu0
    %v1873 = vpop.f32.mrb[0].mxu0
    %v1874 = vadd.f32 0.0, %v1873
    %v1875 = vpop.f32.mrb[0].mxu0
    %1876 = vdwg.mxu0
    %v1877 = vpack.c.bf16 %v1792, %v1791
    %1878 = vmatprep.subr.bf16.mxu0 %v975
    %1879 = vmatpush1.bf16.msra.mxu0 %v974
    %1880 = vmatprep.subr.bf16.mxu0 %v978
    %1881 = vmatpush1.bf16.msra.mxu0 %v977
    %1882 = vmatprep.subr.bf16.mxu0 %v981
    %1883 = vmatpush1.bf16.msra.mxu0 %v980
    %1884 = vmatprep.subr.bf16.mxu0 %v984
    %1885 = vmatpush1.bf16.msra.mxu0 %v983
    %1886 = vmatprep.subr.bf16.mxu0 %v987
    %1887 = vmatpush1.bf16.msra.mxu0 %v986
    %1888 = vmatprep.subr.bf16.mxu0 %v990
    %1889 = vmatpush1.bf16.msra.mxu0 %v989
    %1890 = vmatprep.subr.bf16.mxu0 %v993
    %1891 = vmatpush1.bf16.msra.mxu0 %v992
    %1892 = vmatprep.subr.bf16.mxu0 %v996
    %1893 = vmatpush1.bf16.msra.mxu0 %v995
    %1894 = vmatprep.subr.bf16.mxu0 0
    %1895 = vmatpush1.bf16.msra.mxu0 0
    %1896 = vmatprep.subr.bf16.mxu0 0
    %1897 = vmatpush1.bf16.msra.mxu0 0
    %1898 = vmatprep.subr.bf16.mxu0 0
    %1899 = vmatpush1.bf16.msra.mxu0 0
    %1900 = vmatprep.subr.bf16.mxu0 0
    %1901 = vmatpush1.bf16.msra.mxu0 0
    %1902 = vmatprep.subr.bf16.mxu0 0
    %1903 = vmatpush1.bf16.msra.mxu0 0
    %1904 = vmatprep.subr.bf16.mxu0 0
    %1905 = vmatpush1.bf16.msra.mxu0 0
    %1906 = vmatprep.subr.bf16.mxu0 0
    %1907 = vmatpush1.bf16.msra.mxu0 0
    %1908 = vmatprep.subr.bf16.mxu0 0
    %1909 = vmatpush1.bf16.msra.mxu0 0
    %1910 = vmatprep.mubr.bf16.mxu0 0
    %1911 = vmatmul.mubr.bf16.gmra.mrb[0].mxu0 %v1877
    %v1912 = vpop.f32.mrb[0].mxu0
    %v1913 = vadd.f32 0.0, %v1912
    %v1914 = vpop.f32.mrb[0].mxu0
    %v1915 = vadd.f32 0.0, %v1914
    %v1916 = vpop.f32.mrb[0].mxu0
    %v1917 = vadd.f32 0.0, %v1916
    %v1918 = vpop.f32.mrb[0].mxu0
    %v1919 = vadd.f32 0.0, %v1918
    %1920 = vdwg.mxu0
    %1921 = vmatprep.subr.bf16.mxu0 0
    %1922 = vmatpush1.bf16.msra.mxu0 %v976
    %1923 = vmatprep.subr.bf16.mxu0 0
    %1924 = vmatpush1.bf16.msra.mxu0 %v979
    %1925 = vmatprep.subr.bf16.mxu0 0
    %1926 = vmatpush1.bf16.msra.mxu0 %v982
    %1927 = vmatprep.subr.bf16.mxu0 0
    %1928 = vmatpush1.bf16.msra.mxu0 %v985
    %1929 = vmatprep.subr.bf16.mxu0 0
    %1930 = vmatpush1.bf16.msra.mxu0 %v988
    %1931 = vmatprep.subr.bf16.mxu0 0
    %1932 = vmatpush1.bf16.msra.mxu0 %v991
    %1933 = vmatprep.subr.bf16.mxu0 0
    %1934 = vmatpush1.bf16.msra.mxu0 %v994
    %1935 = vmatprep.subr.bf16.mxu0 0
    %1936 = vmatpush1.bf16.msra.mxu0 %v997
    %1937 = vmatprep.subr.bf16.mxu0 0
    %1938 = vmatpush1.bf16.msra.mxu0 0
    %1939 = vmatprep.subr.bf16.mxu0 0
    %1940 = vmatpush1.bf16.msra.mxu0 0
    %1941 = vmatprep.subr.bf16.mxu0 0
    %1942 = vmatpush1.bf16.msra.mxu0 0
    %1943 = vmatprep.subr.bf16.mxu0 0
    %1944 = vmatpush1.bf16.msra.mxu0 0
    %1945 = vmatprep.subr.bf16.mxu0 0
    %1946 = vmatpush1.bf16.msra.mxu0 0
    %1947 = vmatprep.subr.bf16.mxu0 0
    %1948 = vmatpush1.bf16.msra.mxu0 0
    %1949 = vmatprep.subr.bf16.mxu0 0
    %1950 = vmatpush1.bf16.msra.mxu0 0
    %1951 = vmatprep.subr.bf16.mxu0 0
    %1952 = vmatpush1.bf16.msra.mxu0 0
    %1953 = vmatprep.mubr.bf16.mxu0 0
    %1954 = vmatmul.mubr.bf16.gmra.mrb[0].mxu0 %v1877
    %v1955 = vpop.f32.mrb[0].mxu0
    %v1956 = vadd.f32 0.0, %v1955
    %v1957 = vpop.f32.mrb[0].mxu0
    %v1958 = vpop.f32.mrb[0].mxu0
    %v1959 = vadd.f32 0.0, %v1958
    %v1960 = vpop.f32.mrb[0].mxu0
    %1961 = vdwg.mxu0
    %v1962 = vld [vmem:[#allocation2 + $0x60] sm:$0xff]
    %v1963 = vld [vmem:[#allocation2 + $0x68] sm:$0xff]
    %v1964 = vld [vmem:[#allocation2 + $0x70] sm:$0xff]
    %v1965 = vld [vmem:[#allocation2 + $0x78] sm:$0xff]
    %v1966 = vld [vmem:[#allocation2 + $0x80] sm:$0xff]
    %v1967 = vld [vmem:[#allocation2 + $0x88] sm:$0xff]
    %v1968 = vadd.f32 %v1962, %v1828
    %v1969 = vadd.f32 %v1965, %v1832
    %v1970 = vxor.u32 %v1968, 2147483648
    %v1971 = vxor.u32 %v1969, 2147483648
    %v1972 = vmul.f32 %v1970, 1.442695
    %v1973 = vpow.pop %v1972
    %v1974 = vmul.f32 %v1971, 1.442695
    %v1975 = vpow.pop %v1974
    %v1976 = vadd.f32 %v1973, 1.0
    %v1977 = vadd.f32 %v1975, 1.0
    %v1978 = vrcp.pop %v1976
    %v1979 = vmul.f32 1.0, %v1978
    %v1980 = vrcp.pop %v1977
    %v1981 = vmul.f32 1.0, %v1980
    %v1982 = vadd.f32 %v1963, %v1830
    %v1983 = vadd.f32 %v1966, %v1834
    %v1984 = vxor.u32 %v1982, 2147483648
    %v1985 = vxor.u32 %v1983, 2147483648
    %v1986 = vmul.f32 %v1984, 1.442695
    %v1987 = vpow.pop %v1986
    %v1988 = vmul.f32 %v1985, 1.442695
    %v1989 = vpow.pop %v1988
    %v1990 = vadd.f32 %v1987, 1.0
    %v1991 = vadd.f32 %v1989, 1.0
    %v1992 = vrcp.pop %v1990
    %v1993 = vmul.f32 1.0, %v1992
    %v1994 = vrcp.pop %v1991
    %v1995 = vmul.f32 1.0, %v1994
    %v1996 = vadd.f32 %v1871, %v592
    %v1997 = vadd.f32 %v1874, %v592
    %v1998 = vmul.f32 %v1979, %v1996
    %v1999 = vmul.f32 %v1981, %v1997
    %v2000 = vadd.f32 %v1964, %v1998
    %v2001 = vadd.f32 %v1967, %v1999
    %v2002 = vtanh.pop %v2000
    %v2003 = vtanh.pop %v2001
    %v2004 = vsub.f32 1.0, %v1993
    %v2005 = vsub.f32 1.0, %v1995
    %v2006 = vmul.f32 %v2004, %v2002
    %v2007 = vmul.f32 %v2005, %v2003
    %v2008 = vmul.f32 %v1993, %v1662
    %v2009 = vmul.f32 %v1995, %v1663
    %v2010 = vadd.f32 %v2006, %v2008
    %v2011 = vadd.f32 %v2007, %v2009
    %v2012 = vpack.c.bf16 %v2011, %v2010
    %2013 = vmatprep.subr.bf16.mxu0 %v1270
    %2014 = vmatpush1.bf16.msra.mxu0 %v1269
    %2015 = vmatprep.subr.bf16.mxu0 %v1273
    %2016 = vmatpush1.bf16.msra.mxu0 %v1272
    %2017 = vmatprep.subr.bf16.mxu0 %v1276
    %2018 = vmatpush1.bf16.msra.mxu0 %v1275
    %2019 = vmatprep.subr.bf16.mxu0 %v1279
    %2020 = vmatpush1.bf16.msra.mxu0 %v1278
    %2021 = vmatprep.subr.bf16.mxu0 %v1282
    %2022 = vmatpush1.bf16.msra.mxu0 %v1281
    %2023 = vmatprep.subr.bf16.mxu0 %v1285
    %2024 = vmatpush1.bf16.msra.mxu0 %v1284
    %2025 = vmatprep.subr.bf16.mxu0 %v1288
    %2026 = vmatpush1.bf16.msra.mxu0 %v1287
    %2027 = vmatprep.subr.bf16.mxu0 %v1291
    %2028 = vmatpush1.bf16.msra.mxu0 %v1290
    %2029 = vmatprep.subr.bf16.mxu0 0
    %2030 = vmatpush1.bf16.msra.mxu0 0
    %2031 = vmatprep.subr.bf16.mxu0 0
    %2032 = vmatpush1.bf16.msra.mxu0 0
    %2033 = vmatprep.subr.bf16.mxu0 0
    %2034 = vmatpush1.bf16.msra.mxu0 0
    %2035 = vmatprep.subr.bf16.mxu0 0
    %2036 = vmatpush1.bf16.msra.mxu0 0
    %2037 = vmatprep.subr.bf16.mxu0 0
    %2038 = vmatpush1.bf16.msra.mxu0 0
    %2039 = vmatprep.subr.bf16.mxu0 0
    %2040 = vmatpush1.bf16.msra.mxu0 0
    %2041 = vmatprep.subr.bf16.mxu0 0
    %2042 = vmatpush1.bf16.msra.mxu0 0
    %2043 = vmatprep.subr.bf16.mxu0 0
    %2044 = vmatpush1.bf16.msra.mxu0 0
    %2045 = vmatprep.mubr.bf16.mxu0 0
    %2046 = vmatmul.mubr.bf16.gmra.mrb[0].mxu0 %v2012
    %v2047 = vpop.f32.mrb[0].mxu0
    %v2048 = vadd.f32 %v599, %v2047
    %v2049 = vpop.f32.mrb[0].mxu0
    %v2050 = vadd.f32 %v603, %v2049
    %v2051 = vpop.f32.mrb[0].mxu0
    %v2052 = vadd.f32 %v599, %v2051
    %v2053 = vpop.f32.mrb[0].mxu0
    %v2054 = vadd.f32 %v603, %v2053
    %2055 = vdwg.mxu0
    %2056 = vmatprep.subr.bf16.mxu0 0
    %2057 = vmatpush1.bf16.msra.mxu0 %v1271
    %2058 = vmatprep.subr.bf16.mxu0 0
    %2059 = vmatpush1.bf16.msra.mxu0 %v1274
    %2060 = vmatprep.subr.bf16.mxu0 0
    %2061 = vmatpush1.bf16.msra.mxu0 %v1277
    %2062 = vmatprep.subr.bf16.mxu0 0
    %2063 = vmatpush1.bf16.msra.mxu0 %v1280
    %2064 = vmatprep.subr.bf16.mxu0 0
    %2065 = vmatpush1.bf16.msra.mxu0 %v1283
    %2066 = vmatprep.subr.bf16.mxu0 0
    %2067 = vmatpush1.bf16.msra.mxu0 %v1286
    %2068 = vmatprep.subr.bf16.mxu0 0
    %2069 = vmatpush1.bf16.msra.mxu0 %v1289
    %2070 = vmatprep.subr.bf16.mxu0 0
    %2071 = vmatpush1.bf16.msra.mxu0 %v1292
    %2072 = vmatprep.subr.bf16.mxu0 0
    %2073 = vmatpush1.bf16.msra.mxu0 0
    %2074 = vmatprep.subr.bf16.mxu0 0
    %2075 = vmatpush1.bf16.msra.mxu0 0
    %2076 = vmatprep.subr.bf16.mxu0 0
    %2077 = vmatpush1.bf16.msra.mxu0 0
    %2078 = vmatprep.subr.bf16.mxu0 0
    %2079 = vmatpush1.bf16.msra.mxu0 0
    %2080 = vmatprep.subr.bf16.mxu0 0
    %2081 = vmatpush1.bf16.msra.mxu0 0
    %2082 = vmatprep.subr.bf16.mxu0 0
    %2083 = vmatpush1.bf16.msra.mxu0 0
    %2084 = vmatprep.subr.bf16.mxu0 0
    %2085 = vmatpush1.bf16.msra.mxu0 0
    %2086 = vmatprep.subr.bf16.mxu0 0
    %2087 = vmatpush1.bf16.msra.mxu0 0
    %2088 = vmatprep.mubr.bf16.mxu0 0
    %2089 = vmatmul.mubr.bf16.gmra.mrb[0].mxu0 %v2012
    %v2090 = vpop.f32.mrb[0].mxu0
    %v2091 = vadd.f32 %v607, %v2090
    %v2092 = vpop.f32.mrb[0].mxu0
    %v2093 = vpop.f32.mrb[0].mxu0
    %v2094 = vadd.f32 %v607, %v2093
    %v2095 = vpop.f32.mrb[0].mxu0
    %2096 = vdwg.mxu0
    %v2097 = vadd.f32 %v2048, %v1913
    %v2098 = vadd.f32 %v2052, %v1917
    %v2099 = vxor.u32 %v2097, 2147483648
    %v2100 = vxor.u32 %v2098, 2147483648
    %v2101 = vmul.f32 %v2099, 1.442695
    %v2102 = vpow.pop %v2101
    %v2103 = vmul.f32 %v2100, 1.442695
    %v2104 = vpow.pop %v2103
    %v2105 = vadd.f32 %v2102, 1.0
    %v2106 = vadd.f32 %v2104, 1.0
    %v2107 = vrcp.pop %v2105
    %v2108 = vmul.f32 1.0, %v2107
    %v2109 = vrcp.pop %v2106
    %v2110 = vmul.f32 1.0, %v2109
    %v2111 = vadd.f32 %v2050, %v1915
    %v2112 = vadd.f32 %v2054, %v1919
    %v2113 = vxor.u32 %v2111, 2147483648
    %v2114 = vxor.u32 %v2112, 2147483648
    %v2115 = vmul.f32 %v2113, 1.442695
    %v2116 = vpow.pop %v2115
    %v2117 = vmul.f32 %v2114, 1.442695
    %v2118 = vpow.pop %v2117
    %v2119 = vadd.f32 %v2116, 1.0
    %v2120 = vadd.f32 %v2118, 1.0
    %v2121 = vrcp.pop %v2119
    %v2122 = vmul.f32 1.0, %v2121
    %v2123 = vrcp.pop %v2120
    %v2124 = vmul.f32 1.0, %v2123
    %v2125 = vadd.f32 %v1956, %v616
    %v2126 = vadd.f32 %v1959, %v616
    %v2127 = vmul.f32 %v2108, %v2125
    %v2128 = vmul.f32 %v2110, %v2126
    %v2129 = vadd.f32 %v2091, %v2127
    %v2130 = vadd.f32 %v2094, %v2128
    %v2131 = vtanh.pop %v2129
    %v2132 = vtanh.pop %v2130
    %v2133 = vsub.f32 1.0, %v2122
    %v2134 = vsub.f32 1.0, %v2124
    %v2135 = vmul.f32 %v2133, %v2131
    %v2136 = vmul.f32 %v2134, %v2132
    %v2137 = vmul.f32 %v2122, %v1791
    %v2138 = vmul.f32 %v2124, %v1792
    %v2139 = vadd.f32 %v2135, %v2137
    %v2140 = vadd.f32 %v2136, %v2138
    %2141 = vmatprep.subr.bf16.mxu0 %v731
    %2142 = vmatpush1.bf16.msra.mxu0 %v730
    %2143 = vmatprep.subr.bf16.mxu0 %v734
    %2144 = vmatpush1.bf16.msra.mxu0 %v733
    %2145 = vmatprep.subr.bf16.mxu0 %v737
    %2146 = vmatpush1.bf16.msra.mxu0 %v736
    %2147 = vmatprep.subr.bf16.mxu0 %v740
    %2148 = vmatpush1.bf16.msra.mxu0 %v739
    %2149 = vmatprep.subr.bf16.mxu0 %v743
    %2150 = vmatpush1.bf16.msra.mxu0 %v742
    %2151 = vmatprep.subr.bf16.mxu0 %v746
    %2152 = vmatpush1.bf16.msra.mxu0 %v745
    %2153 = vmatprep.subr.bf16.mxu0 %v749
    %2154 = vmatpush1.bf16.msra.mxu0 %v748
    %2155 = vmatprep.subr.bf16.mxu0 %v752
    %2156 = vmatpush1.bf16.msra.mxu0 %v751
    %2157 = vmatprep.subr.bf16.mxu0 0
    %2158 = vmatpush1.bf16.msra.mxu0 0
    %2159 = vmatprep.subr.bf16.mxu0 0
    %2160 = vmatpush1.bf16.msra.mxu0 0
    %2161 = vmatprep.subr.bf16.mxu0 0
    %2162 = vmatpush1.bf16.msra.mxu0 0
    %2163 = vmatprep.subr.bf16.mxu0 0
    %2164 = vmatpush1.bf16.msra.mxu0 0
    %2165 = vmatprep.subr.bf16.mxu0 0
    %2166 = vmatpush1.bf16.msra.mxu0 0
    %2167 = vmatprep.subr.bf16.mxu0 0
    %2168 = vmatpush1.bf16.msra.mxu0 0
    %2169 = vmatprep.subr.bf16.mxu0 0
    %2170 = vmatpush1.bf16.msra.mxu0 0
    %2171 = vmatprep.subr.bf16.mxu0 0
    %2172 = vmatpush1.bf16.msra.mxu0 0
    %2173 = vmatprep.mubr.bf16.mxu0 0
    %2174 = vmatmul.mubr.bf16.gmra.mrb[0].mxu0 %v2012
    %v2175 = vpop.f32.mrb[0].mxu0
    %v2176 = vadd.f32 0.0, %v2175
    %v2177 = vpop.f32.mrb[0].mxu0
    %v2178 = vadd.f32 0.0, %v2177
    %v2179 = vpop.f32.mrb[0].mxu0
    %v2180 = vadd.f32 0.0, %v2179
    %v2181 = vpop.f32.mrb[0].mxu0
    %v2182 = vadd.f32 0.0, %v2181
    %2183 = vdwg.mxu0
    %2184 = vmatprep.subr.bf16.mxu0 0
    %2185 = vmatpush1.bf16.msra.mxu0 %v732
    %2186 = vmatprep.subr.bf16.mxu0 0
    %2187 = vmatpush1.bf16.msra.mxu0 %v735
    %2188 = vmatprep.subr.bf16.mxu0 0
    %2189 = vmatpush1.bf16.msra.mxu0 %v738
    %2190 = vmatprep.subr.bf16.mxu0 0
    %2191 = vmatpush1.bf16.msra.mxu0 %v741
    %2192 = vmatprep.subr.bf16.mxu0 0
    %2193 = vmatpush1.bf16.msra.mxu0 %v744
    %2194 = vmatprep.subr.bf16.mxu0 0
    %2195 = vmatpush1.bf16.msra.mxu0 %v747
    %2196 = vmatprep.subr.bf16.mxu0 0
    %2197 = vmatpush1.bf16.msra.mxu0 %v750
    %2198 = vmatprep.subr.bf16.mxu0 0
    %2199 = vmatpush1.bf16.msra.mxu0 %v753
    %2200 = vmatprep.subr.bf16.mxu0 0
    %2201 = vmatpush1.bf16.msra.mxu0 0
    %2202 = vmatprep.subr.bf16.mxu0 0
    %2203 = vmatpush1.bf16.msra.mxu0 0
    %2204 = vmatprep.subr.bf16.mxu0 0
    %2205 = vmatpush1.bf16.msra.mxu0 0
    %2206 = vmatprep.subr.bf16.mxu0 0
    %2207 = vmatpush1.bf16.msra.mxu0 0
    %2208 = vmatprep.subr.bf16.mxu0 0
    %2209 = vmatpush1.bf16.msra.mxu0 0
    %2210 = vmatprep.subr.bf16.mxu0 0
    %2211 = vmatpush1.bf16.msra.mxu0 0
    %2212 = vmatprep.subr.bf16.mxu0 0
    %2213 = vmatpush1.bf16.msra.mxu0 0
    %2214 = vmatprep.subr.bf16.mxu0 0
    %2215 = vmatpush1.bf16.msra.mxu0 0
    %2216 = vmatprep.mubr.bf16.mxu0 0
    %2217 = vmatmul.mubr.bf16.gmra.mrb[0].mxu0 %v2012
    %v2218 = vpop.f32.mrb[0].mxu0
    %v2219 = vadd.f32 0.0, %v2218
    %v2220 = vpop.f32.mrb[0].mxu0
    %v2221 = vpop.f32.mrb[0].mxu0
    %v2222 = vadd.f32 0.0, %v2221
    %v2223 = vpop.f32.mrb[0].mxu0
    %2224 = vdwg.mxu0
    %v2225 = vpack.c.bf16 %v2140, %v2139
    %2226 = vmatprep.subr.bf16.mxu0 %v975
    %2227 = vmatpush1.bf16.msra.mxu0 %v974
    %2228 = vmatprep.subr.bf16.mxu0 %v978
    %2229 = vmatpush1.bf16.msra.mxu0 %v977
    %2230 = vmatprep.subr.bf16.mxu0 %v981
    %2231 = vmatpush1.bf16.msra.mxu0 %v980
    %2232 = vmatprep.subr.bf16.mxu0 %v984
    %2233 = vmatpush1.bf16.msra.mxu0 %v983
    %2234 = vmatprep.subr.bf16.mxu0 %v987
    %2235 = vmatpush1.bf16.msra.mxu0 %v986
    %2236 = vmatprep.subr.bf16.mxu0 %v990
    %2237 = vmatpush1.bf16.msra.mxu0 %v989
    %2238 = vmatprep.subr.bf16.mxu0 %v993
    %2239 = vmatpush1.bf16.msra.mxu0 %v992
    %2240 = vmatprep.subr.bf16.mxu0 %v996
    %2241 = vmatpush1.bf16.msra.mxu0 %v995
    %2242 = vmatprep.subr.bf16.mxu0 0
    %2243 = vmatpush1.bf16.msra.mxu0 0
    %2244 = vmatprep.subr.bf16.mxu0 0
    %2245 = vmatpush1.bf16.msra.mxu0 0
    %2246 = vmatprep.subr.bf16.mxu0 0
    %2247 = vmatpush1.bf16.msra.mxu0 0
    %2248 = vmatprep.subr.bf16.mxu0 0
    %2249 = vmatpush1.bf16.msra.mxu0 0
    %2250 = vmatprep.subr.bf16.mxu0 0
    %2251 = vmatpush1.bf16.msra.mxu0 0
    %2252 = vmatprep.subr.bf16.mxu0 0
    %2253 = vmatpush1.bf16.msra.mxu0 0
    %2254 = vmatprep.subr.bf16.mxu0 0
    %2255 = vmatpush1.bf16.msra.mxu0 0
    %2256 = vmatprep.subr.bf16.mxu0 0
    %2257 = vmatpush1.bf16.msra.mxu0 0
    %2258 = vmatprep.mubr.bf16.mxu0 0
    %2259 = vmatmul.mubr.bf16.gmra.mrb[0].mxu0 %v2225
    %v2260 = vpop.f32.mrb[0].mxu0
    %v2261 = vadd.f32 0.0, %v2260
    %v2262 = vpop.f32.mrb[0].mxu0
    %v2263 = vadd.f32 0.0, %v2262
    %v2264 = vpop.f32.mrb[0].mxu0
    %v2265 = vadd.f32 0.0, %v2264
    %v2266 = vpop.f32.mrb[0].mxu0
    %v2267 = vadd.f32 0.0, %v2266
    %2268 = vdwg.mxu0
    %2269 = vmatprep.subr.bf16.mxu0 0
    %2270 = vmatpush1.bf16.msra.mxu0 %v976
    %2271 = vmatprep.subr.bf16.mxu0 0
    %2272 = vmatpush1.bf16.msra.mxu0 %v979
    %2273 = vmatprep.subr.bf16.mxu0 0
    %2274 = vmatpush1.bf16.msra.mxu0 %v982
    %2275 = vmatprep.subr.bf16.mxu0 0
    %2276 = vmatpush1.bf16.msra.mxu0 %v985
    %2277 = vmatprep.subr.bf16.mxu0 0
    %2278 = vmatpush1.bf16.msra.mxu0 %v988
    %2279 = vmatprep.subr.bf16.mxu0 0
    %2280 = vmatpush1.bf16.msra.mxu0 %v991
    %2281 = vmatprep.subr.bf16.mxu0 0
    %2282 = vmatpush1.bf16.msra.mxu0 %v994
    %2283 = vmatprep.subr.bf16.mxu0 0
    %2284 = vmatpush1.bf16.msra.mxu0 %v997
    %2285 = vmatprep.subr.bf16.mxu0 0
    %2286 = vmatpush1.bf16.msra.mxu0 0
    %2287 = vmatprep.subr.bf16.mxu0 0
    %2288 = vmatpush1.bf16.msra.mxu0 0
    %2289 = vmatprep.subr.bf16.mxu0 0
    %2290 = vmatpush1.bf16.msra.mxu0 0
    %2291 = vmatprep.subr.bf16.mxu0 0
    %2292 = vmatpush1.bf16.msra.mxu0 0
    %2293 = vmatprep.subr.bf16.mxu0 0
    %2294 = vmatpush1.bf16.msra.mxu0 0
    %2295 = vmatprep.subr.bf16.mxu0 0
    %2296 = vmatpush1.bf16.msra.mxu0 0
    %2297 = vmatprep.subr.bf16.mxu0 0
    %2298 = vmatpush1.bf16.msra.mxu0 0
    %2299 = vmatprep.subr.bf16.mxu0 0
    %2300 = vmatpush1.bf16.msra.mxu0 0
    %2301 = vmatprep.mubr.bf16.mxu0 0
    %2302 = vmatmul.mubr.bf16.gmra.mrb[0].mxu0 %v2225
    %v2303 = vpop.f32.mrb[0].mxu0
    %v2304 = vadd.f32 0.0, %v2303
    %v2305 = vpop.f32.mrb[0].mxu0
    %v2306 = vpop.f32.mrb[0].mxu0
    %v2307 = vadd.f32 0.0, %v2306
    %v2308 = vpop.f32.mrb[0].mxu0
    %2309 = vdwg.mxu0
    %v2310 = vld [vmem:[#allocation2 + $0x90] sm:$0xff]
    %v2311 = vld [vmem:[#allocation2 + $0x98] sm:$0xff]
    %v2312 = vld [vmem:[#allocation2 + $0xa0] sm:$0xff]
    %v2313 = vld [vmem:[#allocation2 + $0xa8] sm:$0xff]
    %v2314 = vld [vmem:[#allocation2 + $0xb0] sm:$0xff]
    %v2315 = vld [vmem:[#allocation2 + $0xb8] sm:$0xff]
    %v2316 = vadd.f32 %v2310, %v2176
    %v2317 = vadd.f32 %v2313, %v2180
    %v2318 = vxor.u32 %v2316, 2147483648
    %v2319 = vxor.u32 %v2317, 2147483648
    %v2320 = vmul.f32 %v2318, 1.442695
    %v2321 = vpow.pop %v2320
    %v2322 = vmul.f32 %v2319, 1.442695
    %v2323 = vpow.pop %v2322
    %v2324 = vadd.f32 %v2321, 1.0
    %v2325 = vadd.f32 %v2323, 1.0
    %v2326 = vrcp.pop %v2324
    %v2327 = vmul.f32 1.0, %v2326
    %v2328 = vrcp.pop %v2325
    %v2329 = vmul.f32 1.0, %v2328
    %v2330 = vadd.f32 %v2311, %v2178
    %v2331 = vadd.f32 %v2314, %v2182
    %v2332 = vxor.u32 %v2330, 2147483648
    %v2333 = vxor.u32 %v2331, 2147483648
    %v2334 = vmul.f32 %v2332, 1.442695
    %v2335 = vpow.pop %v2334
    %v2336 = vmul.f32 %v2333, 1.442695
    %v2337 = vpow.pop %v2336
    %v2338 = vadd.f32 %v2335, 1.0
    %v2339 = vadd.f32 %v2337, 1.0
    %v2340 = vrcp.pop %v2338
    %v2341 = vmul.f32 1.0, %v2340
    %v2342 = vrcp.pop %v2339
    %v2343 = vmul.f32 1.0, %v2342
    %v2344 = vadd.f32 %v2219, %v592
    %v2345 = vadd.f32 %v2222, %v592
    %v2346 = vmul.f32 %v2327, %v2344
    %v2347 = vmul.f32 %v2329, %v2345
    %v2348 = vadd.f32 %v2312, %v2346
    %v2349 = vadd.f32 %v2315, %v2347
    %v2350 = vtanh.pop %v2348
    %v2351 = vtanh.pop %v2349
    %v2352 = vsub.f32 1.0, %v2341
    %v2353 = vsub.f32 1.0, %v2343
    %v2354 = vmul.f32 %v2352, %v2350
    %v2355 = vmul.f32 %v2353, %v2351
    %v2356 = vmul.f32 %v2341, %v2010
    %v2357 = vmul.f32 %v2343, %v2011
    %v2358 = vadd.f32 %v2354, %v2356
    %v2359 = vadd.f32 %v2355, %v2357
    %v2360 = vpack.c.bf16 %v2359, %v2358
    %2361 = vmatprep.subr.bf16.mxu0 %v1270
    %2362 = vmatpush1.bf16.msra.mxu0 %v1269
    %2363 = vmatprep.subr.bf16.mxu0 %v1273
    %2364 = vmatpush1.bf16.msra.mxu0 %v1272
    %2365 = vmatprep.subr.bf16.mxu0 %v1276
    %2366 = vmatpush1.bf16.msra.mxu0 %v1275
    %2367 = vmatprep.subr.bf16.mxu0 %v1279
    %2368 = vmatpush1.bf16.msra.mxu0 %v1278
    %2369 = vmatprep.subr.bf16.mxu0 %v1282
    %2370 = vmatpush1.bf16.msra.mxu0 %v1281
    %2371 = vmatprep.subr.bf16.mxu0 %v1285
    %2372 = vmatpush1.bf16.msra.mxu0 %v1284
    %2373 = vmatprep.subr.bf16.mxu0 %v1288
    %2374 = vmatpush1.bf16.msra.mxu0 %v1287
    %2375 = vmatprep.subr.bf16.mxu0 %v1291
    %2376 = vmatpush1.bf16.msra.mxu0 %v1290
    %2377 = vmatprep.subr.bf16.mxu0 0
    %2378 = vmatpush1.bf16.msra.mxu0 0
    %2379 = vmatprep.subr.bf16.mxu0 0
    %2380 = vmatpush1.bf16.msra.mxu0 0
    %2381 = vmatprep.subr.bf16.mxu0 0
    %2382 = vmatpush1.bf16.msra.mxu0 0
    %2383 = vmatprep.subr.bf16.mxu0 0
    %2384 = vmatpush1.bf16.msra.mxu0 0
    %2385 = vmatprep.subr.bf16.mxu0 0
    %2386 = vmatpush1.bf16.msra.mxu0 0
    %2387 = vmatprep.subr.bf16.mxu0 0
    %2388 = vmatpush1.bf16.msra.mxu0 0
    %2389 = vmatprep.subr.bf16.mxu0 0
    %2390 = vmatpush1.bf16.msra.mxu0 0
    %2391 = vmatprep.subr.bf16.mxu0 0
    %2392 = vmatpush1.bf16.msra.mxu0 0
    %2393 = vmatprep.mubr.bf16.mxu0 0
    %2394 = vmatmul.mubr.bf16.gmra.mrb[0].mxu0 %v2360
    %v2395 = vpop.f32.mrb[0].mxu0
    %v2396 = vadd.f32 %v599, %v2395
    %v2397 = vpop.f32.mrb[0].mxu0
    %v2398 = vadd.f32 %v603, %v2397
    %v2399 = vpop.f32.mrb[0].mxu0
    %v2400 = vadd.f32 %v599, %v2399
    %v2401 = vpop.f32.mrb[0].mxu0
    %v2402 = vadd.f32 %v603, %v2401
    %2403 = vdwg.mxu0
    %2404 = vmatprep.subr.bf16.mxu0 0
    %2405 = vmatpush1.bf16.msra.mxu0 %v1271
    %2406 = vmatprep.subr.bf16.mxu0 0
    %2407 = vmatpush1.bf16.msra.mxu0 %v1274
    %2408 = vmatprep.subr.bf16.mxu0 0
    %2409 = vmatpush1.bf16.msra.mxu0 %v1277
    %2410 = vmatprep.subr.bf16.mxu0 0
    %2411 = vmatpush1.bf16.msra.mxu0 %v1280
    %2412 = vmatprep.subr.bf16.mxu0 0
    %2413 = vmatpush1.bf16.msra.mxu0 %v1283
    %2414 = vmatprep.subr.bf16.mxu0 0
    %2415 = vmatpush1.bf16.msra.mxu0 %v1286
    %2416 = vmatprep.subr.bf16.mxu0 0
    %2417 = vmatpush1.bf16.msra.mxu0 %v1289
    %2418 = vmatprep.subr.bf16.mxu0 0
    %2419 = vmatpush1.bf16.msra.mxu0 %v1292
    %2420 = vmatprep.subr.bf16.mxu0 0
    %2421 = vmatpush1.bf16.msra.mxu0 0
    %2422 = vmatprep.subr.bf16.mxu0 0
    %2423 = vmatpush1.bf16.msra.mxu0 0
    %2424 = vmatprep.subr.bf16.mxu0 0
    %2425 = vmatpush1.bf16.msra.mxu0 0
    %2426 = vmatprep.subr.bf16.mxu0 0
    %2427 = vmatpush1.bf16.msra.mxu0 0
    %2428 = vmatprep.subr.bf16.mxu0 0
    %2429 = vmatpush1.bf16.msra.mxu0 0
    %2430 = vmatprep.subr.bf16.mxu0 0
    %2431 = vmatpush1.bf16.msra.mxu0 0
    %2432 = vmatprep.subr.bf16.mxu0 0
    %2433 = vmatpush1.bf16.msra.mxu0 0
    %2434 = vmatprep.subr.bf16.mxu0 0
    %2435 = vmatpush1.bf16.msra.mxu0 0
    %2436 = vmatprep.mubr.bf16.mxu0 0
    %2437 = vmatmul.mubr.bf16.gmra.mrb[0].mxu0 %v2360
    %v2438 = vpop.f32.mrb[0].mxu0
    %v2439 = vadd.f32 %v607, %v2438
    %v2440 = vpop.f32.mrb[0].mxu0
    %v2441 = vpop.f32.mrb[0].mxu0
    %v2442 = vadd.f32 %v607, %v2441
    %v2443 = vpop.f32.mrb[0].mxu0
    %2444 = vdwg.mxu0
    %v2445 = vadd.f32 %v2396, %v2261
    %v2446 = vadd.f32 %v2400, %v2265
    %v2447 = vxor.u32 %v2445, 2147483648
    %v2448 = vxor.u32 %v2446, 2147483648
    %v2449 = vmul.f32 %v2447, 1.442695
    %v2450 = vpow.pop %v2449
    %v2451 = vmul.f32 %v2448, 1.442695
    %v2452 = vpow.pop %v2451
    %v2453 = vadd.f32 %v2450, 1.0
    %v2454 = vadd.f32 %v2452, 1.0
    %v2455 = vrcp.pop %v2453
    %v2456 = vmul.f32 1.0, %v2455
    %v2457 = vrcp.pop %v2454
    %v2458 = vmul.f32 1.0, %v2457
    %v2459 = vadd.f32 %v2398, %v2263
    %v2460 = vadd.f32 %v2402, %v2267
    %v2461 = vxor.u32 %v2459, 2147483648
    %v2462 = vxor.u32 %v2460, 2147483648
    %v2463 = vmul.f32 %v2461, 1.442695
    %v2464 = vpow.pop %v2463
    %v2465 = vmul.f32 %v2462, 1.442695
    %v2466 = vpow.pop %v2465
    %v2467 = vadd.f32 %v2464, 1.0
    %v2468 = vadd.f32 %v2466, 1.0
    %v2469 = vrcp.pop %v2467
    %v2470 = vmul.f32 1.0, %v2469
    %v2471 = vrcp.pop %v2468
    %v2472 = vmul.f32 1.0, %v2471
    %v2473 = vadd.f32 %v2304, %v616
    %v2474 = vadd.f32 %v2307, %v616
    %v2475 = vmul.f32 %v2456, %v2473
    %v2476 = vmul.f32 %v2458, %v2474
    %v2477 = vadd.f32 %v2439, %v2475
    %v2478 = vadd.f32 %v2442, %v2476
    %v2479 = vtanh.pop %v2477
    %v2480 = vtanh.pop %v2478
    %v2481 = vsub.f32 1.0, %v2470
    %v2482 = vsub.f32 1.0, %v2472
    %v2483 = vmul.f32 %v2481, %v2479
    %v2484 = vmul.f32 %v2482, %v2480
    %v2485 = vmul.f32 %v2470, %v2139
    %v2486 = vmul.f32 %v2472, %v2140
    %v2487 = vadd.f32 %v2483, %v2485
    %v2488 = vadd.f32 %v2484, %v2486
    %2489 = vmatprep.subr.bf16.mxu0 %v731
    %2490 = vmatpush1.bf16.msra.mxu0 %v730
    %2491 = vmatprep.subr.bf16.mxu0 %v734
    %2492 = vmatpush1.bf16.msra.mxu0 %v733
    %2493 = vmatprep.subr.bf16.mxu0 %v737
    %2494 = vmatpush1.bf16.msra.mxu0 %v736
    %2495 = vmatprep.subr.bf16.mxu0 %v740
    %2496 = vmatpush1.bf16.msra.mxu0 %v739
    %2497 = vmatprep.subr.bf16.mxu0 %v743
    %2498 = vmatpush1.bf16.msra.mxu0 %v742
    %2499 = vmatprep.subr.bf16.mxu0 %v746
    %2500 = vmatpush1.bf16.msra.mxu0 %v745
    %2501 = vmatprep.subr.bf16.mxu0 %v749
    %2502 = vmatpush1.bf16.msra.mxu0 %v748
    %2503 = vmatprep.subr.bf16.mxu0 %v752
    %2504 = vmatpush1.bf16.msra.mxu0 %v751
    %2505 = vmatprep.subr.bf16.mxu0 0
    %2506 = vmatpush1.bf16.msra.mxu0 0
    %2507 = vmatprep.subr.bf16.mxu0 0
    %2508 = vmatpush1.bf16.msra.mxu0 0
    %2509 = vmatprep.subr.bf16.mxu0 0
    %2510 = vmatpush1.bf16.msra.mxu0 0
    %2511 = vmatprep.subr.bf16.mxu0 0
    %2512 = vmatpush1.bf16.msra.mxu0 0
    %2513 = vmatprep.subr.bf16.mxu0 0
    %2514 = vmatpush1.bf16.msra.mxu0 0
    %2515 = vmatprep.subr.bf16.mxu0 0
    %2516 = vmatpush1.bf16.msra.mxu0 0
    %2517 = vmatprep.subr.bf16.mxu0 0
    %2518 = vmatpush1.bf16.msra.mxu0 0
    %2519 = vmatprep.subr.bf16.mxu0 0
    %2520 = vmatpush1.bf16.msra.mxu0 0
    %2521 = vmatprep.mubr.bf16.mxu0 0
    %2522 = vmatmul.mubr.bf16.gmra.mrb[0].mxu0 %v2360
    %v2523 = vpop.f32.mrb[0].mxu0
    %v2524 = vadd.f32 0.0, %v2523
    %v2525 = vpop.f32.mrb[0].mxu0
    %v2526 = vadd.f32 0.0, %v2525
    %v2527 = vpop.f32.mrb[0].mxu0
    %v2528 = vadd.f32 0.0, %v2527
    %v2529 = vpop.f32.mrb[0].mxu0
    %v2530 = vadd.f32 0.0, %v2529
    %2531 = vdwg.mxu0
    %2532 = vmatprep.subr.bf16.mxu0 0
    %2533 = vmatpush1.bf16.msra.mxu0 %v732
    %2534 = vmatprep.subr.bf16.mxu0 0
    %2535 = vmatpush1.bf16.msra.mxu0 %v735
    %2536 = vmatprep.subr.bf16.mxu0 0
    %2537 = vmatpush1.bf16.msra.mxu0 %v738
    %2538 = vmatprep.subr.bf16.mxu0 0
    %2539 = vmatpush1.bf16.msra.mxu0 %v741
    %2540 = vmatprep.subr.bf16.mxu0 0
    %2541 = vmatpush1.bf16.msra.mxu0 %v744
    %2542 = vmatprep.subr.bf16.mxu0 0
    %2543 = vmatpush1.bf16.msra.mxu0 %v747
    %2544 = vmatprep.subr.bf16.mxu0 0
    %2545 = vmatpush1.bf16.msra.mxu0 %v750
    %2546 = vmatprep.subr.bf16.mxu0 0
    %2547 = vmatpush1.bf16.msra.mxu0 %v753
    %2548 = vmatprep.subr.bf16.mxu0 0
    %2549 = vmatpush1.bf16.msra.mxu0 0
    %2550 = vmatprep.subr.bf16.mxu0 0
    %2551 = vmatpush1.bf16.msra.mxu0 0
    %2552 = vmatprep.subr.bf16.mxu0 0
    %2553 = vmatpush1.bf16.msra.mxu0 0
    %2554 = vmatprep.subr.bf16.mxu0 0
    %2555 = vmatpush1.bf16.msra.mxu0 0
    %2556 = vmatprep.subr.bf16.mxu0 0
    %2557 = vmatpush1.bf16.msra.mxu0 0
    %2558 = vmatprep.subr.bf16.mxu0 0
    %2559 = vmatpush1.bf16.msra.mxu0 0
    %2560 = vmatprep.subr.bf16.mxu0 0
    %2561 = vmatpush1.bf16.msra.mxu0 0
    %2562 = vmatprep.subr.bf16.mxu0 0
    %2563 = vmatpush1.bf16.msra.mxu0 0
    %2564 = vmatprep.mubr.bf16.mxu0 0
    %2565 = vmatmul.mubr.bf16.gmra.mrb[0].mxu0 %v2360
    %v2566 = vpop.f32.mrb[0].mxu0
    %v2567 = vadd.f32 0.0, %v2566
    %v2568 = vpop.f32.mrb[0].mxu0
    %v2569 = vpop.f32.mrb[0].mxu0
    %v2570 = vadd.f32 0.0, %v2569
    %v2571 = vpop.f32.mrb[0].mxu0
    %2572 = vdwg.mxu0
    %v2573 = vpack.c.bf16 %v2488, %v2487
    %2574 = vmatprep.subr.bf16.mxu0 %v975
    %2575 = vmatpush1.bf16.msra.mxu0 %v974
    %2576 = vmatprep.subr.bf16.mxu0 %v978
    %2577 = vmatpush1.bf16.msra.mxu0 %v977
    %2578 = vmatprep.subr.bf16.mxu0 %v981
    %2579 = vmatpush1.bf16.msra.mxu0 %v980
    %2580 = vmatprep.subr.bf16.mxu0 %v984
    %2581 = vmatpush1.bf16.msra.mxu0 %v983
    %2582 = vmatprep.subr.bf16.mxu0 %v987
    %2583 = vmatpush1.bf16.msra.mxu0 %v986
    %2584 = vmatprep.subr.bf16.mxu0 %v990
    %2585 = vmatpush1.bf16.msra.mxu0 %v989
    %2586 = vmatprep.subr.bf16.mxu0 %v993
    %2587 = vmatpush1.bf16.msra.mxu0 %v992
    %2588 = vmatprep.subr.bf16.mxu0 %v996
    %2589 = vmatpush1.bf16.msra.mxu0 %v995
    %2590 = vmatprep.subr.bf16.mxu0 0
    %2591 = vmatpush1.bf16.msra.mxu0 0
    %2592 = vmatprep.subr.bf16.mxu0 0
    %2593 = vmatpush1.bf16.msra.mxu0 0
    %2594 = vmatprep.subr.bf16.mxu0 0
    %2595 = vmatpush1.bf16.msra.mxu0 0
    %2596 = vmatprep.subr.bf16.mxu0 0
    %2597 = vmatpush1.bf16.msra.mxu0 0
    %2598 = vmatprep.subr.bf16.mxu0 0
    %2599 = vmatpush1.bf16.msra.mxu0 0
    %2600 = vmatprep.subr.bf16.mxu0 0
    %2601 = vmatpush1.bf16.msra.mxu0 0
    %2602 = vmatprep.subr.bf16.mxu0 0
    %2603 = vmatpush1.bf16.msra.mxu0 0
    %2604 = vmatprep.subr.bf16.mxu0 0
    %2605 = vmatpush1.bf16.msra.mxu0 0
    %2606 = vmatprep.mubr.bf16.mxu0 0
    %2607 = vmatmul.mubr.bf16.gmra.mrb[0].mxu0 %v2573
    %v2608 = vpop.f32.mrb[0].mxu0
    %v2609 = vadd.f32 0.0, %v2608
    %v2610 = vpop.f32.mrb[0].mxu0
    %v2611 = vadd.f32 0.0, %v2610
    %v2612 = vpop.f32.mrb[0].mxu0
    %v2613 = vadd.f32 0.0, %v2612
    %v2614 = vpop.f32.mrb[0].mxu0
    %v2615 = vadd.f32 0.0, %v2614
    %2616 = vdwg.mxu0
    %2617 = vmatprep.subr.bf16.mxu0 0
    %2618 = vmatpush1.bf16.msra.mxu0 %v976
    %2619 = vmatprep.subr.bf16.mxu0 0
    %2620 = vmatpush1.bf16.msra.mxu0 %v979
    %2621 = vmatprep.subr.bf16.mxu0 0
    %2622 = vmatpush1.bf16.msra.mxu0 %v982
    %2623 = vmatprep.subr.bf16.mxu0 0
    %2624 = vmatpush1.bf16.msra.mxu0 %v985
    %2625 = vmatprep.subr.bf16.mxu0 0
    %2626 = vmatpush1.bf16.msra.mxu0 %v988
    %2627 = vmatprep.subr.bf16.mxu0 0
    %2628 = vmatpush1.bf16.msra.mxu0 %v991
    %2629 = vmatprep.subr.bf16.mxu0 0
    %2630 = vmatpush1.bf16.msra.mxu0 %v994
    %2631 = vmatprep.subr.bf16.mxu0 0
    %2632 = vmatpush1.bf16.msra.mxu0 %v997
    %2633 = vmatprep.subr.bf16.mxu0 0
    %2634 = vmatpush1.bf16.msra.mxu0 0
    %2635 = vmatprep.subr.bf16.mxu0 0
    %2636 = vmatpush1.bf16.msra.mxu0 0
    %2637 = vmatprep.subr.bf16.mxu0 0
    %2638 = vmatpush1.bf16.msra.mxu0 0
    %2639 = vmatprep.subr.bf16.mxu0 0
    %2640 = vmatpush1.bf16.msra.mxu0 0
    %2641 = vmatprep.subr.bf16.mxu0 0
    %2642 = vmatpush1.bf16.msra.mxu0 0
    %2643 = vmatprep.subr.bf16.mxu0 0
    %2644 = vmatpush1.bf16.msra.mxu0 0
    %2645 = vmatprep.subr.bf16.mxu0 0
    %2646 = vmatpush1.bf16.msra.mxu0 0
    %2647 = vmatprep.subr.bf16.mxu0 0
    %2648 = vmatpush1.bf16.msra.mxu0 0
    %2649 = vmatprep.mubr.bf16.mxu0 0
    %2650 = vmatmul.mubr.bf16.gmra.mrb[0].mxu0 %v2573
    %v2651 = vpop.f32.mrb[0].mxu0
    %v2652 = vadd.f32 0.0, %v2651
    %v2653 = vpop.f32.mrb[0].mxu0
    %v2654 = vpop.f32.mrb[0].mxu0
    %v2655 = vadd.f32 0.0, %v2654
    %v2656 = vpop.f32.mrb[0].mxu0
    %2657 = vdwg.mxu0
    %v2658 = vld [vmem:[#allocation2 + $0xc0] sm:$0xff]
    %v2659 = vld [vmem:[#allocation2 + $0xc8] sm:$0xff]
    %v2660 = vld [vmem:[#allocation2 + $0xd0] sm:$0xff]
    %v2661 = vld [vmem:[#allocation2 + $0xd8] sm:$0xff]
    %v2662 = vld [vmem:[#allocation2 + $0xe0] sm:$0xff]
    %v2663 = vld [vmem:[#allocation2 + $0xe8] sm:$0xff]
    %v2664 = vadd.f32 %v2658, %v2524
    %v2665 = vadd.f32 %v2661, %v2528
    %v2666 = vxor.u32 %v2664, 2147483648
    %v2667 = vxor.u32 %v2665, 2147483648
    %v2668 = vmul.f32 %v2666, 1.442695
    %v2669 = vpow.pop %v2668
    %v2670 = vmul.f32 %v2667, 1.442695
    %v2671 = vpow.pop %v2670
    %v2672 = vadd.f32 %v2669, 1.0
    %v2673 = vadd.f32 %v2671, 1.0
    %v2674 = vrcp.pop %v2672
    %v2675 = vmul.f32 1.0, %v2674
    %v2676 = vrcp.pop %v2673
    %v2677 = vmul.f32 1.0, %v2676
    %v2678 = vadd.f32 %v2659, %v2526
    %v2679 = vadd.f32 %v2662, %v2530
    %v2680 = vxor.u32 %v2678, 2147483648
    %v2681 = vxor.u32 %v2679, 2147483648
    %v2682 = vmul.f32 %v2680, 1.442695
    %v2683 = vpow.pop %v2682
    %v2684 = vmul.f32 %v2681, 1.442695
    %v2685 = vpow.pop %v2684
    %v2686 = vadd.f32 %v2683, 1.0
    %v2687 = vadd.f32 %v2685, 1.0
    %v2688 = vrcp.pop %v2686
    %v2689 = vmul.f32 1.0, %v2688
    %v2690 = vrcp.pop %v2687
    %v2691 = vmul.f32 1.0, %v2690
    %v2692 = vadd.f32 %v2567, %v592
    %v2693 = vadd.f32 %v2570, %v592
    %v2694 = vmul.f32 %v2675, %v2692
    %v2695 = vmul.f32 %v2677, %v2693
    %v2696 = vadd.f32 %v2660, %v2694
    %v2697 = vadd.f32 %v2663, %v2695
    %v2698 = vtanh.pop %v2696
    %v2699 = vtanh.pop %v2697
    %v2700 = vsub.f32 1.0, %v2689
    %v2701 = vsub.f32 1.0, %v2691
    %v2702 = vmul.f32 %v2700, %v2698
    %v2703 = vmul.f32 %v2701, %v2699
    %v2704 = vmul.f32 %v2689, %v2358
    %v2705 = vmul.f32 %v2691, %v2359
    %v2706 = vadd.f32 %v2702, %v2704
    %v2707 = vadd.f32 %v2703, %v2705
    %v2708 = vpack.c.bf16 %v2707, %v2706
    %2709 = vmatprep.subr.bf16.mxu0 %v1270
    %2710 = vmatpush1.bf16.msra.mxu0 %v1269
    %2711 = vmatprep.subr.bf16.mxu0 %v1273
    %2712 = vmatpush1.bf16.msra.mxu0 %v1272
    %2713 = vmatprep.subr.bf16.mxu0 %v1276
    %2714 = vmatpush1.bf16.msra.mxu0 %v1275
    %2715 = vmatprep.subr.bf16.mxu0 %v1279
    %2716 = vmatpush1.bf16.msra.mxu0 %v1278
    %2717 = vmatprep.subr.bf16.mxu0 %v1282
    %2718 = vmatpush1.bf16.msra.mxu0 %v1281
    %2719 = vmatprep.subr.bf16.mxu0 %v1285
    %2720 = vmatpush1.bf16.msra.mxu0 %v1284
    %2721 = vmatprep.subr.bf16.mxu0 %v1288
    %2722 = vmatpush1.bf16.msra.mxu0 %v1287
    %2723 = vmatprep.subr.bf16.mxu0 %v1291
    %2724 = vmatpush1.bf16.msra.mxu0 %v1290
    %2725 = vmatprep.subr.bf16.mxu0 0
    %2726 = vmatpush1.bf16.msra.mxu0 0
    %2727 = vmatprep.subr.bf16.mxu0 0
    %2728 = vmatpush1.bf16.msra.mxu0 0
    %2729 = vmatprep.subr.bf16.mxu0 0
    %2730 = vmatpush1.bf16.msra.mxu0 0
    %2731 = vmatprep.subr.bf16.mxu0 0
    %2732 = vmatpush1.bf16.msra.mxu0 0
    %2733 = vmatprep.subr.bf16.mxu0 0
    %2734 = vmatpush1.bf16.msra.mxu0 0
    %2735 = vmatprep.subr.bf16.mxu0 0
    %2736 = vmatpush1.bf16.msra.mxu0 0
    %2737 = vmatprep.subr.bf16.mxu0 0
    %2738 = vmatpush1.bf16.msra.mxu0 0
    %2739 = vmatprep.subr.bf16.mxu0 0
    %2740 = vmatpush1.bf16.msra.mxu0 0
    %2741 = vmatprep.mubr.bf16.mxu0 0
    %2742 = vmatmul.mubr.bf16.gmra.mrb[0].mxu0 %v2708
    %v2743 = vpop.f32.mrb[0].mxu0
    %v2744 = vadd.f32 %v599, %v2743
    %v2745 = vpop.f32.mrb[0].mxu0
    %v2746 = vadd.f32 %v603, %v2745
    %v2747 = vpop.f32.mrb[0].mxu0
    %v2748 = vadd.f32 %v599, %v2747
    %v2749 = vpop.f32.mrb[0].mxu0
    %v2750 = vadd.f32 %v603, %v2749
    %2751 = vdwg.mxu0
    %2752 = vmatprep.subr.bf16.mxu0 0
    %2753 = vmatpush1.bf16.msra.mxu0 %v1271
    %2754 = vmatprep.subr.bf16.mxu0 0
    %2755 = vmatpush1.bf16.msra.mxu0 %v1274
    %2756 = vmatprep.subr.bf16.mxu0 0
    %2757 = vmatpush1.bf16.msra.mxu0 %v1277
    %2758 = vmatprep.subr.bf16.mxu0 0
    %2759 = vmatpush1.bf16.msra.mxu0 %v1280
    %2760 = vmatprep.subr.bf16.mxu0 0
    %2761 = vmatpush1.bf16.msra.mxu0 %v1283
    %2762 = vmatprep.subr.bf16.mxu0 0
    %2763 = vmatpush1.bf16.msra.mxu0 %v1286
    %2764 = vmatprep.subr.bf16.mxu0 0
    %2765 = vmatpush1.bf16.msra.mxu0 %v1289
    %2766 = vmatprep.subr.bf16.mxu0 0
    %2767 = vmatpush1.bf16.msra.mxu0 %v1292
    %2768 = vmatprep.subr.bf16.mxu0 0
    %2769 = vmatpush1.bf16.msra.mxu0 0
    %2770 = vmatprep.subr.bf16.mxu0 0
    %2771 = vmatpush1.bf16.msra.mxu0 0
    %2772 = vmatprep.subr.bf16.mxu0 0
    %2773 = vmatpush1.bf16.msra.mxu0 0
    %2774 = vmatprep.subr.bf16.mxu0 0
    %2775 = vmatpush1.bf16.msra.mxu0 0
    %2776 = vmatprep.subr.bf16.mxu0 0
    %2777 = vmatpush1.bf16.msra.mxu0 0
    %2778 = vmatprep.subr.bf16.mxu0 0
    %2779 = vmatpush1.bf16.msra.mxu0 0
    %2780 = vmatprep.subr.bf16.mxu0 0
    %2781 = vmatpush1.bf16.msra.mxu0 0
    %2782 = vmatprep.subr.bf16.mxu0 0
    %2783 = vmatpush1.bf16.msra.mxu0 0
    %2784 = vmatprep.mubr.bf16.mxu0 0
    %2785 = vmatmul.mubr.bf16.gmra.mrb[0].mxu0 %v2708
    %v2786 = vpop.f32.mrb[0].mxu0
    %v2787 = vadd.f32 %v607, %v2786
    %v2788 = vpop.f32.mrb[0].mxu0
    %v2789 = vpop.f32.mrb[0].mxu0
    %v2790 = vadd.f32 %v607, %v2789
    %v2791 = vpop.f32.mrb[0].mxu0
    %2792 = vdwg.mxu0
    %v2793 = vadd.f32 %v2744, %v2609
    %v2794 = vadd.f32 %v2748, %v2613
    %v2795 = vxor.u32 %v2793, 2147483648
    %v2796 = vxor.u32 %v2794, 2147483648
    %v2797 = vmul.f32 %v2795, 1.442695
    %v2798 = vpow.pop %v2797
    %v2799 = vmul.f32 %v2796, 1.442695
    %v2800 = vpow.pop %v2799
    %v2801 = vadd.f32 %v2798, 1.0
    %v2802 = vadd.f32 %v2800, 1.0
    %v2803 = vrcp.pop %v2801
    %v2804 = vmul.f32 1.0, %v2803
    %v2805 = vrcp.pop %v2802
    %v2806 = vmul.f32 1.0, %v2805
    %v2807 = vadd.f32 %v2746, %v2611
    %v2808 = vadd.f32 %v2750, %v2615
    %v2809 = vxor.u32 %v2807, 2147483648
    %v2810 = vxor.u32 %v2808, 2147483648
    %v2811 = vmul.f32 %v2809, 1.442695
    %v2812 = vpow.pop %v2811
    %v2813 = vmul.f32 %v2810, 1.442695
    %v2814 = vpow.pop %v2813
    %v2815 = vadd.f32 %v2812, 1.0
    %v2816 = vadd.f32 %v2814, 1.0
    %v2817 = vrcp.pop %v2815
    %v2818 = vmul.f32 1.0, %v2817
    %v2819 = vrcp.pop %v2816
    %v2820 = vmul.f32 1.0, %v2819
    %v2821 = vadd.f32 %v2652, %v616
    %v2822 = vadd.f32 %v2655, %v616
    %v2823 = vmul.f32 %v2804, %v2821
    %v2824 = vmul.f32 %v2806, %v2822
    %v2825 = vadd.f32 %v2787, %v2823
    %v2826 = vadd.f32 %v2790, %v2824
    %v2827 = vtanh.pop %v2825
    %v2828 = vtanh.pop %v2826
    %v2829 = vsub.f32 1.0, %v2818
    %v2830 = vsub.f32 1.0, %v2820
    %v2831 = vmul.f32 %v2829, %v2827
    %v2832 = vmul.f32 %v2830, %v2828
    %v2833 = vmul.f32 %v2818, %v2487
    %v2834 = vmul.f32 %v2820, %v2488
    %v2835 = vadd.f32 %v2831, %v2833
    %v2836 = vadd.f32 %v2832, %v2834
    %2837 = vmatprep.subr.bf16.mxu0 %v731
    %2838 = vmatpush1.bf16.msra.mxu0 %v730
    %2839 = vmatprep.subr.bf16.mxu0 %v734
    %2840 = vmatpush1.bf16.msra.mxu0 %v733
    %2841 = vmatprep.subr.bf16.mxu0 %v737
    %2842 = vmatpush1.bf16.msra.mxu0 %v736
    %2843 = vmatprep.subr.bf16.mxu0 %v740
    %2844 = vmatpush1.bf16.msra.mxu0 %v739
    %2845 = vmatprep.subr.bf16.mxu0 %v743
    %2846 = vmatpush1.bf16.msra.mxu0 %v742
    %2847 = vmatprep.subr.bf16.mxu0 %v746
    %2848 = vmatpush1.bf16.msra.mxu0 %v745
    %2849 = vmatprep.subr.bf16.mxu0 %v749
    %2850 = vmatpush1.bf16.msra.mxu0 %v748
    %2851 = vmatprep.subr.bf16.mxu0 %v752
    %2852 = vmatpush1.bf16.msra.mxu0 %v751
    %2853 = vmatprep.subr.bf16.mxu0 0
    %2854 = vmatpush1.bf16.msra.mxu0 0
    %2855 = vmatprep.subr.bf16.mxu0 0
    %2856 = vmatpush1.bf16.msra.mxu0 0
    %2857 = vmatprep.subr.bf16.mxu0 0
    %2858 = vmatpush1.bf16.msra.mxu0 0
    %2859 = vmatprep.subr.bf16.mxu0 0
    %2860 = vmatpush1.bf16.msra.mxu0 0
    %2861 = vmatprep.subr.bf16.mxu0 0
    %2862 = vmatpush1.bf16.msra.mxu0 0
    %2863 = vmatprep.subr.bf16.mxu0 0
    %2864 = vmatpush1.bf16.msra.mxu0 0
    %2865 = vmatprep.subr.bf16.mxu0 0
    %2866 = vmatpush1.bf16.msra.mxu0 0
    %2867 = vmatprep.subr.bf16.mxu0 0
    %2868 = vmatpush1.bf16.msra.mxu0 0
    %2869 = vmatprep.mubr.bf16.mxu0 0
    %2870 = vmatmul.mubr.bf16.gmra.mrb[0].mxu0 %v2708
    %v2871 = vpop.f32.mrb[0].mxu0
    %v2872 = vadd.f32 0.0, %v2871
    %v2873 = vpop.f32.mrb[0].mxu0
    %v2874 = vadd.f32 0.0, %v2873
    %v2875 = vpop.f32.mrb[0].mxu0
    %v2876 = vadd.f32 0.0, %v2875
    %v2877 = vpop.f32.mrb[0].mxu0
    %v2878 = vadd.f32 0.0, %v2877
    %2879 = vdwg.mxu0
    %2880 = vmatprep.subr.bf16.mxu0 0
    %2881 = vmatpush1.bf16.msra.mxu0 %v732
    %2882 = vmatprep.subr.bf16.mxu0 0
    %2883 = vmatpush1.bf16.msra.mxu0 %v735
    %2884 = vmatprep.subr.bf16.mxu0 0
    %2885 = vmatpush1.bf16.msra.mxu0 %v738
    %2886 = vmatprep.subr.bf16.mxu0 0
    %2887 = vmatpush1.bf16.msra.mxu0 %v741
    %2888 = vmatprep.subr.bf16.mxu0 0
    %2889 = vmatpush1.bf16.msra.mxu0 %v744
    %2890 = vmatprep.subr.bf16.mxu0 0
    %2891 = vmatpush1.bf16.msra.mxu0 %v747
    %2892 = vmatprep.subr.bf16.mxu0 0
    %2893 = vmatpush1.bf16.msra.mxu0 %v750
    %2894 = vmatprep.subr.bf16.mxu0 0
    %2895 = vmatpush1.bf16.msra.mxu0 %v753
    %2896 = vmatprep.subr.bf16.mxu0 0
    %2897 = vmatpush1.bf16.msra.mxu0 0
    %2898 = vmatprep.subr.bf16.mxu0 0
    %2899 = vmatpush1.bf16.msra.mxu0 0
    %2900 = vmatprep.subr.bf16.mxu0 0
    %2901 = vmatpush1.bf16.msra.mxu0 0
    %2902 = vmatprep.subr.bf16.mxu0 0
    %2903 = vmatpush1.bf16.msra.mxu0 0
    %2904 = vmatprep.subr.bf16.mxu0 0
    %2905 = vmatpush1.bf16.msra.mxu0 0
    %2906 = vmatprep.subr.bf16.mxu0 0
    %2907 = vmatpush1.bf16.msra.mxu0 0
    %2908 = vmatprep.subr.bf16.mxu0 0
    %2909 = vmatpush1.bf16.msra.mxu0 0
    %2910 = vmatprep.subr.bf16.mxu0 0
    %2911 = vmatpush1.bf16.msra.mxu0 0
    %2912 = vmatprep.mubr.bf16.mxu0 0
    %2913 = vmatmul.mubr.bf16.gmra.mrb[0].mxu0 %v2708
    %v2914 = vpop.f32.mrb[0].mxu0
    %v2915 = vadd.f32 0.0, %v2914
    %v2916 = vpop.f32.mrb[0].mxu0
    %v2917 = vpop.f32.mrb[0].mxu0
    %v2918 = vadd.f32 0.0, %v2917
    %v2919 = vpop.f32.mrb[0].mxu0
    %2920 = vdwg.mxu0
    %v2921 = vpack.c.bf16 %v2836, %v2835
    %2922 = vmatprep.subr.bf16.mxu0 %v975
    %2923 = vmatpush1.bf16.msra.mxu0 %v974
    %2924 = vmatprep.subr.bf16.mxu0 %v978
    %2925 = vmatpush1.bf16.msra.mxu0 %v977
    %2926 = vmatprep.subr.bf16.mxu0 %v981
    %2927 = vmatpush1.bf16.msra.mxu0 %v980
    %2928 = vmatprep.subr.bf16.mxu0 %v984
    %2929 = vmatpush1.bf16.msra.mxu0 %v983
    %2930 = vmatprep.subr.bf16.mxu0 %v987
    %2931 = vmatpush1.bf16.msra.mxu0 %v986
    %2932 = vmatprep.subr.bf16.mxu0 %v990
    %2933 = vmatpush1.bf16.msra.mxu0 %v989
    %2934 = vmatprep.subr.bf16.mxu0 %v993
    %2935 = vmatpush1.bf16.msra.mxu0 %v992
    %2936 = vmatprep.subr.bf16.mxu0 %v996
    %2937 = vmatpush1.bf16.msra.mxu0 %v995
    %2938 = vmatprep.subr.bf16.mxu0 0
    %2939 = vmatpush1.bf16.msra.mxu0 0
    %2940 = vmatprep.subr.bf16.mxu0 0
    %2941 = vmatpush1.bf16.msra.mxu0 0
    %2942 = vmatprep.subr.bf16.mxu0 0
    %2943 = vmatpush1.bf16.msra.mxu0 0
    %2944 = vmatprep.subr.bf16.mxu0 0
    %2945 = vmatpush1.bf16.msra.mxu0 0
    %2946 = vmatprep.subr.bf16.mxu0 0
    %2947 = vmatpush1.bf16.msra.mxu0 0
    %2948 = vmatprep.subr.bf16.mxu0 0
    %2949 = vmatpush1.bf16.msra.mxu0 0
    %2950 = vmatprep.subr.bf16.mxu0 0
    %2951 = vmatpush1.bf16.msra.mxu0 0
    %2952 = vmatprep.subr.bf16.mxu0 0
    %2953 = vmatpush1.bf16.msra.mxu0 0
    %2954 = vmatprep.mubr.bf16.mxu0 0
    %2955 = vmatmul.mubr.bf16.gmra.mrb[0].mxu0 %v2921
    %v2956 = vpop.f32.mrb[0].mxu0
    %v2957 = vadd.f32 0.0, %v2956
    %v2958 = vpop.f32.mrb[0].mxu0
    %v2959 = vadd.f32 0.0, %v2958
    %v2960 = vpop.f32.mrb[0].mxu0
    %v2961 = vadd.f32 0.0, %v2960
    %v2962 = vpop.f32.mrb[0].mxu0
    %v2963 = vadd.f32 0.0, %v2962
    %2964 = vdwg.mxu0
    %2965 = vmatprep.subr.bf16.mxu0 0
    %2966 = vmatpush1.bf16.msra.mxu0 %v976
    %2967 = vmatprep.subr.bf16.mxu0 0
    %2968 = vmatpush1.bf16.msra.mxu0 %v979
    %2969 = vmatprep.subr.bf16.mxu0 0
    %2970 = vmatpush1.bf16.msra.mxu0 %v982
    %2971 = vmatprep.subr.bf16.mxu0 0
    %2972 = vmatpush1.bf16.msra.mxu0 %v985
    %2973 = vmatprep.subr.bf16.mxu0 0
    %2974 = vmatpush1.bf16.msra.mxu0 %v988
    %2975 = vmatprep.subr.bf16.mxu0 0
    %2976 = vmatpush1.bf16.msra.mxu0 %v991
    %2977 = vmatprep.subr.bf16.mxu0 0
    %2978 = vmatpush1.bf16.msra.mxu0 %v994
    %2979 = vmatprep.subr.bf16.mxu0 0
    %2980 = vmatpush1.bf16.msra.mxu0 %v997
    %2981 = vmatprep.subr.bf16.mxu0 0
    %2982 = vmatpush1.bf16.msra.mxu0 0
    %2983 = vmatprep.subr.bf16.mxu0 0
    %2984 = vmatpush1.bf16.msra.mxu0 0
    %2985 = vmatprep.subr.bf16.mxu0 0
    %2986 = vmatpush1.bf16.msra.mxu0 0
    %2987 = vmatprep.subr.bf16.mxu0 0
    %2988 = vmatpush1.bf16.msra.mxu0 0
    %2989 = vmatprep.subr.bf16.mxu0 0
    %2990 = vmatpush1.bf16.msra.mxu0 0
    %2991 = vmatprep.subr.bf16.mxu0 0
    %2992 = vmatpush1.bf16.msra.mxu0 0
    %2993 = vmatprep.subr.bf16.mxu0 0
    %2994 = vmatpush1.bf16.msra.mxu0 0
    %2995 = vmatprep.subr.bf16.mxu0 0
    %2996 = vmatpush1.bf16.msra.mxu0 0
    %2997 = vmatprep.mubr.bf16.mxu0 0
    %2998 = vmatmul.mubr.bf16.gmra.mrb[0].mxu0 %v2921
    %v2999 = vpop.f32.mrb[0].mxu0
    %v3000 = vadd.f32 0.0, %v2999
    %v3001 = vpop.f32.mrb[0].mxu0
    %v3002 = vpop.f32.mrb[0].mxu0
    %v3003 = vadd.f32 0.0, %v3002
    %v3004 = vpop.f32.mrb[0].mxu0
    %3005 = vdwg.mxu0
    %v3006 = vld [vmem:[#allocation2 + $0xf0] sm:$0xff]
    %v3007 = vld [vmem:[#allocation2 + $0xf8] sm:$0xff]
    %v3008 = vld [vmem:[#allocation2 + $0x100] sm:$0xff]
    %v3009 = vld [vmem:[#allocation2 + $0x108] sm:$0xff]
    %v3010 = vld [vmem:[#allocation2 + $0x110] sm:$0xff]
    %v3011 = vld [vmem:[#allocation2 + $0x118] sm:$0xff]
    %v3012 = vadd.f32 %v3006, %v2872
    %v3013 = vadd.f32 %v3009, %v2876
    %v3014 = vxor.u32 %v3012, 2147483648
    %v3015 = vxor.u32 %v3013, 2147483648
    %v3016 = vmul.f32 %v3014, 1.442695
    %v3017 = vpow.pop %v3016
    %v3018 = vmul.f32 %v3015, 1.442695
    %v3019 = vpow.pop %v3018
    %v3020 = vadd.f32 %v3017, 1.0
    %v3021 = vadd.f32 %v3019, 1.0
    %v3022 = vrcp.pop %v3020
    %v3023 = vmul.f32 1.0, %v3022
    %v3024 = vrcp.pop %v3021
    %v3025 = vmul.f32 1.0, %v3024
    %v3026 = vadd.f32 %v3007, %v2874
    %v3027 = vadd.f32 %v3010, %v2878
    %v3028 = vxor.u32 %v3026, 2147483648
    %v3029 = vxor.u32 %v3027, 2147483648
    %v3030 = vmul.f32 %v3028, 1.442695
    %v3031 = vpow.pop %v3030
    %v3032 = vmul.f32 %v3029, 1.442695
    %v3033 = vpow.pop %v3032
    %v3034 = vadd.f32 %v3031, 1.0
    %v3035 = vadd.f32 %v3033, 1.0
    %v3036 = vrcp.pop %v3034
    %v3037 = vmul.f32 1.0, %v3036
    %v3038 = vrcp.pop %v3035
    %v3039 = vmul.f32 1.0, %v3038
    %v3040 = vadd.f32 %v2915, %v592
    %v3041 = vadd.f32 %v2918, %v592
    %v3042 = vmul.f32 %v3023, %v3040
    %v3043 = vmul.f32 %v3025, %v3041
    %v3044 = vadd.f32 %v3008, %v3042
    %v3045 = vadd.f32 %v3011, %v3043
    %v3046 = vtanh.pop %v3044
    %v3047 = vtanh.pop %v3045
    %v3048 = vsub.f32 1.0, %v3037
    %v3049 = vsub.f32 1.0, %v3039
    %v3050 = vmul.f32 %v3048, %v3046
    %v3051 = vmul.f32 %v3049, %v3047
    %v3052 = vmul.f32 %v3037, %v2706
    %v3053 = vmul.f32 %v3039, %v2707
    %v3054 = vadd.f32 %v3050, %v3052
    %v3055 = vadd.f32 %v3051, %v3053
    %v3056 = vpack.c.bf16 %v3055, %v3054
    %3057 = vmatprep.subr.bf16.mxu0 %v1270
    %3058 = vmatpush1.bf16.msra.mxu0 %v1269
    %3059 = vmatprep.subr.bf16.mxu0 %v1273
    %3060 = vmatpush1.bf16.msra.mxu0 %v1272
    %3061 = vmatprep.subr.bf16.mxu0 %v1276
    %3062 = vmatpush1.bf16.msra.mxu0 %v1275
    %3063 = vmatprep.subr.bf16.mxu0 %v1279
    %3064 = vmatpush1.bf16.msra.mxu0 %v1278
    %3065 = vmatprep.subr.bf16.mxu0 %v1282
    %3066 = vmatpush1.bf16.msra.mxu0 %v1281
    %3067 = vmatprep.subr.bf16.mxu0 %v1285
    %3068 = vmatpush1.bf16.msra.mxu0 %v1284
    %3069 = vmatprep.subr.bf16.mxu0 %v1288
    %3070 = vmatpush1.bf16.msra.mxu0 %v1287
    %3071 = vmatprep.subr.bf16.mxu0 %v1291
    %3072 = vmatpush1.bf16.msra.mxu0 %v1290
    %3073 = vmatprep.subr.bf16.mxu0 0
    %3074 = vmatpush1.bf16.msra.mxu0 0
    %3075 = vmatprep.subr.bf16.mxu0 0
    %3076 = vmatpush1.bf16.msra.mxu0 0
    %3077 = vmatprep.subr.bf16.mxu0 0
    %3078 = vmatpush1.bf16.msra.mxu0 0
    %3079 = vmatprep.subr.bf16.mxu0 0
    %3080 = vmatpush1.bf16.msra.mxu0 0
    %3081 = vmatprep.subr.bf16.mxu0 0
    %3082 = vmatpush1.bf16.msra.mxu0 0
    %3083 = vmatprep.subr.bf16.mxu0 0
    %3084 = vmatpush1.bf16.msra.mxu0 0
    %3085 = vmatprep.subr.bf16.mxu0 0
    %3086 = vmatpush1.bf16.msra.mxu0 0
    %3087 = vmatprep.subr.bf16.mxu0 0
    %3088 = vmatpush1.bf16.msra.mxu0 0
    %3089 = vmatprep.mubr.bf16.mxu0 0
    %3090 = vmatmul.mubr.bf16.gmra.mrb[0].mxu0 %v3056
    %v3091 = vpop.f32.mrb[0].mxu0
    %v3092 = vadd.f32 %v599, %v3091
    %v3093 = vpop.f32.mrb[0].mxu0
    %v3094 = vadd.f32 %v603, %v3093
    %v3095 = vpop.f32.mrb[0].mxu0
    %v3096 = vadd.f32 %v599, %v3095
    %v3097 = vpop.f32.mrb[0].mxu0
    %v3098 = vadd.f32 %v603, %v3097
    %3099 = vdwg.mxu0
    %3100 = vmatprep.subr.bf16.mxu0 0
    %3101 = vmatpush1.bf16.msra.mxu0 %v1271
    %3102 = vmatprep.subr.bf16.mxu0 0
    %3103 = vmatpush1.bf16.msra.mxu0 %v1274
    %3104 = vmatprep.subr.bf16.mxu0 0
    %3105 = vmatpush1.bf16.msra.mxu0 %v1277
    %3106 = vmatprep.subr.bf16.mxu0 0
    %3107 = vmatpush1.bf16.msra.mxu0 %v1280
    %3108 = vmatprep.subr.bf16.mxu0 0
    %3109 = vmatpush1.bf16.msra.mxu0 %v1283
    %3110 = vmatprep.subr.bf16.mxu0 0
    %3111 = vmatpush1.bf16.msra.mxu0 %v1286
    %3112 = vmatprep.subr.bf16.mxu0 0
    %3113 = vmatpush1.bf16.msra.mxu0 %v1289
    %3114 = vmatprep.subr.bf16.mxu0 0
    %3115 = vmatpush1.bf16.msra.mxu0 %v1292
    %3116 = vmatprep.subr.bf16.mxu0 0
    %3117 = vmatpush1.bf16.msra.mxu0 0
    %3118 = vmatprep.subr.bf16.mxu0 0
    %3119 = vmatpush1.bf16.msra.mxu0 0
    %3120 = vmatprep.subr.bf16.mxu0 0
    %3121 = vmatpush1.bf16.msra.mxu0 0
    %3122 = vmatprep.subr.bf16.mxu0 0
    %3123 = vmatpush1.bf16.msra.mxu0 0
    %3124 = vmatprep.subr.bf16.mxu0 0
    %3125 = vmatpush1.bf16.msra.mxu0 0
    %3126 = vmatprep.subr.bf16.mxu0 0
    %3127 = vmatpush1.bf16.msra.mxu0 0
    %3128 = vmatprep.subr.bf16.mxu0 0
    %3129 = vmatpush1.bf16.msra.mxu0 0
    %3130 = vmatprep.subr.bf16.mxu0 0
    %3131 = vmatpush1.bf16.msra.mxu0 0
    %3132 = vmatprep.mubr.bf16.mxu0 0
    %3133 = vmatmul.mubr.bf16.gmra.mrb[0].mxu0 %v3056
    %v3134 = vpop.f32.mrb[0].mxu0
    %v3135 = vadd.f32 %v607, %v3134
    %v3136 = vpop.f32.mrb[0].mxu0
    %v3137 = vpop.f32.mrb[0].mxu0
    %v3138 = vadd.f32 %v607, %v3137
    %v3139 = vpop.f32.mrb[0].mxu0
    %3140 = vdwg.mxu0
    %v3141 = vadd.f32 %v3092, %v2957
    %v3142 = vadd.f32 %v3096, %v2961
    %v3143 = vxor.u32 %v3141, 2147483648
    %v3144 = vxor.u32 %v3142, 2147483648
    %v3145 = vmul.f32 %v3143, 1.442695
    %v3146 = vpow.pop %v3145
    %v3147 = vmul.f32 %v3144, 1.442695
    %v3148 = vpow.pop %v3147
    %v3149 = vadd.f32 %v3146, 1.0
    %v3150 = vadd.f32 %v3148, 1.0
    %v3151 = vrcp.pop %v3149
    %v3152 = vmul.f32 1.0, %v3151
    %v3153 = vrcp.pop %v3150
    %v3154 = vmul.f32 1.0, %v3153
    %v3155 = vadd.f32 %v3094, %v2959
    %v3156 = vadd.f32 %v3098, %v2963
    %v3157 = vxor.u32 %v3155, 2147483648
    %v3158 = vxor.u32 %v3156, 2147483648
    %v3159 = vmul.f32 %v3157, 1.442695
    %v3160 = vpow.pop %v3159
    %v3161 = vmul.f32 %v3158, 1.442695
    %v3162 = vpow.pop %v3161
    %v3163 = vadd.f32 %v3160, 1.0
    %v3164 = vadd.f32 %v3162, 1.0
    %v3165 = vrcp.pop %v3163
    %v3166 = vmul.f32 1.0, %v3165
    %v3167 = vrcp.pop %v3164
    %v3168 = vmul.f32 1.0, %v3167
    %v3169 = vadd.f32 %v3000, %v616
    %v3170 = vadd.f32 %v3003, %v616
    %v3171 = vmul.f32 %v3152, %v3169
    %v3172 = vmul.f32 %v3154, %v3170
    %v3173 = vadd.f32 %v3135, %v3171
    %v3174 = vadd.f32 %v3138, %v3172
    %v3175 = vtanh.pop %v3173
    %v3176 = vtanh.pop %v3174
    %v3177 = vsub.f32 1.0, %v3166
    %v3178 = vsub.f32 1.0, %v3168
    %v3179 = vmul.f32 %v3177, %v3175
    %v3180 = vmul.f32 %v3178, %v3176
    %v3181 = vmul.f32 %v3166, %v2835
    %v3182 = vmul.f32 %v3168, %v2836
    %v3183 = vadd.f32 %v3179, %v3181
    %v3184 = vadd.f32 %v3180, %v3182
    %3185 = vmatprep.subr.bf16.mxu0 %v731
    %3186 = vmatpush1.bf16.msra.mxu0 %v730
    %3187 = vmatprep.subr.bf16.mxu0 %v734
    %3188 = vmatpush1.bf16.msra.mxu0 %v733
    %3189 = vmatprep.subr.bf16.mxu0 %v737
    %3190 = vmatpush1.bf16.msra.mxu0 %v736
    %3191 = vmatprep.subr.bf16.mxu0 %v740
    %3192 = vmatpush1.bf16.msra.mxu0 %v739
    %3193 = vmatprep.subr.bf16.mxu0 %v743
    %3194 = vmatpush1.bf16.msra.mxu0 %v742
    %3195 = vmatprep.subr.bf16.mxu0 %v746
    %3196 = vmatpush1.bf16.msra.mxu0 %v745
    %3197 = vmatprep.subr.bf16.mxu0 %v749
    %3198 = vmatpush1.bf16.msra.mxu0 %v748
    %3199 = vmatprep.subr.bf16.mxu0 %v752
    %3200 = vmatpush1.bf16.msra.mxu0 %v751
    %3201 = vmatprep.subr.bf16.mxu0 0
    %3202 = vmatpush1.bf16.msra.mxu0 0
    %3203 = vmatprep.subr.bf16.mxu0 0
    %3204 = vmatpush1.bf16.msra.mxu0 0
    %3205 = vmatprep.subr.bf16.mxu0 0
    %3206 = vmatpush1.bf16.msra.mxu0 0
    %3207 = vmatprep.subr.bf16.mxu0 0
    %3208 = vmatpush1.bf16.msra.mxu0 0
    %3209 = vmatprep.subr.bf16.mxu0 0
    %3210 = vmatpush1.bf16.msra.mxu0 0
    %3211 = vmatprep.subr.bf16.mxu0 0
    %3212 = vmatpush1.bf16.msra.mxu0 0
    %3213 = vmatprep.subr.bf16.mxu0 0
    %3214 = vmatpush1.bf16.msra.mxu0 0
    %3215 = vmatprep.subr.bf16.mxu0 0
    %3216 = vmatpush1.bf16.msra.mxu0 0
    %3217 = vmatprep.mubr.bf16.mxu0 0
    %3218 = vmatmul.mubr.bf16.gmra.mrb[0].mxu0 %v3056
    %v3219 = vpop.f32.mrb[0].mxu0
    %v3220 = vadd.f32 0.0, %v3219
    %v3221 = vpop.f32.mrb[0].mxu0
    %v3222 = vadd.f32 0.0, %v3221
    %v3223 = vpop.f32.mrb[0].mxu0
    %v3224 = vadd.f32 0.0, %v3223
    %v3225 = vpop.f32.mrb[0].mxu0
    %v3226 = vadd.f32 0.0, %v3225
    %3227 = vdwg.mxu0
    %3228 = vmatprep.subr.bf16.mxu0 0
    %3229 = vmatpush1.bf16.msra.mxu0 %v732
    %3230 = vmatprep.subr.bf16.mxu0 0
    %3231 = vmatpush1.bf16.msra.mxu0 %v735
    %3232 = vmatprep.subr.bf16.mxu0 0
    %3233 = vmatpush1.bf16.msra.mxu0 %v738
    %3234 = vmatprep.subr.bf16.mxu0 0
    %3235 = vmatpush1.bf16.msra.mxu0 %v741
    %3236 = vmatprep.subr.bf16.mxu0 0
    %3237 = vmatpush1.bf16.msra.mxu0 %v744
    %3238 = vmatprep.subr.bf16.mxu0 0
    %3239 = vmatpush1.bf16.msra.mxu0 %v747
    %3240 = vmatprep.subr.bf16.mxu0 0
    %3241 = vmatpush1.bf16.msra.mxu0 %v750
    %3242 = vmatprep.subr.bf16.mxu0 0
    %3243 = vmatpush1.bf16.msra.mxu0 %v753
    %3244 = vmatprep.subr.bf16.mxu0 0
    %3245 = vmatpush1.bf16.msra.mxu0 0
    %3246 = vmatprep.subr.bf16.mxu0 0
    %3247 = vmatpush1.bf16.msra.mxu0 0
    %3248 = vmatprep.subr.bf16.mxu0 0
    %3249 = vmatpush1.bf16.msra.mxu0 0
    %3250 = vmatprep.subr.bf16.mxu0 0
    %3251 = vmatpush1.bf16.msra.mxu0 0
    %3252 = vmatprep.subr.bf16.mxu0 0
    %3253 = vmatpush1.bf16.msra.mxu0 0
    %3254 = vmatprep.subr.bf16.mxu0 0
    %3255 = vmatpush1.bf16.msra.mxu0 0
    %3256 = vmatprep.subr.bf16.mxu0 0
    %3257 = vmatpush1.bf16.msra.mxu0 0
    %3258 = vmatprep.subr.bf16.mxu0 0
    %3259 = vmatpush1.bf16.msra.mxu0 0
    %3260 = vmatprep.mubr.bf16.mxu0 0
    %3261 = vmatmul.mubr.bf16.gmra.mrb[0].mxu0 %v3056
    %v3262 = vpop.f32.mrb[0].mxu0
    %v3263 = vadd.f32 0.0, %v3262
    %v3264 = vpop.f32.mrb[0].mxu0
    %v3265 = vpop.f32.mrb[0].mxu0
    %v3266 = vadd.f32 0.0, %v3265
    %v3267 = vpop.f32.mrb[0].mxu0
    %3268 = vdwg.mxu0
    %v3269 = vpack.c.bf16 %v3184, %v3183
    %3270 = vmatprep.subr.bf16.mxu0 %v975
    %3271 = vmatpush1.bf16.msra.mxu0 %v974
    %3272 = vmatprep.subr.bf16.mxu0 %v978
    %3273 = vmatpush1.bf16.msra.mxu0 %v977
    %3274 = vmatprep.subr.bf16.mxu0 %v981
    %3275 = vmatpush1.bf16.msra.mxu0 %v980
    %3276 = vmatprep.subr.bf16.mxu0 %v984
    %3277 = vmatpush1.bf16.msra.mxu0 %v983
    %3278 = vmatprep.subr.bf16.mxu0 %v987
    %3279 = vmatpush1.bf16.msra.mxu0 %v986
    %3280 = vmatprep.subr.bf16.mxu0 %v990
    %3281 = vmatpush1.bf16.msra.mxu0 %v989
    %3282 = vmatprep.subr.bf16.mxu0 %v993
    %3283 = vmatpush1.bf16.msra.mxu0 %v992
    %3284 = vmatprep.subr.bf16.mxu0 %v996
    %3285 = vmatpush1.bf16.msra.mxu0 %v995
    %3286 = vmatprep.subr.bf16.mxu0 0
    %3287 = vmatpush1.bf16.msra.mxu0 0
    %3288 = vmatprep.subr.bf16.mxu0 0
    %3289 = vmatpush1.bf16.msra.mxu0 0
    %3290 = vmatprep.subr.bf16.mxu0 0
    %3291 = vmatpush1.bf16.msra.mxu0 0
    %3292 = vmatprep.subr.bf16.mxu0 0
    %3293 = vmatpush1.bf16.msra.mxu0 0
    %3294 = vmatprep.subr.bf16.mxu0 0
    %3295 = vmatpush1.bf16.msra.mxu0 0
    %3296 = vmatprep.subr.bf16.mxu0 0
    %3297 = vmatpush1.bf16.msra.mxu0 0
    %3298 = vmatprep.subr.bf16.mxu0 0
    %3299 = vmatpush1.bf16.msra.mxu0 0
    %3300 = vmatprep.subr.bf16.mxu0 0
    %3301 = vmatpush1.bf16.msra.mxu0 0
    %3302 = vmatprep.mubr.bf16.mxu0 0
    %3303 = vmatmul.mubr.bf16.gmra.mrb[0].mxu0 %v3269
    %v3304 = vpop.f32.mrb[0].mxu0
    %v3305 = vadd.f32 0.0, %v3304
    %v3306 = vpop.f32.mrb[0].mxu0
    %v3307 = vadd.f32 0.0, %v3306
    %v3308 = vpop.f32.mrb[0].mxu0
    %v3309 = vadd.f32 0.0, %v3308
    %v3310 = vpop.f32.mrb[0].mxu0
    %v3311 = vadd.f32 0.0, %v3310
    %3312 = vdwg.mxu0
    %3313 = vmatprep.subr.bf16.mxu0 0
    %3314 = vmatpush1.bf16.msra.mxu0 %v976
    %3315 = vmatprep.subr.bf16.mxu0 0
    %3316 = vmatpush1.bf16.msra.mxu0 %v979
    %3317 = vmatprep.subr.bf16.mxu0 0
    %3318 = vmatpush1.bf16.msra.mxu0 %v982
    %3319 = vmatprep.subr.bf16.mxu0 0
    %3320 = vmatpush1.bf16.msra.mxu0 %v985
    %3321 = vmatprep.subr.bf16.mxu0 0
    %3322 = vmatpush1.bf16.msra.mxu0 %v988
    %3323 = vmatprep.subr.bf16.mxu0 0
    %3324 = vmatpush1.bf16.msra.mxu0 %v991
    %3325 = vmatprep.subr.bf16.mxu0 0
    %3326 = vmatpush1.bf16.msra.mxu0 %v994
    %3327 = vmatprep.subr.bf16.mxu0 0
    %3328 = vmatpush1.bf16.msra.mxu0 %v997
    %3329 = vmatprep.subr.bf16.mxu0 0
    %3330 = vmatpush1.bf16.msra.mxu0 0
    %3331 = vmatprep.subr.bf16.mxu0 0
    %3332 = vmatpush1.bf16.msra.mxu0 0
    %3333 = vmatprep.subr.bf16.mxu0 0
    %3334 = vmatpush1.bf16.msra.mxu0 0
    %3335 = vmatprep.subr.bf16.mxu0 0
    %3336 = vmatpush1.bf16.msra.mxu0 0
    %3337 = vmatprep.subr.bf16.mxu0 0
    %3338 = vmatpush1.bf16.msra.mxu0 0
    %3339 = vmatprep.subr.bf16.mxu0 0
    %3340 = vmatpush1.bf16.msra.mxu0 0
    %3341 = vmatprep.subr.bf16.mxu0 0
    %3342 = vmatpush1.bf16.msra.mxu0 0
    %3343 = vmatprep.subr.bf16.mxu0 0
    %3344 = vmatpush1.bf16.msra.mxu0 0
    %3345 = vmatprep.mubr.bf16.mxu0 0
    %3346 = vmatmul.mubr.bf16.gmra.mrb[0].mxu0 %v3269
    %v3347 = vpop.f32.mrb[0].mxu0
    %v3348 = vadd.f32 0.0, %v3347
    %v3349 = vpop.f32.mrb[0].mxu0
    %v3350 = vpop.f32.mrb[0].mxu0
    %v3351 = vadd.f32 0.0, %v3350
    %v3352 = vpop.f32.mrb[0].mxu0
    %3353 = vdwg.mxu0
    %v3354 = vld [vmem:[#allocation2 + $0x120] sm:$0xff]
    %v3355 = vld [vmem:[#allocation2 + $0x128] sm:$0xff]
    %v3356 = vld [vmem:[#allocation2 + $0x130] sm:$0xff]
    %v3357 = vld [vmem:[#allocation2 + $0x138] sm:$0xff]
    %v3358 = vld [vmem:[#allocation2 + $0x140] sm:$0xff]
    %v3359 = vld [vmem:[#allocation2 + $0x148] sm:$0xff]
    %v3360 = vadd.f32 %v3354, %v3220
    %v3361 = vadd.f32 %v3357, %v3224
    %v3362 = vxor.u32 %v3360, 2147483648
    %v3363 = vxor.u32 %v3361, 2147483648
    %v3364 = vmul.f32 %v3362, 1.442695
    %v3365 = vpow.pop %v3364
    %v3366 = vmul.f32 %v3363, 1.442695
    %v3367 = vpow.pop %v3366
    %v3368 = vadd.f32 %v3365, 1.0
    %v3369 = vadd.f32 %v3367, 1.0
    %v3370 = vrcp.pop %v3368
    %v3371 = vmul.f32 1.0, %v3370
    %v3372 = vrcp.pop %v3369
    %v3373 = vmul.f32 1.0, %v3372
    %v3374 = vadd.f32 %v3355, %v3222
    %v3375 = vadd.f32 %v3358, %v3226
    %v3376 = vxor.u32 %v3374, 2147483648
    %v3377 = vxor.u32 %v3375, 2147483648
    %v3378 = vmul.f32 %v3376, 1.442695
    %v3379 = vpow.pop %v3378
    %v3380 = vmul.f32 %v3377, 1.442695
    %v3381 = vpow.pop %v3380
    %v3382 = vadd.f32 %v3379, 1.0
    %v3383 = vadd.f32 %v3381, 1.0
    %v3384 = vrcp.pop %v3382
    %v3385 = vmul.f32 1.0, %v3384
    %v3386 = vrcp.pop %v3383
    %v3387 = vmul.f32 1.0, %v3386
    %v3388 = vadd.f32 %v3263, %v592
    %v3389 = vadd.f32 %v3266, %v592
    %v3390 = vmul.f32 %v3371, %v3388
    %v3391 = vmul.f32 %v3373, %v3389
    %v3392 = vadd.f32 %v3356, %v3390
    %v3393 = vadd.f32 %v3359, %v3391
    %v3394 = vtanh.pop %v3392
    %v3395 = vtanh.pop %v3393
    %v3396 = vsub.f32 1.0, %v3385
    %v3397 = vsub.f32 1.0, %v3387
    %v3398 = vmul.f32 %v3396, %v3394
    %v3399 = vmul.f32 %v3397, %v3395
    %v3400 = vmul.f32 %v3385, %v3054
    %v3401 = vmul.f32 %v3387, %v3055
    %v3402 = vadd.f32 %v3398, %v3400
    %v3403 = vadd.f32 %v3399, %v3401
    %v3404 = vpack.c.bf16 %v3403, %v3402
    %3405 = vmatprep.subr.bf16.mxu0 %v1270
    %3406 = vmatpush1.bf16.msra.mxu0 %v1269
    %3407 = vmatprep.subr.bf16.mxu0 %v1273
    %3408 = vmatpush1.bf16.msra.mxu0 %v1272
    %3409 = vmatprep.subr.bf16.mxu0 %v1276
    %3410 = vmatpush1.bf16.msra.mxu0 %v1275
    %3411 = vmatprep.subr.bf16.mxu0 %v1279
    %3412 = vmatpush1.bf16.msra.mxu0 %v1278
    %3413 = vmatprep.subr.bf16.mxu0 %v1282
    %3414 = vmatpush1.bf16.msra.mxu0 %v1281
    %3415 = vmatprep.subr.bf16.mxu0 %v1285
    %3416 = vmatpush1.bf16.msra.mxu0 %v1284
    %3417 = vmatprep.subr.bf16.mxu0 %v1288
    %3418 = vmatpush1.bf16.msra.mxu0 %v1287
    %3419 = vmatprep.subr.bf16.mxu0 %v1291
    %3420 = vmatpush1.bf16.msra.mxu0 %v1290
    %3421 = vmatprep.subr.bf16.mxu0 0
    %3422 = vmatpush1.bf16.msra.mxu0 0
    %3423 = vmatprep.subr.bf16.mxu0 0
    %3424 = vmatpush1.bf16.msra.mxu0 0
    %3425 = vmatprep.subr.bf16.mxu0 0
    %3426 = vmatpush1.bf16.msra.mxu0 0
    %3427 = vmatprep.subr.bf16.mxu0 0
    %3428 = vmatpush1.bf16.msra.mxu0 0
    %3429 = vmatprep.subr.bf16.mxu0 0
    %3430 = vmatpush1.bf16.msra.mxu0 0
    %3431 = vmatprep.subr.bf16.mxu0 0
    %3432 = vmatpush1.bf16.msra.mxu0 0
    %3433 = vmatprep.subr.bf16.mxu0 0
    %3434 = vmatpush1.bf16.msra.mxu0 0
    %3435 = vmatprep.subr.bf16.mxu0 0
    %3436 = vmatpush1.bf16.msra.mxu0 0
    %3437 = vmatprep.mubr.bf16.mxu0 0
    %3438 = vmatmul.mubr.bf16.gmra.mrb[0].mxu0 %v3404
    %v3439 = vpop.f32.mrb[0].mxu0
    %v3440 = vadd.f32 %v599, %v3439
    %v3441 = vpop.f32.mrb[0].mxu0
    %v3442 = vadd.f32 %v603, %v3441
    %v3443 = vpop.f32.mrb[0].mxu0
    %v3444 = vadd.f32 %v599, %v3443
    %v3445 = vpop.f32.mrb[0].mxu0
    %v3446 = vadd.f32 %v603, %v3445
    %3447 = vdwg.mxu0
    %3448 = vmatprep.subr.bf16.mxu0 0
    %3449 = vmatpush1.bf16.msra.mxu0 %v1271
    %3450 = vmatprep.subr.bf16.mxu0 0
    %3451 = vmatpush1.bf16.msra.mxu0 %v1274
    %3452 = vmatprep.subr.bf16.mxu0 0
    %3453 = vmatpush1.bf16.msra.mxu0 %v1277
    %3454 = vmatprep.subr.bf16.mxu0 0
    %3455 = vmatpush1.bf16.msra.mxu0 %v1280
    %3456 = vmatprep.subr.bf16.mxu0 0
    %3457 = vmatpush1.bf16.msra.mxu0 %v1283
    %3458 = vmatprep.subr.bf16.mxu0 0
    %3459 = vmatpush1.bf16.msra.mxu0 %v1286
    %3460 = vmatprep.subr.bf16.mxu0 0
    %3461 = vmatpush1.bf16.msra.mxu0 %v1289
    %3462 = vmatprep.subr.bf16.mxu0 0
    %3463 = vmatpush1.bf16.msra.mxu0 %v1292
    %3464 = vmatprep.subr.bf16.mxu0 0
    %3465 = vmatpush1.bf16.msra.mxu0 0
    %3466 = vmatprep.subr.bf16.mxu0 0
    %3467 = vmatpush1.bf16.msra.mxu0 0
    %3468 = vmatprep.subr.bf16.mxu0 0
    %3469 = vmatpush1.bf16.msra.mxu0 0
    %3470 = vmatprep.subr.bf16.mxu0 0
    %3471 = vmatpush1.bf16.msra.mxu0 0
    %3472 = vmatprep.subr.bf16.mxu0 0
    %3473 = vmatpush1.bf16.msra.mxu0 0
    %3474 = vmatprep.subr.bf16.mxu0 0
    %3475 = vmatpush1.bf16.msra.mxu0 0
    %3476 = vmatprep.subr.bf16.mxu0 0
    %3477 = vmatpush1.bf16.msra.mxu0 0
    %3478 = vmatprep.subr.bf16.mxu0 0
    %3479 = vmatpush1.bf16.msra.mxu0 0
    %3480 = vmatprep.mubr.bf16.mxu0 0
    %3481 = vmatmul.mubr.bf16.gmra.mrb[0].mxu0 %v3404
    %v3482 = vpop.f32.mrb[0].mxu0
    %v3483 = vadd.f32 %v607, %v3482
    %v3484 = vpop.f32.mrb[0].mxu0
    %v3485 = vpop.f32.mrb[0].mxu0
    %v3486 = vadd.f32 %v607, %v3485
    %v3487 = vpop.f32.mrb[0].mxu0
    %3488 = vdwg.mxu0
    %v3489 = vadd.f32 %v3440, %v3305
    %v3490 = vadd.f32 %v3444, %v3309
    %v3491 = vxor.u32 %v3489, 2147483648
    %v3492 = vxor.u32 %v3490, 2147483648
    %v3493 = vmul.f32 %v3491, 1.442695
    %v3494 = vpow.pop %v3493
    %v3495 = vmul.f32 %v3492, 1.442695
    %v3496 = vpow.pop %v3495
    %v3497 = vadd.f32 %v3494, 1.0
    %v3498 = vadd.f32 %v3496, 1.0
    %v3499 = vrcp.pop %v3497
    %v3500 = vmul.f32 1.0, %v3499
    %v3501 = vrcp.pop %v3498
    %v3502 = vmul.f32 1.0, %v3501
    %v3503 = vadd.f32 %v3442, %v3307
    %v3504 = vadd.f32 %v3446, %v3311
    %v3505 = vxor.u32 %v3503, 2147483648
    %v3506 = vxor.u32 %v3504, 2147483648
    %v3507 = vmul.f32 %v3505, 1.442695
    %v3508 = vpow.pop %v3507
    %v3509 = vmul.f32 %v3506, 1.442695
    %v3510 = vpow.pop %v3509
    %v3511 = vadd.f32 %v3508, 1.0
    %v3512 = vadd.f32 %v3510, 1.0
    %v3513 = vrcp.pop %v3511
    %v3514 = vmul.f32 1.0, %v3513
    %v3515 = vrcp.pop %v3512
    %v3516 = vmul.f32 1.0, %v3515
    %v3517 = vadd.f32 %v3348, %v616
    %v3518 = vadd.f32 %v3351, %v616
    %v3519 = vmul.f32 %v3500, %v3517
    %v3520 = vmul.f32 %v3502, %v3518
    %v3521 = vadd.f32 %v3483, %v3519
    %v3522 = vadd.f32 %v3486, %v3520
    %v3523 = vtanh.pop %v3521
    %v3524 = vtanh.pop %v3522
    %v3525 = vsub.f32 1.0, %v3514
    %v3526 = vsub.f32 1.0, %v3516
    %v3527 = vmul.f32 %v3525, %v3523
    %v3528 = vmul.f32 %v3526, %v3524
    %v3529 = vmul.f32 %v3514, %v3183
    %v3530 = vmul.f32 %v3516, %v3184
    %v3531 = vadd.f32 %v3527, %v3529
    %v3532 = vadd.f32 %v3528, %v3530
    %3533 = vmatprep.subr.bf16.mxu0 %v731
    %3534 = vmatpush1.bf16.msra.mxu0 %v730
    %3535 = vmatprep.subr.bf16.mxu0 %v734
    %3536 = vmatpush1.bf16.msra.mxu0 %v733
    %3537 = vmatprep.subr.bf16.mxu0 %v737
    %3538 = vmatpush1.bf16.msra.mxu0 %v736
    %3539 = vmatprep.subr.bf16.mxu0 %v740
    %3540 = vmatpush1.bf16.msra.mxu0 %v739
    %3541 = vmatprep.subr.bf16.mxu0 %v743
    %3542 = vmatpush1.bf16.msra.mxu0 %v742
    %3543 = vmatprep.subr.bf16.mxu0 %v746
    %3544 = vmatpush1.bf16.msra.mxu0 %v745
    %3545 = vmatprep.subr.bf16.mxu0 %v749
    %3546 = vmatpush1.bf16.msra.mxu0 %v748
    %3547 = vmatprep.subr.bf16.mxu0 %v752
    %3548 = vmatpush1.bf16.msra.mxu0 %v751
    %3549 = vmatprep.subr.bf16.mxu0 0
    %3550 = vmatpush1.bf16.msra.mxu0 0
    %3551 = vmatprep.subr.bf16.mxu0 0
    %3552 = vmatpush1.bf16.msra.mxu0 0
    %3553 = vmatprep.subr.bf16.mxu0 0
    %3554 = vmatpush1.bf16.msra.mxu0 0
    %3555 = vmatprep.subr.bf16.mxu0 0
    %3556 = vmatpush1.bf16.msra.mxu0 0
    %3557 = vmatprep.subr.bf16.mxu0 0
    %3558 = vmatpush1.bf16.msra.mxu0 0
    %3559 = vmatprep.subr.bf16.mxu0 0
    %3560 = vmatpush1.bf16.msra.mxu0 0
    %3561 = vmatprep.subr.bf16.mxu0 0
    %3562 = vmatpush1.bf16.msra.mxu0 0
    %3563 = vmatprep.subr.bf16.mxu0 0
    %3564 = vmatpush1.bf16.msra.mxu0 0
    %3565 = vmatprep.mubr.bf16.mxu0 0
    %3566 = vmatmul.mubr.bf16.gmra.mrb[0].mxu0 %v3404
    %v3567 = vpop.f32.mrb[0].mxu0
    %v3568 = vadd.f32 0.0, %v3567
    %v3569 = vpop.f32.mrb[0].mxu0
    %v3570 = vadd.f32 0.0, %v3569
    %v3571 = vpop.f32.mrb[0].mxu0
    %v3572 = vadd.f32 0.0, %v3571
    %v3573 = vpop.f32.mrb[0].mxu0
    %v3574 = vadd.f32 0.0, %v3573
    %3575 = vdwg.mxu0
    %3576 = vmatprep.subr.bf16.mxu0 0
    %3577 = vmatpush1.bf16.msra.mxu0 %v732
    %3578 = vmatprep.subr.bf16.mxu0 0
    %3579 = vmatpush1.bf16.msra.mxu0 %v735
    %3580 = vmatprep.subr.bf16.mxu0 0
    %3581 = vmatpush1.bf16.msra.mxu0 %v738
    %3582 = vmatprep.subr.bf16.mxu0 0
    %3583 = vmatpush1.bf16.msra.mxu0 %v741
    %3584 = vmatprep.subr.bf16.mxu0 0
    %3585 = vmatpush1.bf16.msra.mxu0 %v744
    %3586 = vmatprep.subr.bf16.mxu0 0
    %3587 = vmatpush1.bf16.msra.mxu0 %v747
    %3588 = vmatprep.subr.bf16.mxu0 0
    %3589 = vmatpush1.bf16.msra.mxu0 %v750
    %3590 = vmatprep.subr.bf16.mxu0 0
    %3591 = vmatpush1.bf16.msra.mxu0 %v753
    %3592 = vmatprep.subr.bf16.mxu0 0
    %3593 = vmatpush1.bf16.msra.mxu0 0
    %3594 = vmatprep.subr.bf16.mxu0 0
    %3595 = vmatpush1.bf16.msra.mxu0 0
    %3596 = vmatprep.subr.bf16.mxu0 0
    %3597 = vmatpush1.bf16.msra.mxu0 0
    %3598 = vmatprep.subr.bf16.mxu0 0
    %3599 = vmatpush1.bf16.msra.mxu0 0
    %3600 = vmatprep.subr.bf16.mxu0 0
    %3601 = vmatpush1.bf16.msra.mxu0 0
    %3602 = vmatprep.subr.bf16.mxu0 0
    %3603 = vmatpush1.bf16.msra.mxu0 0
    %3604 = vmatprep.subr.bf16.mxu0 0
    %3605 = vmatpush1.bf16.msra.mxu0 0
    %3606 = vmatprep.subr.bf16.mxu0 0
    %3607 = vmatpush1.bf16.msra.mxu0 0
    %3608 = vmatprep.mubr.bf16.mxu0 0
    %3609 = vmatmul.mubr.bf16.gmra.mrb[0].mxu0 %v3404
    %v3610 = vpop.f32.mrb[0].mxu0
    %v3611 = vadd.f32 0.0, %v3610
    %v3612 = vpop.f32.mrb[0].mxu0
    %v3613 = vpop.f32.mrb[0].mxu0
    %v3614 = vadd.f32 0.0, %v3613
    %v3615 = vpop.f32.mrb[0].mxu0
    %3616 = vdwg.mxu0
    %v3617 = vpack.c.bf16 %v3532, %v3531
    %3618 = vmatprep.subr.bf16.mxu0 %v975
    %3619 = vmatpush1.bf16.msra.mxu0 %v974
    %3620 = vmatprep.subr.bf16.mxu0 %v978
    %3621 = vmatpush1.bf16.msra.mxu0 %v977
    %3622 = vmatprep.subr.bf16.mxu0 %v981
    %3623 = vmatpush1.bf16.msra.mxu0 %v980
    %3624 = vmatprep.subr.bf16.mxu0 %v984
    %3625 = vmatpush1.bf16.msra.mxu0 %v983
    %3626 = vmatprep.subr.bf16.mxu0 %v987
    %3627 = vmatpush1.bf16.msra.mxu0 %v986
    %3628 = vmatprep.subr.bf16.mxu0 %v990
    %3629 = vmatpush1.bf16.msra.mxu0 %v989
    %3630 = vmatprep.subr.bf16.mxu0 %v993
    %3631 = vmatpush1.bf16.msra.mxu0 %v992
    %3632 = vmatprep.subr.bf16.mxu0 %v996
    %3633 = vmatpush1.bf16.msra.mxu0 %v995
    %3634 = vmatprep.subr.bf16.mxu0 0
    %3635 = vmatpush1.bf16.msra.mxu0 0
    %3636 = vmatprep.subr.bf16.mxu0 0
    %3637 = vmatpush1.bf16.msra.mxu0 0
    %3638 = vmatprep.subr.bf16.mxu0 0
    %3639 = vmatpush1.bf16.msra.mxu0 0
    %3640 = vmatprep.subr.bf16.mxu0 0
    %3641 = vmatpush1.bf16.msra.mxu0 0
    %3642 = vmatprep.subr.bf16.mxu0 0
    %3643 = vmatpush1.bf16.msra.mxu0 0
    %3644 = vmatprep.subr.bf16.mxu0 0
    %3645 = vmatpush1.bf16.msra.mxu0 0
    %3646 = vmatprep.subr.bf16.mxu0 0
    %3647 = vmatpush1.bf16.msra.mxu0 0
    %3648 = vmatprep.subr.bf16.mxu0 0
    %3649 = vmatpush1.bf16.msra.mxu0 0
    %3650 = vmatprep.mubr.bf16.mxu0 0
    %3651 = vmatmul.mubr.bf16.gmra.mrb[0].mxu0 %v3617
    %v3652 = vpop.f32.mrb[0].mxu0
    %v3653 = vadd.f32 0.0, %v3652
    %v3654 = vpop.f32.mrb[0].mxu0
    %v3655 = vadd.f32 0.0, %v3654
    %v3656 = vpop.f32.mrb[0].mxu0
    %v3657 = vadd.f32 0.0, %v3656
    %v3658 = vpop.f32.mrb[0].mxu0
    %v3659 = vadd.f32 0.0, %v3658
    %3660 = vdwg.mxu0
    %3661 = vmatprep.subr.bf16.mxu0 0
    %3662 = vmatpush1.bf16.msra.mxu0 %v976
    %3663 = vmatprep.subr.bf16.mxu0 0
    %3664 = vmatpush1.bf16.msra.mxu0 %v979
    %3665 = vmatprep.subr.bf16.mxu0 0
    %3666 = vmatpush1.bf16.msra.mxu0 %v982
    %3667 = vmatprep.subr.bf16.mxu0 0
    %3668 = vmatpush1.bf16.msra.mxu0 %v985
    %3669 = vmatprep.subr.bf16.mxu0 0
    %3670 = vmatpush1.bf16.msra.mxu0 %v988
    %3671 = vmatprep.subr.bf16.mxu0 0
    %3672 = vmatpush1.bf16.msra.mxu0 %v991
    %3673 = vmatprep.subr.bf16.mxu0 0
    %3674 = vmatpush1.bf16.msra.mxu0 %v994
    %3675 = vmatprep.subr.bf16.mxu0 0
    %3676 = vmatpush1.bf16.msra.mxu0 %v997
    %3677 = vmatprep.subr.bf16.mxu0 0
    %3678 = vmatpush1.bf16.msra.mxu0 0
    %3679 = vmatprep.subr.bf16.mxu0 0
    %3680 = vmatpush1.bf16.msra.mxu0 0
    %3681 = vmatprep.subr.bf16.mxu0 0
    %3682 = vmatpush1.bf16.msra.mxu0 0
    %3683 = vmatprep.subr.bf16.mxu0 0
    %3684 = vmatpush1.bf16.msra.mxu0 0
    %3685 = vmatprep.subr.bf16.mxu0 0
    %3686 = vmatpush1.bf16.msra.mxu0 0
    %3687 = vmatprep.subr.bf16.mxu0 0
    %3688 = vmatpush1.bf16.msra.mxu0 0
    %3689 = vmatprep.subr.bf16.mxu0 0
    %3690 = vmatpush1.bf16.msra.mxu0 0
    %3691 = vmatprep.subr.bf16.mxu0 0
    %3692 = vmatpush1.bf16.msra.mxu0 0
    %3693 = vmatprep.mubr.bf16.mxu0 0
    %3694 = vmatmul.mubr.bf16.gmra.mrb[0].mxu0 %v3617
    %v3695 = vpop.f32.mrb[0].mxu0
    %v3696 = vadd.f32 0.0, %v3695
    %v3697 = vpop.f32.mrb[0].mxu0
    %v3698 = vpop.f32.mrb[0].mxu0
    %v3699 = vadd.f32 0.0, %v3698
    %v3700 = vpop.f32.mrb[0].mxu0
    %3701 = vdwg.mxu0
    %v3702 = vld [vmem:[#allocation2 + $0x150] sm:$0xff]
    %v3703 = vld [vmem:[#allocation2 + $0x158] sm:$0xff]
    %v3704 = vld [vmem:[#allocation2 + $0x160] sm:$0xff]
    %v3705 = vld [vmem:[#allocation2 + $0x168] sm:$0xff]
    %v3706 = vld [vmem:[#allocation2 + $0x170] sm:$0xff]
    %v3707 = vld [vmem:[#allocation2 + $0x178] sm:$0xff]
    %v3708 = vadd.f32 %v3702, %v3568
    %v3709 = vadd.f32 %v3705, %v3572
    %v3710 = vxor.u32 %v3708, 2147483648
    %v3711 = vxor.u32 %v3709, 2147483648
    %v3712 = vmul.f32 %v3710, 1.442695
    %v3713 = vpow.pop %v3712
    %v3714 = vmul.f32 %v3711, 1.442695
    %v3715 = vpow.pop %v3714
    %v3716 = vadd.f32 %v3713, 1.0
    %v3717 = vadd.f32 %v3715, 1.0
    %v3718 = vrcp.pop %v3716
    %v3719 = vmul.f32 1.0, %v3718
    %v3720 = vrcp.pop %v3717
    %v3721 = vmul.f32 1.0, %v3720
    %v3722 = vadd.f32 %v3703, %v3570
    %v3723 = vadd.f32 %v3706, %v3574
    %v3724 = vxor.u32 %v3722, 2147483648
    %v3725 = vxor.u32 %v3723, 2147483648
    %v3726 = vmul.f32 %v3724, 1.442695
    %v3727 = vpow.pop %v3726
    %v3728 = vmul.f32 %v3725, 1.442695
    %v3729 = vpow.pop %v3728
    %v3730 = vadd.f32 %v3727, 1.0
    %v3731 = vadd.f32 %v3729, 1.0
    %v3732 = vrcp.pop %v3730
    %v3733 = vmul.f32 1.0, %v3732
    %v3734 = vrcp.pop %v3731
    %v3735 = vmul.f32 1.0, %v3734
    %v3736 = vadd.f32 %v3611, %v592
    %v3737 = vadd.f32 %v3614, %v592
    %v3738 = vmul.f32 %v3719, %v3736
    %v3739 = vmul.f32 %v3721, %v3737
    %v3740 = vadd.f32 %v3704, %v3738
    %v3741 = vadd.f32 %v3707, %v3739
    %v3742 = vtanh.pop %v3740
    %v3743 = vtanh.pop %v3741
    %v3744 = vsub.f32 1.0, %v3733
    %v3745 = vsub.f32 1.0, %v3735
    %v3746 = vmul.f32 %v3744, %v3742
    %v3747 = vmul.f32 %v3745, %v3743
    %v3748 = vmul.f32 %v3733, %v3402
    %v3749 = vmul.f32 %v3735, %v3403
    %v3750 = vadd.f32 %v3746, %v3748
    %v3751 = vadd.f32 %v3747, %v3749
    %v3752 = vpack.c.bf16 %v3751, %v3750
    %3753 = vmatprep.subr.bf16.mxu0 %v1270
    %3754 = vmatpush1.bf16.msra.mxu0 %v1269
    %3755 = vmatprep.subr.bf16.mxu0 %v1273
    %3756 = vmatpush1.bf16.msra.mxu0 %v1272
    %3757 = vmatprep.subr.bf16.mxu0 %v1276
    %3758 = vmatpush1.bf16.msra.mxu0 %v1275
    %3759 = vmatprep.subr.bf16.mxu0 %v1279
    %3760 = vmatpush1.bf16.msra.mxu0 %v1278
    %3761 = vmatprep.subr.bf16.mxu0 %v1282
    %3762 = vmatpush1.bf16.msra.mxu0 %v1281
    %3763 = vmatprep.subr.bf16.mxu0 %v1285
    %3764 = vmatpush1.bf16.msra.mxu0 %v1284
    %3765 = vmatprep.subr.bf16.mxu0 %v1288
    %3766 = vmatpush1.bf16.msra.mxu0 %v1287
    %3767 = vmatprep.subr.bf16.mxu0 %v1291
    %3768 = vmatpush1.bf16.msra.mxu0 %v1290
    %3769 = vmatprep.subr.bf16.mxu0 0
    %3770 = vmatpush1.bf16.msra.mxu0 0
    %3771 = vmatprep.subr.bf16.mxu0 0
    %3772 = vmatpush1.bf16.msra.mxu0 0
    %3773 = vmatprep.subr.bf16.mxu0 0
    %3774 = vmatpush1.bf16.msra.mxu0 0
    %3775 = vmatprep.subr.bf16.mxu0 0
    %3776 = vmatpush1.bf16.msra.mxu0 0
    %3777 = vmatprep.subr.bf16.mxu0 0
    %3778 = vmatpush1.bf16.msra.mxu0 0
    %3779 = vmatprep.subr.bf16.mxu0 0
    %3780 = vmatpush1.bf16.msra.mxu0 0
    %3781 = vmatprep.subr.bf16.mxu0 0
    %3782 = vmatpush1.bf16.msra.mxu0 0
    %3783 = vmatprep.subr.bf16.mxu0 0
    %3784 = vmatpush1.bf16.msra.mxu0 0
    %3785 = vmatprep.mubr.bf16.mxu0 0
    %3786 = vmatmul.mubr.bf16.gmra.mrb[0].mxu0 %v3752
    %v3787 = vpop.f32.mrb[0].mxu0
    %v3788 = vadd.f32 %v599, %v3787
    %v3789 = vpop.f32.mrb[0].mxu0
    %v3790 = vadd.f32 %v603, %v3789
    %v3791 = vpop.f32.mrb[0].mxu0
    %v3792 = vadd.f32 %v599, %v3791
    %v3793 = vpop.f32.mrb[0].mxu0
    %v3794 = vadd.f32 %v603, %v3793
    %3795 = vdwg.mxu0
    %3796 = vmatprep.subr.bf16.mxu0 0
    %3797 = vmatpush1.bf16.msra.mxu0 %v1271
    %3798 = vmatprep.subr.bf16.mxu0 0
    %3799 = vmatpush1.bf16.msra.mxu0 %v1274
    %3800 = vmatprep.subr.bf16.mxu0 0
    %3801 = vmatpush1.bf16.msra.mxu0 %v1277
    %3802 = vmatprep.subr.bf16.mxu0 0
    %3803 = vmatpush1.bf16.msra.mxu0 %v1280
    %3804 = vmatprep.subr.bf16.mxu0 0
    %3805 = vmatpush1.bf16.msra.mxu0 %v1283
    %3806 = vmatprep.subr.bf16.mxu0 0
    %3807 = vmatpush1.bf16.msra.mxu0 %v1286
    %3808 = vmatprep.subr.bf16.mxu0 0
    %3809 = vmatpush1.bf16.msra.mxu0 %v1289
    %3810 = vmatprep.subr.bf16.mxu0 0
    %3811 = vmatpush1.bf16.msra.mxu0 %v1292
    %3812 = vmatprep.subr.bf16.mxu0 0
    %3813 = vmatpush1.bf16.msra.mxu0 0
    %3814 = vmatprep.subr.bf16.mxu0 0
    %3815 = vmatpush1.bf16.msra.mxu0 0
    %3816 = vmatprep.subr.bf16.mxu0 0
    %3817 = vmatpush1.bf16.msra.mxu0 0
    %3818 = vmatprep.subr.bf16.mxu0 0
    %3819 = vmatpush1.bf16.msra.mxu0 0
    %3820 = vmatprep.subr.bf16.mxu0 0
    %3821 = vmatpush1.bf16.msra.mxu0 0
    %3822 = vmatprep.subr.bf16.mxu0 0
    %3823 = vmatpush1.bf16.msra.mxu0 0
    %3824 = vmatprep.subr.bf16.mxu0 0
    %3825 = vmatpush1.bf16.msra.mxu0 0
    %3826 = vmatprep.subr.bf16.mxu0 0
    %3827 = vmatpush1.bf16.msra.mxu0 0
    %3828 = vmatprep.mubr.bf16.mxu0 0
    %3829 = vmatmul.mubr.bf16.gmra.mrb[0].mxu0 %v3752
    %v3830 = vpop.f32.mrb[0].mxu0
    %v3831 = vadd.f32 %v607, %v3830
    %v3832 = vpop.f32.mrb[0].mxu0
    %v3833 = vpop.f32.mrb[0].mxu0
    %v3834 = vadd.f32 %v607, %v3833
    %v3835 = vpop.f32.mrb[0].mxu0
    %3836 = vdwg.mxu0
    %v3837 = vadd.f32 %v3788, %v3653
    %v3838 = vadd.f32 %v3792, %v3657
    %v3839 = vxor.u32 %v3837, 2147483648
    %v3840 = vxor.u32 %v3838, 2147483648
    %v3841 = vmul.f32 %v3839, 1.442695
    %v3842 = vpow.pop %v3841
    %v3843 = vmul.f32 %v3840, 1.442695
    %v3844 = vpow.pop %v3843
    %v3845 = vadd.f32 %v3842, 1.0
    %v3846 = vadd.f32 %v3844, 1.0
    %v3847 = vrcp.pop %v3845
    %v3848 = vmul.f32 1.0, %v3847
    %v3849 = vrcp.pop %v3846
    %v3850 = vmul.f32 1.0, %v3849
    %v3851 = vadd.f32 %v3790, %v3655
    %v3852 = vadd.f32 %v3794, %v3659
    %v3853 = vxor.u32 %v3851, 2147483648
    %v3854 = vxor.u32 %v3852, 2147483648
    %v3855 = vmul.f32 %v3853, 1.442695
    %v3856 = vpow.pop %v3855
    %v3857 = vmul.f32 %v3854, 1.442695
    %v3858 = vpow.pop %v3857
    %v3859 = vadd.f32 %v3856, 1.0
    %v3860 = vadd.f32 %v3858, 1.0
    %v3861 = vrcp.pop %v3859
    %v3862 = vmul.f32 1.0, %v3861
    %v3863 = vrcp.pop %v3860
    %v3864 = vmul.f32 1.0, %v3863
    %v3865 = vadd.f32 %v3696, %v616
    %v3866 = vadd.f32 %v3699, %v616
    %v3867 = vmul.f32 %v3848, %v3865
    %v3868 = vmul.f32 %v3850, %v3866
    %v3869 = vadd.f32 %v3831, %v3867
    %v3870 = vadd.f32 %v3834, %v3868
    %v3871 = vtanh.pop %v3869
    %v3872 = vtanh.pop %v3870
    %v3873 = vsub.f32 1.0, %v3862
    %v3874 = vsub.f32 1.0, %v3864
    %v3875 = vmul.f32 %v3873, %v3871
    %v3876 = vmul.f32 %v3874, %v3872
    %v3877 = vmul.f32 %v3862, %v3531
    %v3878 = vmul.f32 %v3864, %v3532
    %v3879 = vadd.f32 %v3875, %v3877
    %v3880 = vadd.f32 %v3876, %v3878
    %3881 = vst [vmem:[%s9] sm:$0xff] %v3879
    %3882 = vst [vmem:[%s9 + $0x8] sm:$0xff] %v3880
    // Predicated region
    $region54: #{gru_forward.1} parent=1 // pred_check
      _
    $region55: #{gru_forward.1} parent=1 // pred_check_branch
      %3884 = sbr.rel (0) target = $region57
    $region56: #{gru_forward.1} parent=1 // pred_region
      _
    $region57: #{gru_forward.1} parent=1 // pred_fallthru
      _
    // Predicated region
    $region58: #{gru_forward.1} parent=1 // pred_check
      _
    $region59: #{gru_forward.1} parent=1 // pred_check_branch
      %3886 = sbr.rel (0) target = $region61
    $region60: #{gru_forward.1} parent=1 // pred_region
      _
    $region61: #{gru_forward.1} parent=1 // pred_fallthru
      _
    %3887 = vsyncpa [#allocation4], 1
    %3888 = vsyncpa [#allocation6], 1
    %3889 = vsyncpa [#allocation9], 1

</llo_original>
